<compile_context>
chip_gen: v7x
topology: tpu7x:2x2x1
jax: 0.10.0
libtpu: 0.0.40
codegen_flags: <defaults>
</compile_context>

<pallas_src>
import jax
import jax.numpy as jnp
from jax.experimental import pallas as pl
from jax.experimental.pallas import tpu as pltpu  # noqa: F401  (TPU backend assumed)

KH = KW = 3
CIN, COUT = 3, 6
FC1_IN, FC1_OUT, FC2_OUT, FC3_OUT = 400, 120, 84, 10
LANE = 128


def _rup(v, m=LANE):
    return ((v + m - 1) // m) * m


def _fs(shape):
    # whole-array VMEM block (the kernel has no grid)
    return pl.BlockSpec(shape, lambda: (0,) * len(shape))


def _geometry(batch, height, width):
    OH, OW = height - KH + 1, width - KW + 1
    assert OH > 0 and OW > 0 and OH % 2 == 0 and OW % 2 == 0, "conv/pool size mismatch"
    PH, PW = OH // 2, OW // 2
    PP = PH * PW
    assert PP <= LANE and FC1_IN % PP == 0, "pooled plane must fit one 128-lane row block"
    total = batch * COUT * PP
    # torch's x.view(-1, 400) silently requires this divisibility (batch/channel mixing preserved)
    assert total % FC1_IN == 0, "x.view(-1, 400) needs B*6*PH*PW divisible by 400"
    n_rows = total // FC1_IN
    cpr = FC1_IN // PP                           # pooled (b, c) rows per flattened row
    T = 2 * (PH - 1) * width + 2 * (PW - 1)      # largest pool-window top-left column
    WIN = _rup(T + 1)                            # pool-window max width (128-aligned)
    CW = _rup(WIN + width + 1)                   # conv width (window offsets 0, 1, W, W+1)
    XW = _rup(max(height * width, CW + (KH - 1) * width + (KW - 1)))   # padded image row width
    return OH, OW, PH, PW, PP, n_rows, cpr, WIN, CW, XW


# -------- single fused kernel: conv1+bias+relu -> maxpool -> flatten -> fc1/fc2/fc3 --------
def _build_kernel(batch, width, n_rows, cpr, WIN, CW):
    BC = batch * COUT
    offs = [di * width + dj for di in range(KH) for dj in range(KW)]   # conv taps (di, dj)

    def kernel(x_ref, a_ref, cb_ref, g_ref, sel_ref, w1_ref, b1_ref,
               w2_ref, b2_ref, w3_ref, b3_ref, out_ref):
        # ---- conv1 (+bias): 9 tiny block-diagonal matmuls over lane-shifted image rows
        #      (in-kernel im2col).  Columns live in the full-spatial space t = oh*W + ow;
        #      columns with ow >= OW hold wrapped garbage that the pool gather never selects.
        x = x_ref[...]                                      # (B*CIN, XW) flattened images
        acc = jnp.broadcast_to(cb_ref[...], (BC, CW))       # start from the broadcast bias
        for k, off in enumerate(offs):
            acc = acc + jnp.dot(a_ref[k], x[:, off:off + CW],
                                preferred_element_type=jnp.float32)
        conv = jnp.maximum(acc, 0.0)                        # ReLU; rows already (b, c) ordered

        # ---- MaxPool2d(2, 2): window of top-left column t is {t, t+1, t+W, t+W+1}.
        #      Three maxes over 128-aligned lane-shifted slices, then ONE one-hot gather
        #      matmul compacts the strided valid columns into 128 lanes (PH*PW real + 0 pad).
        win = jnp.maximum(
            jnp.maximum(conv[:, 0:WIN], conv[:, 1:WIN + 1]),
            jnp.maximum(conv[:, width:width + WIN], conv[:, width + 1:width + 1 + WIN]))
        pooled = jnp.dot(win, g_ref[...], preferred_element_type=jnp.float32)   # (B*6, 128)

        # ---- torch's x.view(-1, 400) fused with fc1: flattened row r is pooled rows
        #      r*cpr .. r*cpr+cpr-1 side by side, so fc1 = sum_q select_q(pooled) @ W1_block_q.
        h = jnp.broadcast_to(b1_ref[...], (n_rows, LANE))
        for q in range(cpr):
            rows_q = jnp.dot(sel_ref[q], pooled, preferred_element_type=jnp.float32)
            h = h + jnp.dot(rows_q, w1_ref[q], preferred_element_type=jnp.float32)
        h = jnp.maximum(h, 0.0)

        # ---- fc2 -> relu -> fc3 (weights zero-padded to 128x128, activations 128-lane)
        h = jnp.maximum(jnp.dot(h, w2_ref[...], preferred_element_type=jnp.float32)
                        + b2_ref[...], 0.0)
        h = jnp.dot(h, w3_ref[...], preferred_element_type=jnp.float32) + b3_ref[...]
        out_ref[...] = h                                    # lane-dense (n_rows, 128) store

    return kernel


# -------- one-time (outside jit) parameter / constant preparation --------
def prepare_params(params, *, batch, height, width):
    _, _, PH, PW, PP, n_rows, cpr, WIN, _, _ = _geometry(batch, height, width)

    conv_w = params["conv1_w"].astype(jnp.float32)           # (6, 3, 3, 3) torch OIHW
    conv_b = params["conv1_b"].astype(jnp.float32)

    # Per-tap block-diagonal weights: a[k][b*6+c, b*3+ci] = conv_w[c, ci, di, dj], k = di*3+dj.
    taps = conv_w.transpose(2, 3, 0, 1).reshape(KH * KW, COUT, CIN)
    eye_b = jnp.eye(batch, dtype=jnp.float32)
    a = jnp.stack([jnp.kron(eye_b, taps[k]) for k in range(KH * KW)], axis=0)
    cbias = jnp.tile(conv_b.reshape(COUT, 1), (batch, 1))    # row b*6+c -> bias[c]

    # Pool gather: one-hot (WIN, 128); output lane i*PW+j <- full-spatial column 2i*W + 2j.
    ii, jj = jnp.meshgrid(jnp.arange(PH), jnp.arange(PW), indexing="ij")
    src = (2 * width * ii + 2 * jj).reshape(-1)
    gmat = jnp.zeros((WIN, LANE), jnp.float32).at[src, jnp.arange(PP)].set(1.0)

    # Flatten row-selection: sel[q][r, r*cpr+q] = 1  (torch .view(-1, 400) row mapping).
    sel = jnp.zeros((cpr, n_rows, batch * COUT), jnp.float32)
    r = jnp.arange(n_rows)
    for q in range(cpr):
        sel = sel.at[q, r, r * cpr + q].set(1.0)

    # fc1 re-laid as cpr x (128, 128) blocks matching the 128-lane (PP real) pooled rows.
    # NOTE: fc weights here are stored (in, out); real torch checkpoints ((out, in)) need a .T.
    w1 = params["fc1_w"].astype(jnp.float32)                 # (400, 120)
    w1b = jnp.zeros((cpr, LANE, LANE), jnp.float32)
    for q in range(cpr):
        w1b = w1b.at[q, :PP, :FC1_OUT].set(w1[q * PP:(q + 1) * PP, :])
    b1 = jnp.zeros((1, LANE), jnp.float32).at[0, :FC1_OUT].set(params["fc1_b"])

    def pad_fc(w, b):
        wp = jnp.zeros((LANE, LANE), jnp.float32).at[:w.shape[0], :w.shape[1]].set(w)
        bp = jnp.zeros((1, LANE), jnp.float32).at[0, :w.shape[1]].set(b.reshape(-1))
        return wp, bp

    w2p, b2p = pad_fc(params["fc2_w"], params["fc2_b"])      # (120, 84) -> (128, 128)
    w3p, b3p = pad_fc(params["fc3_w"], params["fc3_b"])      # (84, 10)  -> (128, 128)
    return (a, cbias, gmat, sel, w1b, b1, w2p, b2p, w3p, b3p)


# -------- forward (jitted): reshape/pad x + ONE fused pallas_call + logits slice --------
def net_forward(x, prepped):
    a, cbias, gmat, sel, w1b, b1, w2p, b2p, w3p, b3p = prepped
    B, Cin, H, W = x.shape
    assert Cin == CIN
    _, _, _, _, _, n_rows, cpr, WIN, CW, XW = _geometry(B, H, W)

    # Only wrapper-side data prep: flatten spatial dims and zero-pad the lane axis.
    xflat = jnp.pad(x.reshape(B * CIN, H * W).astype(jnp.float32),
                    ((0, 0), (0, XW - H * W)))

    kernel = _build_kernel(B, W, n_rows, cpr, WIN, CW)
    args = (xflat, a, cbias, gmat, sel, w1b, b1, w2p, b2p, w3p, b3p)
    # Grid-less: everything (<1 MiB) fits comfortably in VMEM.  For non-toy batches, add a
    # grid over flattened-row blocks with dimension_semantics=("parallel",) so v7x can use
    # both TensorCores and VMEM stays bounded.
    out = pl.pallas_call(
        kernel,
        out_shape=jax.ShapeDtypeStruct((n_rows, LANE), jnp.float32),
        in_specs=[_fs(v.shape) for v in args],
        out_specs=_fs((n_rows, LANE)),
    )(*args)
    return out[:, :FC3_OUT]       # lane-dense kernel store; slice the 10 real logits here


def init_params(key):
    def uniform(k, shape, fan_in):
        bound = 1.0 / jnp.sqrt(jnp.float32(fan_in))
        return jax.random.uniform(k, shape, jnp.float32, -bound, bound)

    ks = jax.random.split(key, 8)
    # conv2 (6->16, 3x3) exists in __init__ but is never used in forward(); omitted.
    return {
        "conv1_w": uniform(ks[0], (6, 3, 3, 3), 27),
        "conv1_b": uniform(ks[1], (6,), 27),
        "fc1_w": uniform(ks[2], (400, 120), 400),
        "fc1_b": uniform(ks[3], (120,), 400),
        "fc2_w": uniform(ks[4], (120, 84), 120),
        "fc2_b": uniform(ks[5], (84,), 120),
        "fc3_w": uniform(ks[6], (84, 10), 84),
        "fc3_b": uniform(ks[7], (10,), 84),
    }


def net_reference(x, params):
    """Pure-XLA reference with identical forward semantics (in-script correctness check)."""
    out = jax.lax.conv_general_dilated(
        x, params["conv1_w"], window_strides=(1, 1), padding="VALID",
        dimension_numbers=("NCHW", "OIHW", "NCHW"))
    out = jnp.maximum(out + params["conv1_b"].reshape(1, -1, 1, 1), 0.0)
    B, C, OH, OW = out.shape
    out = out.reshape(B, C, OH // 2, 2, OW // 2, 2).max(axis=(3, 5))
    flat = out.reshape(-1, FC1_IN)
    h = jnp.maximum(flat @ params["fc1_w"] + params["fc1_b"], 0.0)
    h = jnp.maximum(h @ params["fc2_w"] + params["fc2_b"], 0.0)
    return h @ params["fc3_w"] + params["fc3_b"]


if __name__ == "__main__":
    key = jax.random.PRNGKey(0)
    kx, kp = jax.random.split(key)
    # (2, 3, 22, 22): conv1(3x3) -> (2, 6, 20, 20); pool(2,2) -> (2, 6, 10, 10);
    # 1200 elements => torch's x.view(-1, 400) yields a (3, 400) matrix, reproduced exactly here.
    x = jax.random.normal(kx, (2, 3, 22, 22), dtype=jnp.float32)
    params = init_params(kp)
    prepped = prepare_params(params, batch=x.shape[0], height=x.shape[2], width=x.shape[3])

    out = jax.block_until_ready(jax.jit(net_forward)(x, prepped))
    assert out.shape == (3, 10), out.shape
    assert bool(jnp.all(jnp.isfinite(out)))

    ref = net_reference(x, params)
    assert bool(jnp.allclose(out, ref, atol=1e-2, rtol=1e-2)), float(jnp.max(jnp.abs(out - ref)))
    print("KERNEL_OK")
</pallas_src>

<mosaic_0001>
module attributes {stable_mosaic.version = 11 : i64} {
  func.func @kernel(%arg0: memref<6x768xf32, #tpu.memory_space<vmem>>, %arg1: memref<9x12x6xf32, #tpu.memory_space<vmem>>, %arg2: memref<12x1xf32, #tpu.memory_space<vmem>>, %arg3: memref<512x128xf32, #tpu.memory_space<vmem>>, %arg4: memref<4x3x12xf32, #tpu.memory_space<vmem>>, %arg5: memref<4x128x128xf32, #tpu.memory_space<vmem>>, %arg6: memref<1x128xf32, #tpu.memory_space<vmem>>, %arg7: memref<128x128xf32, #tpu.memory_space<vmem>>, %arg8: memref<1x128xf32, #tpu.memory_space<vmem>>, %arg9: memref<128x128xf32, #tpu.memory_space<vmem>>, %arg10: memref<1x128xf32, #tpu.memory_space<vmem>>, %arg11: memref<3x128xf32, #tpu.memory_space<vmem>>) attributes {dimension_semantics = [], scalar_prefetch = 0 : i64, scratch_operands = 0 : i64, tpu.core_type = #tpu.core_type<tc>} {
    %c0 = arith.constant 0 : index
    %c0_0 = arith.constant 0 : index
    %0 = vector.load %arg0[%c0, %c0_0] : memref<6x768xf32, #tpu.memory_space<vmem>>, vector<6x768xf32>
    %c0_1 = arith.constant 0 : index
    %c0_2 = arith.constant 0 : index
    %1 = vector.load %arg2[%c0_1, %c0_2] : memref<12x1xf32, #tpu.memory_space<vmem>>, vector<12x1xf32>
    %2 = vector.shape_cast %1 : vector<12x1xf32> to vector<12x1xf32>
    %3 = vector.broadcast %2 : vector<12x1xf32> to vector<12x640xf32>
    %c0_3 = arith.constant 0 : index
    %c0_4 = arith.constant 0 : index
    %c0_5 = arith.constant 0 : index
    %4 = vector.load %arg1[%c0_3, %c0_4, %c0_5] : memref<9x12x6xf32, #tpu.memory_space<vmem>>, vector<1x12x6xf32>
    %5 = vector.shape_cast %4 : vector<1x12x6xf32> to vector<12x6xf32>
    %6 = vector.extract_strided_slice %0 {offsets = [0, 0], sizes = [6, 640], strides = [1, 1]} : vector<6x768xf32> to vector<6x640xf32>
    %cst = arith.constant dense<0.000000e+00> : vector<12x640xf32>
    %7 = tpu.matmul %5, %6, %cst {dimension_numbers = #tpu.dot_dimension_numbers<[1], [0], [0], [1], [0, 0, 1, 1], [], []>} : vector<12x6xf32>, vector<6x640xf32>, vector<12x640xf32> -> vector<12x640xf32>
    %8 = arith.addf %3, %7 : vector<12x640xf32>
    %c1 = arith.constant 1 : index
    %c0_6 = arith.constant 0 : index
    %c0_7 = arith.constant 0 : index
    %9 = vector.load %arg1[%c1, %c0_6, %c0_7] : memref<9x12x6xf32, #tpu.memory_space<vmem>>, vector<1x12x6xf32>
    %10 = vector.shape_cast %9 : vector<1x12x6xf32> to vector<12x6xf32>
    %11 = vector.extract_strided_slice %0 {offsets = [0, 1], sizes = [6, 640], strides = [1, 1]} : vector<6x768xf32> to vector<6x640xf32>
    %cst_8 = arith.constant dense<0.000000e+00> : vector<12x640xf32>
    %12 = tpu.matmul %10, %11, %cst_8 {dimension_numbers = #tpu.dot_dimension_numbers<[1], [0], [0], [1], [0, 0, 1, 1], [], []>} : vector<12x6xf32>, vector<6x640xf32>, vector<12x640xf32> -> vector<12x640xf32>
    %13 = arith.addf %8, %12 : vector<12x640xf32>
    %c2 = arith.constant 2 : index
    %c0_9 = arith.constant 0 : index
    %c0_10 = arith.constant 0 : index
    %14 = vector.load %arg1[%c2, %c0_9, %c0_10] : memref<9x12x6xf32, #tpu.memory_space<vmem>>, vector<1x12x6xf32>
    %15 = vector.shape_cast %14 : vector<1x12x6xf32> to vector<12x6xf32>
    %16 = vector.extract_strided_slice %0 {offsets = [0, 2], sizes = [6, 640], strides = [1, 1]} : vector<6x768xf32> to vector<6x640xf32>
    %cst_11 = arith.constant dense<0.000000e+00> : vector<12x640xf32>
    %17 = tpu.matmul %15, %16, %cst_11 {dimension_numbers = #tpu.dot_dimension_numbers<[1], [0], [0], [1], [0, 0, 1, 1], [], []>} : vector<12x6xf32>, vector<6x640xf32>, vector<12x640xf32> -> vector<12x640xf32>
    %18 = arith.addf %13, %17 : vector<12x640xf32>
    %c3 = arith.constant 3 : index
    %c0_12 = arith.constant 0 : index
    %c0_13 = arith.constant 0 : index
    %19 = vector.load %arg1[%c3, %c0_12, %c0_13] : memref<9x12x6xf32, #tpu.memory_space<vmem>>, vector<1x12x6xf32>
    %20 = vector.shape_cast %19 : vector<1x12x6xf32> to vector<12x6xf32>
    %21 = vector.extract_strided_slice %0 {offsets = [0, 22], sizes = [6, 640], strides = [1, 1]} : vector<6x768xf32> to vector<6x640xf32>
    %cst_14 = arith.constant dense<0.000000e+00> : vector<12x640xf32>
    %22 = tpu.matmul %20, %21, %cst_14 {dimension_numbers = #tpu.dot_dimension_numbers<[1], [0], [0], [1], [0, 0, 1, 1], [], []>} : vector<12x6xf32>, vector<6x640xf32>, vector<12x640xf32> -> vector<12x640xf32>
    %23 = arith.addf %18, %22 : vector<12x640xf32>
    %c4 = arith.constant 4 : index
    %c0_15 = arith.constant 0 : index
    %c0_16 = arith.constant 0 : index
    %24 = vector.load %arg1[%c4, %c0_15, %c0_16] : memref<9x12x6xf32, #tpu.memory_space<vmem>>, vector<1x12x6xf32>
    %25 = vector.shape_cast %24 : vector<1x12x6xf32> to vector<12x6xf32>
    %26 = vector.extract_strided_slice %0 {offsets = [0, 23], sizes = [6, 640], strides = [1, 1]} : vector<6x768xf32> to vector<6x640xf32>
    %cst_17 = arith.constant dense<0.000000e+00> : vector<12x640xf32>
    %27 = tpu.matmul %25, %26, %cst_17 {dimension_numbers = #tpu.dot_dimension_numbers<[1], [0], [0], [1], [0, 0, 1, 1], [], []>} : vector<12x6xf32>, vector<6x640xf32>, vector<12x640xf32> -> vector<12x640xf32>
    %28 = arith.addf %23, %27 : vector<12x640xf32>
    %c5 = arith.constant 5 : index
    %c0_18 = arith.constant 0 : index
    %c0_19 = arith.constant 0 : index
    %29 = vector.load %arg1[%c5, %c0_18, %c0_19] : memref<9x12x6xf32, #tpu.memory_space<vmem>>, vector<1x12x6xf32>
    %30 = vector.shape_cast %29 : vector<1x12x6xf32> to vector<12x6xf32>
    %31 = vector.extract_strided_slice %0 {offsets = [0, 24], sizes = [6, 640], strides = [1, 1]} : vector<6x768xf32> to vector<6x640xf32>
    %cst_20 = arith.constant dense<0.000000e+00> : vector<12x640xf32>
    %32 = tpu.matmul %30, %31, %cst_20 {dimension_numbers = #tpu.dot_dimension_numbers<[1], [0], [0], [1], [0, 0, 1, 1], [], []>} : vector<12x6xf32>, vector<6x640xf32>, vector<12x640xf32> -> vector<12x640xf32>
    %33 = arith.addf %28, %32 : vector<12x640xf32>
    %c6 = arith.constant 6 : index
    %c0_21 = arith.constant 0 : index
    %c0_22 = arith.constant 0 : index
    %34 = vector.load %arg1[%c6, %c0_21, %c0_22] : memref<9x12x6xf32, #tpu.memory_space<vmem>>, vector<1x12x6xf32>
    %35 = vector.shape_cast %34 : vector<1x12x6xf32> to vector<12x6xf32>
    %36 = vector.extract_strided_slice %0 {offsets = [0, 44], sizes = [6, 640], strides = [1, 1]} : vector<6x768xf32> to vector<6x640xf32>
    %cst_23 = arith.constant dense<0.000000e+00> : vector<12x640xf32>
    %37 = tpu.matmul %35, %36, %cst_23 {dimension_numbers = #tpu.dot_dimension_numbers<[1], [0], [0], [1], [0, 0, 1, 1], [], []>} : vector<12x6xf32>, vector<6x640xf32>, vector<12x640xf32> -> vector<12x640xf32>
    %38 = arith.addf %33, %37 : vector<12x640xf32>
    %c7 = arith.constant 7 : index
    %c0_24 = arith.constant 0 : index
    %c0_25 = arith.constant 0 : index
    %39 = vector.load %arg1[%c7, %c0_24, %c0_25] : memref<9x12x6xf32, #tpu.memory_space<vmem>>, vector<1x12x6xf32>
    %40 = vector.shape_cast %39 : vector<1x12x6xf32> to vector<12x6xf32>
    %41 = vector.extract_strided_slice %0 {offsets = [0, 45], sizes = [6, 640], strides = [1, 1]} : vector<6x768xf32> to vector<6x640xf32>
    %cst_26 = arith.constant dense<0.000000e+00> : vector<12x640xf32>
    %42 = tpu.matmul %40, %41, %cst_26 {dimension_numbers = #tpu.dot_dimension_numbers<[1], [0], [0], [1], [0, 0, 1, 1], [], []>} : vector<12x6xf32>, vector<6x640xf32>, vector<12x640xf32> -> vector<12x640xf32>
    %43 = arith.addf %38, %42 : vector<12x640xf32>
    %c8 = arith.constant 8 : index
    %c0_27 = arith.constant 0 : index
    %c0_28 = arith.constant 0 : index
    %44 = vector.load %arg1[%c8, %c0_27, %c0_28] : memref<9x12x6xf32, #tpu.memory_space<vmem>>, vector<1x12x6xf32>
    %45 = vector.shape_cast %44 : vector<1x12x6xf32> to vector<12x6xf32>
    %46 = vector.extract_strided_slice %0 {offsets = [0, 46], sizes = [6, 640], strides = [1, 1]} : vector<6x768xf32> to vector<6x640xf32>
    %cst_29 = arith.constant dense<0.000000e+00> : vector<12x640xf32>
    %47 = tpu.matmul %45, %46, %cst_29 {dimension_numbers = #tpu.dot_dimension_numbers<[1], [0], [0], [1], [0, 0, 1, 1], [], []>} : vector<12x6xf32>, vector<6x640xf32>, vector<12x640xf32> -> vector<12x640xf32>
    %48 = arith.addf %43, %47 : vector<12x640xf32>
    %cst_30 = arith.constant 0.000000e+00 : f32
    %49 = vector.broadcast %cst_30 : f32 to vector<12x640xf32>
    %50 = arith.maximumf %48, %49 : vector<12x640xf32>
    %51 = vector.extract_strided_slice %50 {offsets = [0, 0], sizes = [12, 512], strides = [1, 1]} : vector<12x640xf32> to vector<12x512xf32>
    %52 = vector.extract_strided_slice %50 {offsets = [0, 1], sizes = [12, 512], strides = [1, 1]} : vector<12x640xf32> to vector<12x512xf32>
    %53 = arith.maximumf %51, %52 : vector<12x512xf32>
    %54 = vector.extract_strided_slice %50 {offsets = [0, 22], sizes = [12, 512], strides = [1, 1]} : vector<12x640xf32> to vector<12x512xf32>
    %55 = vector.extract_strided_slice %50 {offsets = [0, 23], sizes = [12, 512], strides = [1, 1]} : vector<12x640xf32> to vector<12x512xf32>
    %56 = arith.maximumf %54, %55 : vector<12x512xf32>
    %57 = arith.maximumf %53, %56 : vector<12x512xf32>
    %c0_31 = arith.constant 0 : index
    %c0_32 = arith.constant 0 : index
    %58 = vector.load %arg3[%c0_31, %c0_32] : memref<512x128xf32, #tpu.memory_space<vmem>>, vector<512x128xf32>
    %cst_33 = arith.constant dense<0.000000e+00> : vector<12x128xf32>
    %59 = tpu.matmul %57, %58, %cst_33 {dimension_numbers = #tpu.dot_dimension_numbers<[1], [0], [0], [1], [0, 0, 1, 1], [], []>} : vector<12x512xf32>, vector<512x128xf32>, vector<12x128xf32> -> vector<12x128xf32>
    %c0_34 = arith.constant 0 : index
    %c0_35 = arith.constant 0 : index
    %60 = vector.load %arg6[%c0_34, %c0_35] : memref<1x128xf32, #tpu.memory_space<vmem>>, vector<1x128xf32>
    %61 = vector.shape_cast %60 : vector<1x128xf32> to vector<1x128xf32>
    %62 = vector.broadcast %61 : vector<1x128xf32> to vector<3x128xf32>
    %c0_36 = arith.constant 0 : index
    %c0_37 = arith.constant 0 : index
    %c0_38 = arith.constant 0 : index
    %63 = vector.load %arg4[%c0_36, %c0_37, %c0_38] : memref<4x3x12xf32, #tpu.memory_space<vmem>>, vector<1x3x12xf32>
    %64 = vector.shape_cast %63 : vector<1x3x12xf32> to vector<3x12xf32>
    %cst_39 = arith.constant dense<0.000000e+00> : vector<3x128xf32>
    %65 = tpu.matmul %64, %59, %cst_39 {dimension_numbers = #tpu.dot_dimension_numbers<[1], [0], [0], [1], [0, 0, 1, 1], [], []>} : vector<3x12xf32>, vector<12x128xf32>, vector<3x128xf32> -> vector<3x128xf32>
    %c0_40 = arith.constant 0 : index
    %c0_41 = arith.constant 0 : index
    %c0_42 = arith.constant 0 : index
    %66 = vector.load %arg5[%c0_40, %c0_41, %c0_42] : memref<4x128x128xf32, #tpu.memory_space<vmem>>, vector<1x128x128xf32>
    %67 = vector.shape_cast %66 : vector<1x128x128xf32> to vector<128x128xf32>
    %cst_43 = arith.constant dense<0.000000e+00> : vector<3x128xf32>
    %68 = tpu.matmul %65, %67, %cst_43 {dimension_numbers = #tpu.dot_dimension_numbers<[1], [0], [0], [1], [0, 0, 1, 1], [], []>} : vector<3x128xf32>, vector<128x128xf32>, vector<3x128xf32> -> vector<3x128xf32>
    %69 = arith.addf %62, %68 : vector<3x128xf32>
    %c1_44 = arith.constant 1 : index
    %c0_45 = arith.constant 0 : index
    %c0_46 = arith.constant 0 : index
    %70 = vector.load %arg4[%c1_44, %c0_45, %c0_46] : memref<4x3x12xf32, #tpu.memory_space<vmem>>, vector<1x3x12xf32>
    %71 = vector.shape_cast %70 : vector<1x3x12xf32> to vector<3x12xf32>
    %cst_47 = arith.constant dense<0.000000e+00> : vector<3x128xf32>
    %72 = tpu.matmul %71, %59, %cst_47 {dimension_numbers = #tpu.dot_dimension_numbers<[1], [0], [0], [1], [0, 0, 1, 1], [], []>} : vector<3x12xf32>, vector<12x128xf32>, vector<3x128xf32> -> vector<3x128xf32>
    %c1_48 = arith.constant 1 : index
    %c0_49 = arith.constant 0 : index
    %c0_50 = arith.constant 0 : index
    %73 = vector.load %arg5[%c1_48, %c0_49, %c0_50] : memref<4x128x128xf32, #tpu.memory_space<vmem>>, vector<1x128x128xf32>
    %74 = vector.shape_cast %73 : vector<1x128x128xf32> to vector<128x128xf32>
    %cst_51 = arith.constant dense<0.000000e+00> : vector<3x128xf32>
    %75 = tpu.matmul %72, %74, %cst_51 {dimension_numbers = #tpu.dot_dimension_numbers<[1], [0], [0], [1], [0, 0, 1, 1], [], []>} : vector<3x128xf32>, vector<128x128xf32>, vector<3x128xf32> -> vector<3x128xf32>
    %76 = arith.addf %69, %75 : vector<3x128xf32>
    %c2_52 = arith.constant 2 : index
    %c0_53 = arith.constant 0 : index
    %c0_54 = arith.constant 0 : index
    %77 = vector.load %arg4[%c2_52, %c0_53, %c0_54] : memref<4x3x12xf32, #tpu.memory_space<vmem>>, vector<1x3x12xf32>
    %78 = vector.shape_cast %77 : vector<1x3x12xf32> to vector<3x12xf32>
    %cst_55 = arith.constant dense<0.000000e+00> : vector<3x128xf32>
    %79 = tpu.matmul %78, %59, %cst_55 {dimension_numbers = #tpu.dot_dimension_numbers<[1], [0], [0], [1], [0, 0, 1, 1], [], []>} : vector<3x12xf32>, vector<12x128xf32>, vector<3x128xf32> -> vector<3x128xf32>
    %c2_56 = arith.constant 2 : index
    %c0_57 = arith.constant 0 : index
    %c0_58 = arith.constant 0 : index
    %80 = vector.load %arg5[%c2_56, %c0_57, %c0_58] : memref<4x128x128xf32, #tpu.memory_space<vmem>>, vector<1x128x128xf32>
    %81 = vector.shape_cast %80 : vector<1x128x128xf32> to vector<128x128xf32>
    %cst_59 = arith.constant dense<0.000000e+00> : vector<3x128xf32>
    %82 = tpu.matmul %79, %81, %cst_59 {dimension_numbers = #tpu.dot_dimension_numbers<[1], [0], [0], [1], [0, 0, 1, 1], [], []>} : vector<3x128xf32>, vector<128x128xf32>, vector<3x128xf32> -> vector<3x128xf32>
    %83 = arith.addf %76, %82 : vector<3x128xf32>
    %c3_60 = arith.constant 3 : index
    %c0_61 = arith.constant 0 : index
    %c0_62 = arith.constant 0 : index
    %84 = vector.load %arg4[%c3_60, %c0_61, %c0_62] : memref<4x3x12xf32, #tpu.memory_space<vmem>>, vector<1x3x12xf32>
    %85 = vector.shape_cast %84 : vector<1x3x12xf32> to vector<3x12xf32>
    %cst_63 = arith.constant dense<0.000000e+00> : vector<3x128xf32>
    %86 = tpu.matmul %85, %59, %cst_63 {dimension_numbers = #tpu.dot_dimension_numbers<[1], [0], [0], [1], [0, 0, 1, 1], [], []>} : vector<3x12xf32>, vector<12x128xf32>, vector<3x128xf32> -> vector<3x128xf32>
    %c3_64 = arith.constant 3 : index
    %c0_65 = arith.constant 0 : index
    %c0_66 = arith.constant 0 : index
    %87 = vector.load %arg5[%c3_64, %c0_65, %c0_66] : memref<4x128x128xf32, #tpu.memory_space<vmem>>, vector<1x128x128xf32>
    %88 = vector.shape_cast %87 : vector<1x128x128xf32> to vector<128x128xf32>
    %cst_67 = arith.constant dense<0.000000e+00> : vector<3x128xf32>
    %89 = tpu.matmul %86, %88, %cst_67 {dimension_numbers = #tpu.dot_dimension_numbers<[1], [0], [0], [1], [0, 0, 1, 1], [], []>} : vector<3x128xf32>, vector<128x128xf32>, vector<3x128xf32> -> vector<3x128xf32>
    %90 = arith.addf %83, %89 : vector<3x128xf32>
    %cst_68 = arith.constant 0.000000e+00 : f32
    %91 = vector.broadcast %cst_68 : f32 to vector<3x128xf32>
    %92 = arith.maximumf %90, %91 : vector<3x128xf32>
    %c0_69 = arith.constant 0 : index
    %c0_70 = arith.constant 0 : index
    %93 = vector.load %arg7[%c0_69, %c0_70] : memref<128x128xf32, #tpu.memory_space<vmem>>, vector<128x128xf32>
    %cst_71 = arith.constant dense<0.000000e+00> : vector<3x128xf32>
    %94 = tpu.matmul %92, %93, %cst_71 {dimension_numbers = #tpu.dot_dimension_numbers<[1], [0], [0], [1], [0, 0, 1, 1], [], []>} : vector<3x128xf32>, vector<128x128xf32>, vector<3x128xf32> -> vector<3x128xf32>
    %c0_72 = arith.constant 0 : index
    %c0_73 = arith.constant 0 : index
    %95 = vector.load %arg8[%c0_72, %c0_73] : memref<1x128xf32, #tpu.memory_space<vmem>>, vector<1x128xf32>
    %96 = vector.broadcast %95 : vector<1x128xf32> to vector<3x128xf32>
    %97 = arith.addf %94, %96 : vector<3x128xf32>
    %cst_74 = arith.constant 0.000000e+00 : f32
    %98 = vector.broadcast %cst_74 : f32 to vector<3x128xf32>
    %99 = arith.maximumf %97, %98 : vector<3x128xf32>
    %c0_75 = arith.constant 0 : index
    %c0_76 = arith.constant 0 : index
    %100 = vector.load %arg9[%c0_75, %c0_76] : memref<128x128xf32, #tpu.memory_space<vmem>>, vector<128x128xf32>
    %cst_77 = arith.constant dense<0.000000e+00> : vector<3x128xf32>
    %101 = tpu.matmul %99, %100, %cst_77 {dimension_numbers = #tpu.dot_dimension_numbers<[1], [0], [0], [1], [0, 0, 1, 1], [], []>} : vector<3x128xf32>, vector<128x128xf32>, vector<3x128xf32> -> vector<3x128xf32>
    %c0_78 = arith.constant 0 : index
    %c0_79 = arith.constant 0 : index
    %102 = vector.load %arg10[%c0_78, %c0_79] : memref<1x128xf32, #tpu.memory_space<vmem>>, vector<1x128xf32>
    %103 = vector.broadcast %102 : vector<1x128xf32> to vector<3x128xf32>
    %104 = arith.addf %101, %103 : vector<3x128xf32>
    %c0_80 = arith.constant 0 : index
    %c0_81 = arith.constant 0 : index
    %105 = vector.load %arg11[%c0_80, %c0_81] : memref<3x128xf32, #tpu.memory_space<vmem>>, vector<3x128xf32>
    tpu.vector_store %arg11[%c0_80, %c0_81], %104 {strides = array<i32>} : memref<3x128xf32, #tpu.memory_space<vmem>>, vector<3x128xf32>,
    return
  }
}

</mosaic_0001>

<llo_original>
// kernel: net_forward.1
$region0: #{net_forward.1}
  #allocation0 [shape = 'u32[]', space=smem, size = 0x4, offset = 0x4, fixed_abs, tag = 'smem constant byte address 0x4 - core index']
  #allocation1 [shape = 'u32[144,128]{1,0:T(1,128)}', space=vmem, size = 0x12000, scoped, tag = 'internal scratch']
  %s0 = inlined_call_operand.vmem [shape: f32[6,768], index: 0, kind: input, shape index: {}]
  %s1 = inlined_call_operand.vmem [shape: f32[9,12,6], index: 1, kind: input, shape index: {}]
  %s2 = inlined_call_operand.vmem [shape: f32[12,1], index: 2, kind: input, shape index: {}]
  %s3 = inlined_call_operand.vmem [shape: f32[512,128], index: 3, kind: input, shape index: {}]
  %s4 = inlined_call_operand.vmem [shape: f32[4,3,12], index: 4, kind: input, shape index: {}]
  %s5 = inlined_call_operand.hbm [shape: f32[4,128,128], index: 5, kind: input, shape index: {}]
  %s6 = inlined_call_operand.vmem [shape: f32[1,128], index: 6, kind: input, shape index: {}]
  %s7 = inlined_call_operand.vmem [shape: f32[128,128], index: 7, kind: input, shape index: {}]
  %s8 = inlined_call_operand.vmem [shape: f32[1,128], index: 8, kind: input, shape index: {}]
  %s9 = inlined_call_operand.vmem [shape: f32[128,128], index: 9, kind: input, shape index: {}]
  %s10 = inlined_call_operand.vmem [shape: f32[1,128], index: 10, kind: input, shape index: {}]
  %s11 = inlined_call_operand.hbm [shape: f32[3,128], index: 11, kind: output, shape index: {}]
  %s12 = sld [smem:[#allocation0]]
  $region58: #{net_forward.1} parent=0
    _
  %s14 = ssub.s32 1, %s12
  %s15 = scalar_select 0, %s14, %s12
  $region1: #{net_forward.1} parent=0
    #allocation2 [shape = 'u8[262144]{0}', space=vmem, size = 0x40000, scoped, tag = 'input window, operand 5, single buffered']
    #allocation3 [shape = 's32[1]{0}', space=sflag, size = 0x4, scoped, tag = 'scoped memory for net_forward.1']
    #allocation4 [shape = 's32[1]{0}', space=sflag, size = 0x4, scoped, tag = 'scoped memory for net_forward.1']
    #allocation5 [shape = 'u8[2048]{0}', space=vmem, size = 0x800, scoped, tag = 'output window, operand 0, single buffered']
    %16 = vsyncpa [#allocation3], 0
    %17 = vsyncpa [#allocation4], 0
    // Predicated region
    $region2: #{net_forward.1} parent=1 // pred_check
      _
    $region3: #{net_forward.1} parent=1 // pred_check_branch
      %19 = sbr.rel (0) target = $region5
    $region4: #{net_forward.1} parent=1 // pred_region
      _
    $region5: #{net_forward.1} parent=1 // pred_fallthru
      _
    // Predicated region
    $region6: #{net_forward.1} parent=1 // pred_check
      _
    $region7: #{net_forward.1} parent=1 // pred_check_branch
      %21 = sbr.rel (0) target = $region9
    $region8: #{net_forward.1} parent=1 // pred_region
      _
    $region9: #{net_forward.1} parent=1 // pred_fallthru
      _
    // Predicated region
    $region10: #{net_forward.1} parent=1 // pred_check
      _
    $region11: #{net_forward.1} parent=1 // pred_check_branch
      %23 = sbr.rel (0) target = $region13
    $region12: #{net_forward.1} parent=1 // pred_region
      _
    $region13: #{net_forward.1} parent=1 // pred_fallthru
      _
    // Predicated region
    $region14: #{net_forward.1} parent=1 // pred_check
      _
    $region15: #{net_forward.1} parent=1 // pred_check_branch
      %25 = sbr.rel (0) target = $region17
    $region16: #{net_forward.1} parent=1 // pred_region
      _
    $region17: #{net_forward.1} parent=1 // pred_fallthru
      _
    // Predicated region
    $region18: #{net_forward.1} parent=1 // pred_check
      _
    $region19: #{net_forward.1} parent=1 // pred_check_branch
      %27 = sbr.rel (0) target = $region21
    $region20: #{net_forward.1} parent=1 // pred_region
      _
    $region21: #{net_forward.1} parent=1 // pred_fallthru
      _
    // Predicated region
    $region22: #{net_forward.1} parent=1 // pred_check
      _
    $region23: #{net_forward.1} parent=1 // pred_check_branch
      %29 = sbr.rel (0) target = $region25
    $region24: #{net_forward.1} parent=1 // pred_region
      %s31 = ssub.s32 8192, 8192
      %32 = vsyncadd [#allocation3], %s31
      %s33 = sshll.u32 [#allocation2], 4
      %s34 = int_to_ptr.vmem [resolvable:$true] %s33
      %39 = dma.hbm_to_vmem [thread:$0]  %s5, 8192, %s34, [#allocation3], 128, 128, 8
    $region25: #{net_forward.1} parent=1 // pred_fallthru
      _
    // Predicated region
    $region26: #{net_forward.1} parent=1 // pred_check
      _
    $region27: #{net_forward.1} parent=1 // pred_check_branch
      %41 = sbr.rel (0) target = $region29
    $region28: #{net_forward.1} parent=1 // pred_region
      _
    $region29: #{net_forward.1} parent=1 // pred_fallthru
      _
    // Predicated region
    $region30: #{net_forward.1} parent=1 // pred_check
      _
    $region31: #{net_forward.1} parent=1 // pred_check_branch
      %43 = sbr.rel (0) target = $region33
    $region32: #{net_forward.1} parent=1 // pred_region
      _
    $region33: #{net_forward.1} parent=1 // pred_fallthru
      _
    // Predicated region
    $region34: #{net_forward.1} parent=1 // pred_check
      _
    $region35: #{net_forward.1} parent=1 // pred_check_branch
      %45 = sbr.rel (0) target = $region37
    $region36: #{net_forward.1} parent=1 // pred_region
      _
    $region37: #{net_forward.1} parent=1 // pred_fallthru
      _
    // Predicated region
    $region38: #{net_forward.1} parent=1 // pred_check
      _
    $region39: #{net_forward.1} parent=1 // pred_check_branch
      %47 = sbr.rel (0) target = $region41
    $region40: #{net_forward.1} parent=1 // pred_region
      _
    $region41: #{net_forward.1} parent=1 // pred_fallthru
      _
    // Predicated region
    $region42: #{net_forward.1} parent=1 // pred_check
      _
    $region43: #{net_forward.1} parent=1 // pred_check_branch
      %49 = sbr.rel (0) target = $region45
    $region44: #{net_forward.1} parent=1 // pred_region
      _
    $region45: #{net_forward.1} parent=1 // pred_fallthru
      _
    // Predicated region
    $region46: #{net_forward.1} parent=1 // pred_check
      _
    $region47: #{net_forward.1} parent=1 // pred_check_branch
      %51 = sbr.rel (0) target = $region49
    $region48: #{net_forward.1} parent=1 // pred_region
      %52 = dma.done [#allocation3], 8192
    $region49: #{net_forward.1} parent=1 // pred_fallthru
      _
    %v53 = vld [vmem:[%s0] sm:$0x3f]
    %v54 = vld [vmem:[%s0 + $0x8] sm:$0x3f]
    %v55 = vld [vmem:[%s0 + $0x10] sm:$0x3f]
    %v56 = vld [vmem:[%s0 + $0x18] sm:$0x3f]
    %v57 = vld [vmem:[%s0 + $0x20] sm:$0x3f]
    %v58 = vld [vmem:[%s0 + $0x28] sm:$0x3f]
    %v59 = vld [vmem:[%s2] sm:$0xff]
    %v60 = vld [vmem:[%s2 + $0x8] sm:$0xf]
    %62 = vset.pattern.permute.xlu0 0
    %63 = vperm.xlu0 %62, %v59
    %v64 = vpop.permute.xlu0 %63
    %67 = vset.pattern.permute.xlu0 0
    %68 = vperm.xlu0 %67, %v60
    %v69 = vpop.permute.xlu0 %68
    %v71 = vld [vmem:[%s1] sm:$0xff]
    %v72 = vld [vmem:[%s1 + $0x8] sm:$0xf]
    %vm73 = vcmask 48128
    %v75 = vsel %vm73, %v71, 0
    %v78 = vsel %vm73, %v72, 0
    %vm80 = vcmask 1045504
    %v82 = vsel %vm80, %v53, 0
    %v85 = vsel %vm80, %v54, 0
    %v88 = vsel %vm80, %v55, 0
    %v91 = vsel %vm80, %v56, 0
    %v94 = vsel %vm80, %v57, 0
    %96 = vmatprep.subr.mxu0 %v85
    %97 = vmatpush1.msra.mxu0 %v82
    %98 = vmatprep.subr.mxu0 0.0
    %99 = vmatpush1.msra.mxu0 0.0
    %100 = vmatprep.subr.mxu0 0.0
    %101 = vmatpush1.msra.mxu0 0.0
    %102 = vmatprep.subr.mxu0 0.0
    %103 = vmatpush1.msra.mxu0 0.0
    %104 = vmatprep.subr.mxu0 0.0
    %105 = vmatpush1.msra.mxu0 0.0
    %106 = vmatprep.subr.mxu0 0.0
    %107 = vmatpush1.msra.mxu0 0.0
    %108 = vmatprep.subr.mxu0 0.0
    %109 = vmatpush1.msra.mxu0 0.0
    %110 = vmatprep.subr.mxu0 0.0
    %111 = vmatpush1.msra.mxu0 0.0
    %112 = vmatprep.subr.mxu0 0.0
    %113 = vmatpush1.msra.mxu0 0.0
    %114 = vmatprep.subr.mxu0 0.0
    %115 = vmatpush1.msra.mxu0 0.0
    %116 = vmatprep.subr.mxu0 0.0
    %117 = vmatpush1.msra.mxu0 0.0
    %118 = vmatprep.subr.mxu0 0.0
    %119 = vmatpush1.msra.mxu0 0.0
    %120 = vmatprep.subr.mxu0 0.0
    %121 = vmatpush1.msra.mxu0 0.0
    %122 = vmatprep.subr.mxu0 0.0
    %123 = vmatpush1.msra.mxu0 0.0
    %124 = vmatprep.subr.mxu0 0.0
    %125 = vmatpush1.msra.mxu0 0.0
    %126 = vmatprep.subr.mxu0 0.0
    %127 = vmatpush1.msra.mxu0 0.0
    %128 = vmatprep.subr.mxu0 0.0
    %129 = vmatpush1.msra.mxu0 0.0
    %130 = vmatprep.subr.mxu0 0.0
    %131 = vmatpush1.msra.mxu0 0.0
    %132 = vmatprep.subr.mxu0 0.0
    %133 = vmatpush1.msra.mxu0 0.0
    %134 = vmatprep.subr.mxu0 0.0
    %135 = vmatpush1.msra.mxu0 0.0
    %136 = vmatprep.subr.mxu0 0.0
    %137 = vmatpush1.msra.mxu0 0.0
    %138 = vmatprep.subr.mxu0 0.0
    %139 = vmatpush1.msra.mxu0 0.0
    %140 = vmatprep.subr.mxu0 0.0
    %141 = vmatpush1.msra.mxu0 0.0
    %142 = vmatprep.subr.mxu0 0.0
    %143 = vmatpush1.msra.mxu0 0.0
    %144 = vmatprep.subr.mxu0 0.0
    %145 = vmatpush1.msra.mxu0 0.0
    %146 = vmatprep.subr.mxu0 0.0
    %147 = vmatpush1.msra.mxu0 0.0
    %148 = vmatprep.subr.mxu0 0.0
    %149 = vmatpush1.msra.mxu0 0.0
    %150 = vmatprep.subr.mxu0 0.0
    %151 = vmatpush1.msra.mxu0 0.0
    %152 = vmatprep.subr.mxu0 0.0
    %153 = vmatpush1.msra.mxu0 0.0
    %154 = vmatprep.subr.mxu0 0.0
    %155 = vmatpush1.msra.mxu0 0.0
    %156 = vmatprep.subr.mxu0 0.0
    %157 = vmatpush1.msra.mxu0 0.0
    %158 = vmatprep.subr.mxu0 0.0
    %159 = vmatpush1.msra.mxu0 0.0
    %160 = vmatprep.mubr.f32.mxu0 0.0
    %161 = vmatmul.mubr.f32.gmra.mrb[0].mxu0 %v75
    %v162 = vpop.f32.mrb[0].mxu0
    %v163 = vadd.f32 0.0, %v162
    %v164 = vpop.f32.mrb[0].mxu0
    %v165 = vadd.f32 0.0, %v164
    %166 = vmatprep.mubr.f32.mxu0 0.0
    %167 = vmatmul.mubr.f32.gmra.mrb[0].mxu0 %v78
    %v168 = vpop.f32.mrb[0].mxu0
    %v169 = vadd.f32 0.0, %v168
    %v170 = vpop.f32.mrb[0].mxu0
    %v171 = vadd.f32 0.0, %v170
    %172 = vdwg.mxu0
    %173 = vmatprep.subr.mxu0 %v91
    %174 = vmatpush1.msra.mxu0 %v88
    %175 = vmatprep.subr.mxu0 0.0
    %176 = vmatpush1.msra.mxu0 0.0
    %177 = vmatprep.subr.mxu0 0.0
    %178 = vmatpush1.msra.mxu0 0.0
    %179 = vmatprep.subr.mxu0 0.0
    %180 = vmatpush1.msra.mxu0 0.0
    %181 = vmatprep.subr.mxu0 0.0
    %182 = vmatpush1.msra.mxu0 0.0
    %183 = vmatprep.subr.mxu0 0.0
    %184 = vmatpush1.msra.mxu0 0.0
    %185 = vmatprep.subr.mxu0 0.0
    %186 = vmatpush1.msra.mxu0 0.0
    %187 = vmatprep.subr.mxu0 0.0
    %188 = vmatpush1.msra.mxu0 0.0
    %189 = vmatprep.subr.mxu0 0.0
    %190 = vmatpush1.msra.mxu0 0.0
    %191 = vmatprep.subr.mxu0 0.0
    %192 = vmatpush1.msra.mxu0 0.0
    %193 = vmatprep.subr.mxu0 0.0
    %194 = vmatpush1.msra.mxu0 0.0
    %195 = vmatprep.subr.mxu0 0.0
    %196 = vmatpush1.msra.mxu0 0.0
    %197 = vmatprep.subr.mxu0 0.0
    %198 = vmatpush1.msra.mxu0 0.0
    %199 = vmatprep.subr.mxu0 0.0
    %200 = vmatpush1.msra.mxu0 0.0
    %201 = vmatprep.subr.mxu0 0.0
    %202 = vmatpush1.msra.mxu0 0.0
    %203 = vmatprep.subr.mxu0 0.0
    %204 = vmatpush1.msra.mxu0 0.0
    %205 = vmatprep.subr.mxu0 0.0
    %206 = vmatpush1.msra.mxu0 0.0
    %207 = vmatprep.subr.mxu0 0.0
    %208 = vmatpush1.msra.mxu0 0.0
    %209 = vmatprep.subr.mxu0 0.0
    %210 = vmatpush1.msra.mxu0 0.0
    %211 = vmatprep.subr.mxu0 0.0
    %212 = vmatpush1.msra.mxu0 0.0
    %213 = vmatprep.subr.mxu0 0.0
    %214 = vmatpush1.msra.mxu0 0.0
    %215 = vmatprep.subr.mxu0 0.0
    %216 = vmatpush1.msra.mxu0 0.0
    %217 = vmatprep.subr.mxu0 0.0
    %218 = vmatpush1.msra.mxu0 0.0
    %219 = vmatprep.subr.mxu0 0.0
    %220 = vmatpush1.msra.mxu0 0.0
    %221 = vmatprep.subr.mxu0 0.0
    %222 = vmatpush1.msra.mxu0 0.0
    %223 = vmatprep.subr.mxu0 0.0
    %224 = vmatpush1.msra.mxu0 0.0
    %225 = vmatprep.subr.mxu0 0.0
    %226 = vmatpush1.msra.mxu0 0.0
    %227 = vmatprep.subr.mxu0 0.0
    %228 = vmatpush1.msra.mxu0 0.0
    %229 = vmatprep.subr.mxu0 0.0
    %230 = vmatpush1.msra.mxu0 0.0
    %231 = vmatprep.subr.mxu0 0.0
    %232 = vmatpush1.msra.mxu0 0.0
    %233 = vmatprep.subr.mxu0 0.0
    %234 = vmatpush1.msra.mxu0 0.0
    %235 = vmatprep.subr.mxu0 0.0
    %236 = vmatpush1.msra.mxu0 0.0
    %237 = vmatprep.mubr.f32.mxu0 0.0
    %238 = vmatmul.mubr.f32.gmra.mrb[0].mxu0 %v75
    %v239 = vpop.f32.mrb[0].mxu0
    %v240 = vadd.f32 0.0, %v239
    %v241 = vpop.f32.mrb[0].mxu0
    %v242 = vadd.f32 0.0, %v241
    %243 = vmatprep.mubr.f32.mxu0 0.0
    %244 = vmatmul.mubr.f32.gmra.mrb[0].mxu0 %v78
    %v245 = vpop.f32.mrb[0].mxu0
    %v246 = vadd.f32 0.0, %v245
    %v247 = vpop.f32.mrb[0].mxu0
    %v248 = vadd.f32 0.0, %v247
    %249 = vdwg.mxu0
    %250 = vmatprep.subr.mxu0 0.0
    %251 = vmatpush1.msra.mxu0 %v94
    %252 = vmatprep.subr.mxu0 0.0
    %253 = vmatpush1.msra.mxu0 0.0
    %254 = vmatprep.subr.mxu0 0.0
    %255 = vmatpush1.msra.mxu0 0.0
    %256 = vmatprep.subr.mxu0 0.0
    %257 = vmatpush1.msra.mxu0 0.0
    %258 = vmatprep.subr.mxu0 0.0
    %259 = vmatpush1.msra.mxu0 0.0
    %260 = vmatprep.subr.mxu0 0.0
    %261 = vmatpush1.msra.mxu0 0.0
    %262 = vmatprep.subr.mxu0 0.0
    %263 = vmatpush1.msra.mxu0 0.0
    %264 = vmatprep.subr.mxu0 0.0
    %265 = vmatpush1.msra.mxu0 0.0
    %266 = vmatprep.subr.mxu0 0.0
    %267 = vmatpush1.msra.mxu0 0.0
    %268 = vmatprep.subr.mxu0 0.0
    %269 = vmatpush1.msra.mxu0 0.0
    %270 = vmatprep.subr.mxu0 0.0
    %271 = vmatpush1.msra.mxu0 0.0
    %272 = vmatprep.subr.mxu0 0.0
    %273 = vmatpush1.msra.mxu0 0.0
    %274 = vmatprep.subr.mxu0 0.0
    %275 = vmatpush1.msra.mxu0 0.0
    %276 = vmatprep.subr.mxu0 0.0
    %277 = vmatpush1.msra.mxu0 0.0
    %278 = vmatprep.subr.mxu0 0.0
    %279 = vmatpush1.msra.mxu0 0.0
    %280 = vmatprep.subr.mxu0 0.0
    %281 = vmatpush1.msra.mxu0 0.0
    %282 = vmatprep.subr.mxu0 0.0
    %283 = vmatpush1.msra.mxu0 0.0
    %284 = vmatprep.subr.mxu0 0.0
    %285 = vmatpush1.msra.mxu0 0.0
    %286 = vmatprep.subr.mxu0 0.0
    %287 = vmatpush1.msra.mxu0 0.0
    %288 = vmatprep.subr.mxu0 0.0
    %289 = vmatpush1.msra.mxu0 0.0
    %290 = vmatprep.subr.mxu0 0.0
    %291 = vmatpush1.msra.mxu0 0.0
    %292 = vmatprep.subr.mxu0 0.0
    %293 = vmatpush1.msra.mxu0 0.0
    %294 = vmatprep.subr.mxu0 0.0
    %295 = vmatpush1.msra.mxu0 0.0
    %296 = vmatprep.subr.mxu0 0.0
    %297 = vmatpush1.msra.mxu0 0.0
    %298 = vmatprep.subr.mxu0 0.0
    %299 = vmatpush1.msra.mxu0 0.0
    %300 = vmatprep.subr.mxu0 0.0
    %301 = vmatpush1.msra.mxu0 0.0
    %302 = vmatprep.subr.mxu0 0.0
    %303 = vmatpush1.msra.mxu0 0.0
    %304 = vmatprep.subr.mxu0 0.0
    %305 = vmatpush1.msra.mxu0 0.0
    %306 = vmatprep.subr.mxu0 0.0
    %307 = vmatpush1.msra.mxu0 0.0
    %308 = vmatprep.subr.mxu0 0.0
    %309 = vmatpush1.msra.mxu0 0.0
    %310 = vmatprep.subr.mxu0 0.0
    %311 = vmatpush1.msra.mxu0 0.0
    %312 = vmatprep.subr.mxu0 0.0
    %313 = vmatpush1.msra.mxu0 0.0
    %314 = vmatprep.mubr.f32.mxu0 0.0
    %315 = vmatmul.mubr.f32.gmra.mrb[0].mxu0 %v75
    %v316 = vpop.f32.mrb[0].mxu0
    %v317 = vadd.f32 0.0, %v316
    %v318 = vpop.f32.mrb[0].mxu0
    %319 = vmatprep.mubr.f32.mxu0 0.0
    %320 = vmatmul.mubr.f32.gmra.mrb[0].mxu0 %v78
    %v321 = vpop.f32.mrb[0].mxu0
    %v322 = vadd.f32 0.0, %v321
    %v323 = vpop.f32.mrb[0].mxu0
    %324 = vdwg.mxu0
    %v325 = vadd.f32 %v64, %v163
    %v326 = vadd.f32 %v64, %v165
    %v327 = vadd.f32 %v64, %v240
    %v328 = vadd.f32 %v64, %v242
    %v329 = vadd.f32 %v64, %v317
    %v330 = vadd.f32 %v69, %v169
    %v331 = vadd.f32 %v69, %v171
    %v332 = vadd.f32 %v69, %v246
    %v333 = vadd.f32 %v69, %v248
    %v334 = vadd.f32 %v69, %v322
    %s335 = scalar_lea.vmem %s1, 16
    %v336 = vld [vmem:[%s335] sm:$0xff]
    %v337 = vld [vmem:[%s335 + $0x8] sm:$0xf]
    %339 = vrot.lane.b32.xlu0 %v53, 127
    %v340 = vpop.permute.xlu0 %339
    %341 = vrot.lane.b32.xlu0 %v54, 127
    %v342 = vpop.permute.xlu0 %341
    %343 = vrot.lane.b32.xlu0 %v55, 127
    %v344 = vpop.permute.xlu0 %343
    %345 = vrot.lane.b32.xlu0 %v56, 127
    %v346 = vpop.permute.xlu0 %345
    %347 = vrot.lane.b32.xlu0 %v57, 127
    %v348 = vpop.permute.xlu0 %347
    %349 = vrot.lane.b32.xlu0 %v58, 127
    %v350 = vpop.permute.xlu0 %349
    %vm351 = vcmask 1039360
    %v352 = vsel %vm351, %v340, %v342
    %v353 = vsel %vm351, %v342, %v344
    %v354 = vsel %vm351, %v344, %v346
    %v355 = vsel %vm351, %v346, %v348
    %v356 = vsel %vm351, %v348, %v350
    %v358 = vsel %vm73, %v336, 0
    %v361 = vsel %vm73, %v337, 0
    %v363 = vsel %vm80, %v352, 0
    %v365 = vsel %vm80, %v353, 0
    %v367 = vsel %vm80, %v354, 0
    %v369 = vsel %vm80, %v355, 0
    %v371 = vsel %vm80, %v356, 0
    %373 = vmatprep.subr.mxu0 %v365
    %374 = vmatpush1.msra.mxu0 %v363
    %375 = vmatprep.subr.mxu0 0.0
    %376 = vmatpush1.msra.mxu0 0.0
    %377 = vmatprep.subr.mxu0 0.0
    %378 = vmatpush1.msra.mxu0 0.0
    %379 = vmatprep.subr.mxu0 0.0
    %380 = vmatpush1.msra.mxu0 0.0
    %381 = vmatprep.subr.mxu0 0.0
    %382 = vmatpush1.msra.mxu0 0.0
    %383 = vmatprep.subr.mxu0 0.0
    %384 = vmatpush1.msra.mxu0 0.0
    %385 = vmatprep.subr.mxu0 0.0
    %386 = vmatpush1.msra.mxu0 0.0
    %387 = vmatprep.subr.mxu0 0.0
    %388 = vmatpush1.msra.mxu0 0.0
    %389 = vmatprep.subr.mxu0 0.0
    %390 = vmatpush1.msra.mxu0 0.0
    %391 = vmatprep.subr.mxu0 0.0
    %392 = vmatpush1.msra.mxu0 0.0
    %393 = vmatprep.subr.mxu0 0.0
    %394 = vmatpush1.msra.mxu0 0.0
    %395 = vmatprep.subr.mxu0 0.0
    %396 = vmatpush1.msra.mxu0 0.0
    %397 = vmatprep.subr.mxu0 0.0
    %398 = vmatpush1.msra.mxu0 0.0
    %399 = vmatprep.subr.mxu0 0.0
    %400 = vmatpush1.msra.mxu0 0.0
    %401 = vmatprep.subr.mxu0 0.0
    %402 = vmatpush1.msra.mxu0 0.0
    %403 = vmatprep.subr.mxu0 0.0
    %404 = vmatpush1.msra.mxu0 0.0
    %405 = vmatprep.subr.mxu0 0.0
    %406 = vmatpush1.msra.mxu0 0.0
    %407 = vmatprep.subr.mxu0 0.0
    %408 = vmatpush1.msra.mxu0 0.0
    %409 = vmatprep.subr.mxu0 0.0
    %410 = vmatpush1.msra.mxu0 0.0
    %411 = vmatprep.subr.mxu0 0.0
    %412 = vmatpush1.msra.mxu0 0.0
    %413 = vmatprep.subr.mxu0 0.0
    %414 = vmatpush1.msra.mxu0 0.0
    %415 = vmatprep.subr.mxu0 0.0
    %416 = vmatpush1.msra.mxu0 0.0
    %417 = vmatprep.subr.mxu0 0.0
    %418 = vmatpush1.msra.mxu0 0.0
    %419 = vmatprep.subr.mxu0 0.0
    %420 = vmatpush1.msra.mxu0 0.0
    %421 = vmatprep.subr.mxu0 0.0
    %422 = vmatpush1.msra.mxu0 0.0
    %423 = vmatprep.subr.mxu0 0.0
    %424 = vmatpush1.msra.mxu0 0.0
    %425 = vmatprep.subr.mxu0 0.0
    %426 = vmatpush1.msra.mxu0 0.0
    %427 = vmatprep.subr.mxu0 0.0
    %428 = vmatpush1.msra.mxu0 0.0
    %429 = vmatprep.subr.mxu0 0.0
    %430 = vmatpush1.msra.mxu0 0.0
    %431 = vmatprep.subr.mxu0 0.0
    %432 = vmatpush1.msra.mxu0 0.0
    %433 = vmatprep.subr.mxu0 0.0
    %434 = vmatpush1.msra.mxu0 0.0
    %435 = vmatprep.subr.mxu0 0.0
    %436 = vmatpush1.msra.mxu0 0.0
    %437 = vmatprep.mubr.f32.mxu0 0.0
    %438 = vmatmul.mubr.f32.gmra.mrb[0].mxu0 %v358
    %v439 = vpop.f32.mrb[0].mxu0
    %v440 = vadd.f32 0.0, %v439
    %v441 = vpop.f32.mrb[0].mxu0
    %v442 = vadd.f32 0.0, %v441
    %443 = vmatprep.mubr.f32.mxu0 0.0
    %444 = vmatmul.mubr.f32.gmra.mrb[0].mxu0 %v361
    %v445 = vpop.f32.mrb[0].mxu0
    %v446 = vadd.f32 0.0, %v445
    %v447 = vpop.f32.mrb[0].mxu0
    %v448 = vadd.f32 0.0, %v447
    %449 = vdwg.mxu0
    %450 = vmatprep.subr.mxu0 %v369
    %451 = vmatpush1.msra.mxu0 %v367
    %452 = vmatprep.subr.mxu0 0.0
    %453 = vmatpush1.msra.mxu0 0.0
    %454 = vmatprep.subr.mxu0 0.0
    %455 = vmatpush1.msra.mxu0 0.0
    %456 = vmatprep.subr.mxu0 0.0
    %457 = vmatpush1.msra.mxu0 0.0
    %458 = vmatprep.subr.mxu0 0.0
    %459 = vmatpush1.msra.mxu0 0.0
    %460 = vmatprep.subr.mxu0 0.0
    %461 = vmatpush1.msra.mxu0 0.0
    %462 = vmatprep.subr.mxu0 0.0
    %463 = vmatpush1.msra.mxu0 0.0
    %464 = vmatprep.subr.mxu0 0.0
    %465 = vmatpush1.msra.mxu0 0.0
    %466 = vmatprep.subr.mxu0 0.0
    %467 = vmatpush1.msra.mxu0 0.0
    %468 = vmatprep.subr.mxu0 0.0
    %469 = vmatpush1.msra.mxu0 0.0
    %470 = vmatprep.subr.mxu0 0.0
    %471 = vmatpush1.msra.mxu0 0.0
    %472 = vmatprep.subr.mxu0 0.0
    %473 = vmatpush1.msra.mxu0 0.0
    %474 = vmatprep.subr.mxu0 0.0
    %475 = vmatpush1.msra.mxu0 0.0
    %476 = vmatprep.subr.mxu0 0.0
    %477 = vmatpush1.msra.mxu0 0.0
    %478 = vmatprep.subr.mxu0 0.0
    %479 = vmatpush1.msra.mxu0 0.0
    %480 = vmatprep.subr.mxu0 0.0
    %481 = vmatpush1.msra.mxu0 0.0
    %482 = vmatprep.subr.mxu0 0.0
    %483 = vmatpush1.msra.mxu0 0.0
    %484 = vmatprep.subr.mxu0 0.0
    %485 = vmatpush1.msra.mxu0 0.0
    %486 = vmatprep.subr.mxu0 0.0
    %487 = vmatpush1.msra.mxu0 0.0
    %488 = vmatprep.subr.mxu0 0.0
    %489 = vmatpush1.msra.mxu0 0.0
    %490 = vmatprep.subr.mxu0 0.0
    %491 = vmatpush1.msra.mxu0 0.0
    %492 = vmatprep.subr.mxu0 0.0
    %493 = vmatpush1.msra.mxu0 0.0
    %494 = vmatprep.subr.mxu0 0.0
    %495 = vmatpush1.msra.mxu0 0.0
    %496 = vmatprep.subr.mxu0 0.0
    %497 = vmatpush1.msra.mxu0 0.0
    %498 = vmatprep.subr.mxu0 0.0
    %499 = vmatpush1.msra.mxu0 0.0
    %500 = vmatprep.subr.mxu0 0.0
    %501 = vmatpush1.msra.mxu0 0.0
    %502 = vmatprep.subr.mxu0 0.0
    %503 = vmatpush1.msra.mxu0 0.0
    %504 = vmatprep.subr.mxu0 0.0
    %505 = vmatpush1.msra.mxu0 0.0
    %506 = vmatprep.subr.mxu0 0.0
    %507 = vmatpush1.msra.mxu0 0.0
    %508 = vmatprep.subr.mxu0 0.0
    %509 = vmatpush1.msra.mxu0 0.0
    %510 = vmatprep.subr.mxu0 0.0
    %511 = vmatpush1.msra.mxu0 0.0
    %512 = vmatprep.subr.mxu0 0.0
    %513 = vmatpush1.msra.mxu0 0.0
    %514 = vmatprep.mubr.f32.mxu0 0.0
    %515 = vmatmul.mubr.f32.gmra.mrb[0].mxu0 %v358
    %v516 = vpop.f32.mrb[0].mxu0
    %v517 = vadd.f32 0.0, %v516
    %v518 = vpop.f32.mrb[0].mxu0
    %v519 = vadd.f32 0.0, %v518
    %520 = vmatprep.mubr.f32.mxu0 0.0
    %521 = vmatmul.mubr.f32.gmra.mrb[0].mxu0 %v361
    %v522 = vpop.f32.mrb[0].mxu0
    %v523 = vadd.f32 0.0, %v522
    %v524 = vpop.f32.mrb[0].mxu0
    %v525 = vadd.f32 0.0, %v524
    %526 = vdwg.mxu0
    %527 = vmatprep.subr.mxu0 0.0
    %528 = vmatpush1.msra.mxu0 %v371
    %529 = vmatprep.subr.mxu0 0.0
    %530 = vmatpush1.msra.mxu0 0.0
    %531 = vmatprep.subr.mxu0 0.0
    %532 = vmatpush1.msra.mxu0 0.0
    %533 = vmatprep.subr.mxu0 0.0
    %534 = vmatpush1.msra.mxu0 0.0
    %535 = vmatprep.subr.mxu0 0.0
    %536 = vmatpush1.msra.mxu0 0.0
    %537 = vmatprep.subr.mxu0 0.0
    %538 = vmatpush1.msra.mxu0 0.0
    %539 = vmatprep.subr.mxu0 0.0
    %540 = vmatpush1.msra.mxu0 0.0
    %541 = vmatprep.subr.mxu0 0.0
    %542 = vmatpush1.msra.mxu0 0.0
    %543 = vmatprep.subr.mxu0 0.0
    %544 = vmatpush1.msra.mxu0 0.0
    %545 = vmatprep.subr.mxu0 0.0
    %546 = vmatpush1.msra.mxu0 0.0
    %547 = vmatprep.subr.mxu0 0.0
    %548 = vmatpush1.msra.mxu0 0.0
    %549 = vmatprep.subr.mxu0 0.0
    %550 = vmatpush1.msra.mxu0 0.0
    %551 = vmatprep.subr.mxu0 0.0
    %552 = vmatpush1.msra.mxu0 0.0
    %553 = vmatprep.subr.mxu0 0.0
    %554 = vmatpush1.msra.mxu0 0.0
    %555 = vmatprep.subr.mxu0 0.0
    %556 = vmatpush1.msra.mxu0 0.0
    %557 = vmatprep.subr.mxu0 0.0
    %558 = vmatpush1.msra.mxu0 0.0
    %559 = vmatprep.subr.mxu0 0.0
    %560 = vmatpush1.msra.mxu0 0.0
    %561 = vmatprep.subr.mxu0 0.0
    %562 = vmatpush1.msra.mxu0 0.0
    %563 = vmatprep.subr.mxu0 0.0
    %564 = vmatpush1.msra.mxu0 0.0
    %565 = vmatprep.subr.mxu0 0.0
    %566 = vmatpush1.msra.mxu0 0.0
    %567 = vmatprep.subr.mxu0 0.0
    %568 = vmatpush1.msra.mxu0 0.0
    %569 = vmatprep.subr.mxu0 0.0
    %570 = vmatpush1.msra.mxu0 0.0
    %571 = vmatprep.subr.mxu0 0.0
    %572 = vmatpush1.msra.mxu0 0.0
    %573 = vmatprep.subr.mxu0 0.0
    %574 = vmatpush1.msra.mxu0 0.0
    %575 = vmatprep.subr.mxu0 0.0
    %576 = vmatpush1.msra.mxu0 0.0
    %577 = vmatprep.subr.mxu0 0.0
    %578 = vmatpush1.msra.mxu0 0.0
    %579 = vmatprep.subr.mxu0 0.0
    %580 = vmatpush1.msra.mxu0 0.0
    %581 = vmatprep.subr.mxu0 0.0
    %582 = vmatpush1.msra.mxu0 0.0
    %583 = vmatprep.subr.mxu0 0.0
    %584 = vmatpush1.msra.mxu0 0.0
    %585 = vmatprep.subr.mxu0 0.0
    %586 = vmatpush1.msra.mxu0 0.0
    %587 = vmatprep.subr.mxu0 0.0
    %588 = vmatpush1.msra.mxu0 0.0
    %589 = vmatprep.subr.mxu0 0.0
    %590 = vmatpush1.msra.mxu0 0.0
    %591 = vmatprep.mubr.f32.mxu0 0.0
    %592 = vmatmul.mubr.f32.gmra.mrb[0].mxu0 %v358
    %v593 = vpop.f32.mrb[0].mxu0
    %v594 = vadd.f32 0.0, %v593
    %v595 = vpop.f32.mrb[0].mxu0
    %596 = vmatprep.mubr.f32.mxu0 0.0
    %597 = vmatmul.mubr.f32.gmra.mrb[0].mxu0 %v361
    %v598 = vpop.f32.mrb[0].mxu0
    %v599 = vadd.f32 0.0, %v598
    %v600 = vpop.f32.mrb[0].mxu0
    %601 = vdwg.mxu0
    %v602 = vadd.f32 %v325, %v440
    %v603 = vadd.f32 %v326, %v442
    %v604 = vadd.f32 %v327, %v517
    %v605 = vadd.f32 %v328, %v519
    %v606 = vadd.f32 %v329, %v594
    %v607 = vadd.f32 %v330, %v446
    %v608 = vadd.f32 %v331, %v448
    %v609 = vadd.f32 %v332, %v523
    %v610 = vadd.f32 %v333, %v525
    %v611 = vadd.f32 %v334, %v599
    %s612 = scalar_lea.vmem %s1, 32
    %v613 = vld [vmem:[%s612] sm:$0xff]
    %v614 = vld [vmem:[%s612 + $0x8] sm:$0xf]
    %615 = vrot.lane.b32.xlu0 %v53, 126
    %v616 = vpop.permute.xlu0 %615
    %617 = vrot.lane.b32.xlu0 %v54, 126
    %v618 = vpop.permute.xlu0 %617
    %619 = vrot.lane.b32.xlu0 %v55, 126
    %v620 = vpop.permute.xlu0 %619
    %621 = vrot.lane.b32.xlu0 %v56, 126
    %v622 = vpop.permute.xlu0 %621
    %623 = vrot.lane.b32.xlu0 %v57, 126
    %v624 = vpop.permute.xlu0 %623
    %625 = vrot.lane.b32.xlu0 %v58, 126
    %v626 = vpop.permute.xlu0 %625
    %vm627 = vcmask 1031168
    %v628 = vsel %vm627, %v616, %v618
    %v629 = vsel %vm627, %v618, %v620
    %v630 = vsel %vm627, %v620, %v622
    %v631 = vsel %vm627, %v622, %v624
    %v632 = vsel %vm627, %v624, %v626
    %v634 = vsel %vm73, %v613, 0
    %v637 = vsel %vm73, %v614, 0
    %v639 = vsel %vm80, %v628, 0
    %v641 = vsel %vm80, %v629, 0
    %v643 = vsel %vm80, %v630, 0
    %v645 = vsel %vm80, %v631, 0
    %v647 = vsel %vm80, %v632, 0
    %649 = vmatprep.subr.mxu0 %v641
    %650 = vmatpush1.msra.mxu0 %v639
    %651 = vmatprep.subr.mxu0 0.0
    %652 = vmatpush1.msra.mxu0 0.0
    %653 = vmatprep.subr.mxu0 0.0
    %654 = vmatpush1.msra.mxu0 0.0
    %655 = vmatprep.subr.mxu0 0.0
    %656 = vmatpush1.msra.mxu0 0.0
    %657 = vmatprep.subr.mxu0 0.0
    %658 = vmatpush1.msra.mxu0 0.0
    %659 = vmatprep.subr.mxu0 0.0
    %660 = vmatpush1.msra.mxu0 0.0
    %661 = vmatprep.subr.mxu0 0.0
    %662 = vmatpush1.msra.mxu0 0.0
    %663 = vmatprep.subr.mxu0 0.0
    %664 = vmatpush1.msra.mxu0 0.0
    %665 = vmatprep.subr.mxu0 0.0
    %666 = vmatpush1.msra.mxu0 0.0
    %667 = vmatprep.subr.mxu0 0.0
    %668 = vmatpush1.msra.mxu0 0.0
    %669 = vmatprep.subr.mxu0 0.0
    %670 = vmatpush1.msra.mxu0 0.0
    %671 = vmatprep.subr.mxu0 0.0
    %672 = vmatpush1.msra.mxu0 0.0
    %673 = vmatprep.subr.mxu0 0.0
    %674 = vmatpush1.msra.mxu0 0.0
    %675 = vmatprep.subr.mxu0 0.0
    %676 = vmatpush1.msra.mxu0 0.0
    %677 = vmatprep.subr.mxu0 0.0
    %678 = vmatpush1.msra.mxu0 0.0
    %679 = vmatprep.subr.mxu0 0.0
    %680 = vmatpush1.msra.mxu0 0.0
    %681 = vmatprep.subr.mxu0 0.0
    %682 = vmatpush1.msra.mxu0 0.0
    %683 = vmatprep.subr.mxu0 0.0
    %684 = vmatpush1.msra.mxu0 0.0
    %685 = vmatprep.subr.mxu0 0.0
    %686 = vmatpush1.msra.mxu0 0.0
    %687 = vmatprep.subr.mxu0 0.0
    %688 = vmatpush1.msra.mxu0 0.0
    %689 = vmatprep.subr.mxu0 0.0
    %690 = vmatpush1.msra.mxu0 0.0
    %691 = vmatprep.subr.mxu0 0.0
    %692 = vmatpush1.msra.mxu0 0.0
    %693 = vmatprep.subr.mxu0 0.0
    %694 = vmatpush1.msra.mxu0 0.0
    %695 = vmatprep.subr.mxu0 0.0
    %696 = vmatpush1.msra.mxu0 0.0
    %697 = vmatprep.subr.mxu0 0.0
    %698 = vmatpush1.msra.mxu0 0.0
    %699 = vmatprep.subr.mxu0 0.0
    %700 = vmatpush1.msra.mxu0 0.0
    %701 = vmatprep.subr.mxu0 0.0
    %702 = vmatpush1.msra.mxu0 0.0
    %703 = vmatprep.subr.mxu0 0.0
    %704 = vmatpush1.msra.mxu0 0.0
    %705 = vmatprep.subr.mxu0 0.0
    %706 = vmatpush1.msra.mxu0 0.0
    %707 = vmatprep.subr.mxu0 0.0
    %708 = vmatpush1.msra.mxu0 0.0
    %709 = vmatprep.subr.mxu0 0.0
    %710 = vmatpush1.msra.mxu0 0.0
    %711 = vmatprep.subr.mxu0 0.0
    %712 = vmatpush1.msra.mxu0 0.0
    %713 = vmatprep.mubr.f32.mxu0 0.0
    %714 = vmatmul.mubr.f32.gmra.mrb[0].mxu0 %v634
    %v715 = vpop.f32.mrb[0].mxu0
    %v716 = vadd.f32 0.0, %v715
    %v717 = vpop.f32.mrb[0].mxu0
    %v718 = vadd.f32 0.0, %v717
    %719 = vmatprep.mubr.f32.mxu0 0.0
    %720 = vmatmul.mubr.f32.gmra.mrb[0].mxu0 %v637
    %v721 = vpop.f32.mrb[0].mxu0
    %v722 = vadd.f32 0.0, %v721
    %v723 = vpop.f32.mrb[0].mxu0
    %v724 = vadd.f32 0.0, %v723
    %725 = vdwg.mxu0
    %726 = vmatprep.subr.mxu0 %v645
    %727 = vmatpush1.msra.mxu0 %v643
    %728 = vmatprep.subr.mxu0 0.0
    %729 = vmatpush1.msra.mxu0 0.0
    %730 = vmatprep.subr.mxu0 0.0
    %731 = vmatpush1.msra.mxu0 0.0
    %732 = vmatprep.subr.mxu0 0.0
    %733 = vmatpush1.msra.mxu0 0.0
    %734 = vmatprep.subr.mxu0 0.0
    %735 = vmatpush1.msra.mxu0 0.0
    %736 = vmatprep.subr.mxu0 0.0
    %737 = vmatpush1.msra.mxu0 0.0
    %738 = vmatprep.subr.mxu0 0.0
    %739 = vmatpush1.msra.mxu0 0.0
    %740 = vmatprep.subr.mxu0 0.0
    %741 = vmatpush1.msra.mxu0 0.0
    %742 = vmatprep.subr.mxu0 0.0
    %743 = vmatpush1.msra.mxu0 0.0
    %744 = vmatprep.subr.mxu0 0.0
    %745 = vmatpush1.msra.mxu0 0.0
    %746 = vmatprep.subr.mxu0 0.0
    %747 = vmatpush1.msra.mxu0 0.0
    %748 = vmatprep.subr.mxu0 0.0
    %749 = vmatpush1.msra.mxu0 0.0
    %750 = vmatprep.subr.mxu0 0.0
    %751 = vmatpush1.msra.mxu0 0.0
    %752 = vmatprep.subr.mxu0 0.0
    %753 = vmatpush1.msra.mxu0 0.0
    %754 = vmatprep.subr.mxu0 0.0
    %755 = vmatpush1.msra.mxu0 0.0
    %756 = vmatprep.subr.mxu0 0.0
    %757 = vmatpush1.msra.mxu0 0.0
    %758 = vmatprep.subr.mxu0 0.0
    %759 = vmatpush1.msra.mxu0 0.0
    %760 = vmatprep.subr.mxu0 0.0
    %761 = vmatpush1.msra.mxu0 0.0
    %762 = vmatprep.subr.mxu0 0.0
    %763 = vmatpush1.msra.mxu0 0.0
    %764 = vmatprep.subr.mxu0 0.0
    %765 = vmatpush1.msra.mxu0 0.0
    %766 = vmatprep.subr.mxu0 0.0
    %767 = vmatpush1.msra.mxu0 0.0
    %768 = vmatprep.subr.mxu0 0.0
    %769 = vmatpush1.msra.mxu0 0.0
    %770 = vmatprep.subr.mxu0 0.0
    %771 = vmatpush1.msra.mxu0 0.0
    %772 = vmatprep.subr.mxu0 0.0
    %773 = vmatpush1.msra.mxu0 0.0
    %774 = vmatprep.subr.mxu0 0.0
    %775 = vmatpush1.msra.mxu0 0.0
    %776 = vmatprep.subr.mxu0 0.0
    %777 = vmatpush1.msra.mxu0 0.0
    %778 = vmatprep.subr.mxu0 0.0
    %779 = vmatpush1.msra.mxu0 0.0
    %780 = vmatprep.subr.mxu0 0.0
    %781 = vmatpush1.msra.mxu0 0.0
    %782 = vmatprep.subr.mxu0 0.0
    %783 = vmatpush1.msra.mxu0 0.0
    %784 = vmatprep.subr.mxu0 0.0
    %785 = vmatpush1.msra.mxu0 0.0
    %786 = vmatprep.subr.mxu0 0.0
    %787 = vmatpush1.msra.mxu0 0.0
    %788 = vmatprep.subr.mxu0 0.0
    %789 = vmatpush1.msra.mxu0 0.0
    %790 = vmatprep.mubr.f32.mxu0 0.0
    %791 = vmatmul.mubr.f32.gmra.mrb[0].mxu0 %v634
    %v792 = vpop.f32.mrb[0].mxu0
    %v793 = vadd.f32 0.0, %v792
    %v794 = vpop.f32.mrb[0].mxu0
    %v795 = vadd.f32 0.0, %v794
    %796 = vmatprep.mubr.f32.mxu0 0.0
    %797 = vmatmul.mubr.f32.gmra.mrb[0].mxu0 %v637
    %v798 = vpop.f32.mrb[0].mxu0
    %v799 = vadd.f32 0.0, %v798
    %v800 = vpop.f32.mrb[0].mxu0
    %v801 = vadd.f32 0.0, %v800
    %802 = vdwg.mxu0
    %803 = vmatprep.subr.mxu0 0.0
    %804 = vmatpush1.msra.mxu0 %v647
    %805 = vmatprep.subr.mxu0 0.0
    %806 = vmatpush1.msra.mxu0 0.0
    %807 = vmatprep.subr.mxu0 0.0
    %808 = vmatpush1.msra.mxu0 0.0
    %809 = vmatprep.subr.mxu0 0.0
    %810 = vmatpush1.msra.mxu0 0.0
    %811 = vmatprep.subr.mxu0 0.0
    %812 = vmatpush1.msra.mxu0 0.0
    %813 = vmatprep.subr.mxu0 0.0
    %814 = vmatpush1.msra.mxu0 0.0
    %815 = vmatprep.subr.mxu0 0.0
    %816 = vmatpush1.msra.mxu0 0.0
    %817 = vmatprep.subr.mxu0 0.0
    %818 = vmatpush1.msra.mxu0 0.0
    %819 = vmatprep.subr.mxu0 0.0
    %820 = vmatpush1.msra.mxu0 0.0
    %821 = vmatprep.subr.mxu0 0.0
    %822 = vmatpush1.msra.mxu0 0.0
    %823 = vmatprep.subr.mxu0 0.0
    %824 = vmatpush1.msra.mxu0 0.0
    %825 = vmatprep.subr.mxu0 0.0
    %826 = vmatpush1.msra.mxu0 0.0
    %827 = vmatprep.subr.mxu0 0.0
    %828 = vmatpush1.msra.mxu0 0.0
    %829 = vmatprep.subr.mxu0 0.0
    %830 = vmatpush1.msra.mxu0 0.0
    %831 = vmatprep.subr.mxu0 0.0
    %832 = vmatpush1.msra.mxu0 0.0
    %833 = vmatprep.subr.mxu0 0.0
    %834 = vmatpush1.msra.mxu0 0.0
    %835 = vmatprep.subr.mxu0 0.0
    %836 = vmatpush1.msra.mxu0 0.0
    %837 = vmatprep.subr.mxu0 0.0
    %838 = vmatpush1.msra.mxu0 0.0
    %839 = vmatprep.subr.mxu0 0.0
    %840 = vmatpush1.msra.mxu0 0.0
    %841 = vmatprep.subr.mxu0 0.0
    %842 = vmatpush1.msra.mxu0 0.0
    %843 = vmatprep.subr.mxu0 0.0
    %844 = vmatpush1.msra.mxu0 0.0
    %845 = vmatprep.subr.mxu0 0.0
    %846 = vmatpush1.msra.mxu0 0.0
    %847 = vmatprep.subr.mxu0 0.0
    %848 = vmatpush1.msra.mxu0 0.0
    %849 = vmatprep.subr.mxu0 0.0
    %850 = vmatpush1.msra.mxu0 0.0
    %851 = vmatprep.subr.mxu0 0.0
    %852 = vmatpush1.msra.mxu0 0.0
    %853 = vmatprep.subr.mxu0 0.0
    %854 = vmatpush1.msra.mxu0 0.0
    %855 = vmatprep.subr.mxu0 0.0
    %856 = vmatpush1.msra.mxu0 0.0
    %857 = vmatprep.subr.mxu0 0.0
    %858 = vmatpush1.msra.mxu0 0.0
    %859 = vmatprep.subr.mxu0 0.0
    %860 = vmatpush1.msra.mxu0 0.0
    %861 = vmatprep.subr.mxu0 0.0
    %862 = vmatpush1.msra.mxu0 0.0
    %863 = vmatprep.subr.mxu0 0.0
    %864 = vmatpush1.msra.mxu0 0.0
    %865 = vmatprep.subr.mxu0 0.0
    %866 = vmatpush1.msra.mxu0 0.0
    %867 = vmatprep.mubr.f32.mxu0 0.0
    %868 = vmatmul.mubr.f32.gmra.mrb[0].mxu0 %v634
    %v869 = vpop.f32.mrb[0].mxu0
    %v870 = vadd.f32 0.0, %v869
    %v871 = vpop.f32.mrb[0].mxu0
    %872 = vmatprep.mubr.f32.mxu0 0.0
    %873 = vmatmul.mubr.f32.gmra.mrb[0].mxu0 %v637
    %v874 = vpop.f32.mrb[0].mxu0
    %v875 = vadd.f32 0.0, %v874
    %v876 = vpop.f32.mrb[0].mxu0
    %877 = vdwg.mxu0
    %v878 = vadd.f32 %v602, %v716
    %v879 = vadd.f32 %v603, %v718
    %v880 = vadd.f32 %v604, %v793
    %v881 = vadd.f32 %v605, %v795
    %v882 = vadd.f32 %v606, %v870
    %v883 = vadd.f32 %v607, %v722
    %v884 = vadd.f32 %v608, %v724
    %v885 = vadd.f32 %v609, %v799
    %v886 = vadd.f32 %v610, %v801
    %v887 = vadd.f32 %v611, %v875
    %s888 = scalar_lea.vmem %s1, 48
    %v889 = vld [vmem:[%s888] sm:$0xff]
    %v890 = vld [vmem:[%s888 + $0x8] sm:$0xf]
    %891 = vrot.lane.b32.xlu0 %v53, 106
    %v892 = vpop.permute.xlu0 %891
    %893 = vrot.lane.b32.xlu0 %v54, 106
    %v894 = vpop.permute.xlu0 %893
    %895 = vrot.lane.b32.xlu0 %v55, 106
    %v896 = vpop.permute.xlu0 %895
    %897 = vrot.lane.b32.xlu0 %v56, 106
    %v898 = vpop.permute.xlu0 %897
    %899 = vrot.lane.b32.xlu0 %v57, 106
    %v900 = vpop.permute.xlu0 %899
    %901 = vrot.lane.b32.xlu0 %v58, 106
    %v902 = vpop.permute.xlu0 %901
    %vm903 = vcmask 867328
    %v904 = vsel %vm903, %v892, %v894
    %v905 = vsel %vm903, %v894, %v896
    %v906 = vsel %vm903, %v896, %v898
    %v907 = vsel %vm903, %v898, %v900
    %v908 = vsel %vm903, %v900, %v902
    %v910 = vsel %vm73, %v889, 0
    %v913 = vsel %vm73, %v890, 0
    %v915 = vsel %vm80, %v904, 0
    %v917 = vsel %vm80, %v905, 0
    %v919 = vsel %vm80, %v906, 0
    %v921 = vsel %vm80, %v907, 0
    %v923 = vsel %vm80, %v908, 0
    %925 = vmatprep.subr.mxu0 %v917
    %926 = vmatpush1.msra.mxu0 %v915
    %927 = vmatprep.subr.mxu0 0.0
    %928 = vmatpush1.msra.mxu0 0.0
    %929 = vmatprep.subr.mxu0 0.0
    %930 = vmatpush1.msra.mxu0 0.0
    %931 = vmatprep.subr.mxu0 0.0
    %932 = vmatpush1.msra.mxu0 0.0
    %933 = vmatprep.subr.mxu0 0.0
    %934 = vmatpush1.msra.mxu0 0.0
    %935 = vmatprep.subr.mxu0 0.0
    %936 = vmatpush1.msra.mxu0 0.0
    %937 = vmatprep.subr.mxu0 0.0
    %938 = vmatpush1.msra.mxu0 0.0
    %939 = vmatprep.subr.mxu0 0.0
    %940 = vmatpush1.msra.mxu0 0.0
    %941 = vmatprep.subr.mxu0 0.0
    %942 = vmatpush1.msra.mxu0 0.0
    %943 = vmatprep.subr.mxu0 0.0
    %944 = vmatpush1.msra.mxu0 0.0
    %945 = vmatprep.subr.mxu0 0.0
    %946 = vmatpush1.msra.mxu0 0.0
    %947 = vmatprep.subr.mxu0 0.0
    %948 = vmatpush1.msra.mxu0 0.0
    %949 = vmatprep.subr.mxu0 0.0
    %950 = vmatpush1.msra.mxu0 0.0
    %951 = vmatprep.subr.mxu0 0.0
    %952 = vmatpush1.msra.mxu0 0.0
    %953 = vmatprep.subr.mxu0 0.0
    %954 = vmatpush1.msra.mxu0 0.0
    %955 = vmatprep.subr.mxu0 0.0
    %956 = vmatpush1.msra.mxu0 0.0
    %957 = vmatprep.subr.mxu0 0.0
    %958 = vmatpush1.msra.mxu0 0.0
    %959 = vmatprep.subr.mxu0 0.0
    %960 = vmatpush1.msra.mxu0 0.0
    %961 = vmatprep.subr.mxu0 0.0
    %962 = vmatpush1.msra.mxu0 0.0
    %963 = vmatprep.subr.mxu0 0.0
    %964 = vmatpush1.msra.mxu0 0.0
    %965 = vmatprep.subr.mxu0 0.0
    %966 = vmatpush1.msra.mxu0 0.0
    %967 = vmatprep.subr.mxu0 0.0
    %968 = vmatpush1.msra.mxu0 0.0
    %969 = vmatprep.subr.mxu0 0.0
    %970 = vmatpush1.msra.mxu0 0.0
    %971 = vmatprep.subr.mxu0 0.0
    %972 = vmatpush1.msra.mxu0 0.0
    %973 = vmatprep.subr.mxu0 0.0
    %974 = vmatpush1.msra.mxu0 0.0
    %975 = vmatprep.subr.mxu0 0.0
    %976 = vmatpush1.msra.mxu0 0.0
    %977 = vmatprep.subr.mxu0 0.0
    %978 = vmatpush1.msra.mxu0 0.0
    %979 = vmatprep.subr.mxu0 0.0
    %980 = vmatpush1.msra.mxu0 0.0
    %981 = vmatprep.subr.mxu0 0.0
    %982 = vmatpush1.msra.mxu0 0.0
    %983 = vmatprep.subr.mxu0 0.0
    %984 = vmatpush1.msra.mxu0 0.0
    %985 = vmatprep.subr.mxu0 0.0
    %986 = vmatpush1.msra.mxu0 0.0
    %987 = vmatprep.subr.mxu0 0.0
    %988 = vmatpush1.msra.mxu0 0.0
    %989 = vmatprep.mubr.f32.mxu0 0.0
    %990 = vmatmul.mubr.f32.gmra.mrb[0].mxu0 %v910
    %v991 = vpop.f32.mrb[0].mxu0
    %v992 = vadd.f32 0.0, %v991
    %v993 = vpop.f32.mrb[0].mxu0
    %v994 = vadd.f32 0.0, %v993
    %995 = vmatprep.mubr.f32.mxu0 0.0
    %996 = vmatmul.mubr.f32.gmra.mrb[0].mxu0 %v913
    %v997 = vpop.f32.mrb[0].mxu0
    %v998 = vadd.f32 0.0, %v997
    %v999 = vpop.f32.mrb[0].mxu0
    %v1000 = vadd.f32 0.0, %v999
    %1001 = vdwg.mxu0
    %1002 = vmatprep.subr.mxu0 %v921
    %1003 = vmatpush1.msra.mxu0 %v919
    %1004 = vmatprep.subr.mxu0 0.0
    %1005 = vmatpush1.msra.mxu0 0.0
    %1006 = vmatprep.subr.mxu0 0.0
    %1007 = vmatpush1.msra.mxu0 0.0
    %1008 = vmatprep.subr.mxu0 0.0
    %1009 = vmatpush1.msra.mxu0 0.0
    %1010 = vmatprep.subr.mxu0 0.0
    %1011 = vmatpush1.msra.mxu0 0.0
    %1012 = vmatprep.subr.mxu0 0.0
    %1013 = vmatpush1.msra.mxu0 0.0
    %1014 = vmatprep.subr.mxu0 0.0
    %1015 = vmatpush1.msra.mxu0 0.0
    %1016 = vmatprep.subr.mxu0 0.0
    %1017 = vmatpush1.msra.mxu0 0.0
    %1018 = vmatprep.subr.mxu0 0.0
    %1019 = vmatpush1.msra.mxu0 0.0
    %1020 = vmatprep.subr.mxu0 0.0
    %1021 = vmatpush1.msra.mxu0 0.0
    %1022 = vmatprep.subr.mxu0 0.0
    %1023 = vmatpush1.msra.mxu0 0.0
    %1024 = vmatprep.subr.mxu0 0.0
    %1025 = vmatpush1.msra.mxu0 0.0
    %1026 = vmatprep.subr.mxu0 0.0
    %1027 = vmatpush1.msra.mxu0 0.0
    %1028 = vmatprep.subr.mxu0 0.0
    %1029 = vmatpush1.msra.mxu0 0.0
    %1030 = vmatprep.subr.mxu0 0.0
    %1031 = vmatpush1.msra.mxu0 0.0
    %1032 = vmatprep.subr.mxu0 0.0
    %1033 = vmatpush1.msra.mxu0 0.0
    %1034 = vmatprep.subr.mxu0 0.0
    %1035 = vmatpush1.msra.mxu0 0.0
    %1036 = vmatprep.subr.mxu0 0.0
    %1037 = vmatpush1.msra.mxu0 0.0
    %1038 = vmatprep.subr.mxu0 0.0
    %1039 = vmatpush1.msra.mxu0 0.0
    %1040 = vmatprep.subr.mxu0 0.0
    %1041 = vmatpush1.msra.mxu0 0.0
    %1042 = vmatprep.subr.mxu0 0.0
    %1043 = vmatpush1.msra.mxu0 0.0
    %1044 = vmatprep.subr.mxu0 0.0
    %1045 = vmatpush1.msra.mxu0 0.0
    %1046 = vmatprep.subr.mxu0 0.0
    %1047 = vmatpush1.msra.mxu0 0.0
    %1048 = vmatprep.subr.mxu0 0.0
    %1049 = vmatpush1.msra.mxu0 0.0
    %1050 = vmatprep.subr.mxu0 0.0
    %1051 = vmatpush1.msra.mxu0 0.0
    %1052 = vmatprep.subr.mxu0 0.0
    %1053 = vmatpush1.msra.mxu0 0.0
    %1054 = vmatprep.subr.mxu0 0.0
    %1055 = vmatpush1.msra.mxu0 0.0
    %1056 = vmatprep.subr.mxu0 0.0
    %1057 = vmatpush1.msra.mxu0 0.0
    %1058 = vmatprep.subr.mxu0 0.0
    %1059 = vmatpush1.msra.mxu0 0.0
    %1060 = vmatprep.subr.mxu0 0.0
    %1061 = vmatpush1.msra.mxu0 0.0
    %1062 = vmatprep.subr.mxu0 0.0
    %1063 = vmatpush1.msra.mxu0 0.0
    %1064 = vmatprep.subr.mxu0 0.0
    %1065 = vmatpush1.msra.mxu0 0.0
    %1066 = vmatprep.mubr.f32.mxu0 0.0
    %1067 = vmatmul.mubr.f32.gmra.mrb[0].mxu0 %v910
    %v1068 = vpop.f32.mrb[0].mxu0
    %v1069 = vadd.f32 0.0, %v1068
    %v1070 = vpop.f32.mrb[0].mxu0
    %v1071 = vadd.f32 0.0, %v1070
    %1072 = vmatprep.mubr.f32.mxu0 0.0
    %1073 = vmatmul.mubr.f32.gmra.mrb[0].mxu0 %v913
    %v1074 = vpop.f32.mrb[0].mxu0
    %v1075 = vadd.f32 0.0, %v1074
    %v1076 = vpop.f32.mrb[0].mxu0
    %v1077 = vadd.f32 0.0, %v1076
    %1078 = vdwg.mxu0
    %1079 = vmatprep.subr.mxu0 0.0
    %1080 = vmatpush1.msra.mxu0 %v923
    %1081 = vmatprep.subr.mxu0 0.0
    %1082 = vmatpush1.msra.mxu0 0.0
    %1083 = vmatprep.subr.mxu0 0.0
    %1084 = vmatpush1.msra.mxu0 0.0
    %1085 = vmatprep.subr.mxu0 0.0
    %1086 = vmatpush1.msra.mxu0 0.0
    %1087 = vmatprep.subr.mxu0 0.0
    %1088 = vmatpush1.msra.mxu0 0.0
    %1089 = vmatprep.subr.mxu0 0.0
    %1090 = vmatpush1.msra.mxu0 0.0
    %1091 = vmatprep.subr.mxu0 0.0
    %1092 = vmatpush1.msra.mxu0 0.0
    %1093 = vmatprep.subr.mxu0 0.0
    %1094 = vmatpush1.msra.mxu0 0.0
    %1095 = vmatprep.subr.mxu0 0.0
    %1096 = vmatpush1.msra.mxu0 0.0
    %1097 = vmatprep.subr.mxu0 0.0
    %1098 = vmatpush1.msra.mxu0 0.0
    %1099 = vmatprep.subr.mxu0 0.0
    %1100 = vmatpush1.msra.mxu0 0.0
    %1101 = vmatprep.subr.mxu0 0.0
    %1102 = vmatpush1.msra.mxu0 0.0
    %1103 = vmatprep.subr.mxu0 0.0
    %1104 = vmatpush1.msra.mxu0 0.0
    %1105 = vmatprep.subr.mxu0 0.0
    %1106 = vmatpush1.msra.mxu0 0.0
    %1107 = vmatprep.subr.mxu0 0.0
    %1108 = vmatpush1.msra.mxu0 0.0
    %1109 = vmatprep.subr.mxu0 0.0
    %1110 = vmatpush1.msra.mxu0 0.0
    %1111 = vmatprep.subr.mxu0 0.0
    %1112 = vmatpush1.msra.mxu0 0.0
    %1113 = vmatprep.subr.mxu0 0.0
    %1114 = vmatpush1.msra.mxu0 0.0
    %1115 = vmatprep.subr.mxu0 0.0
    %1116 = vmatpush1.msra.mxu0 0.0
    %1117 = vmatprep.subr.mxu0 0.0
    %1118 = vmatpush1.msra.mxu0 0.0
    %1119 = vmatprep.subr.mxu0 0.0
    %1120 = vmatpush1.msra.mxu0 0.0
    %1121 = vmatprep.subr.mxu0 0.0
    %1122 = vmatpush1.msra.mxu0 0.0
    %1123 = vmatprep.subr.mxu0 0.0
    %1124 = vmatpush1.msra.mxu0 0.0
    %1125 = vmatprep.subr.mxu0 0.0
    %1126 = vmatpush1.msra.mxu0 0.0
    %1127 = vmatprep.subr.mxu0 0.0
    %1128 = vmatpush1.msra.mxu0 0.0
    %1129 = vmatprep.subr.mxu0 0.0
    %1130 = vmatpush1.msra.mxu0 0.0
    %1131 = vmatprep.subr.mxu0 0.0
    %1132 = vmatpush1.msra.mxu0 0.0
    %1133 = vmatprep.subr.mxu0 0.0
    %1134 = vmatpush1.msra.mxu0 0.0
    %1135 = vmatprep.subr.mxu0 0.0
    %1136 = vmatpush1.msra.mxu0 0.0
    %1137 = vmatprep.subr.mxu0 0.0
    %1138 = vmatpush1.msra.mxu0 0.0
    %1139 = vmatprep.subr.mxu0 0.0
    %1140 = vmatpush1.msra.mxu0 0.0
    %1141 = vmatprep.subr.mxu0 0.0
    %1142 = vmatpush1.msra.mxu0 0.0
    %1143 = vmatprep.mubr.f32.mxu0 0.0
    %1144 = vmatmul.mubr.f32.gmra.mrb[0].mxu0 %v910
    %v1145 = vpop.f32.mrb[0].mxu0
    %v1146 = vadd.f32 0.0, %v1145
    %v1147 = vpop.f32.mrb[0].mxu0
    %1148 = vmatprep.mubr.f32.mxu0 0.0
    %1149 = vmatmul.mubr.f32.gmra.mrb[0].mxu0 %v913
    %v1150 = vpop.f32.mrb[0].mxu0
    %v1151 = vadd.f32 0.0, %v1150
    %v1152 = vpop.f32.mrb[0].mxu0
    %1153 = vdwg.mxu0
    %v1154 = vadd.f32 %v878, %v992
    %v1155 = vadd.f32 %v879, %v994
    %v1156 = vadd.f32 %v880, %v1069
    %v1157 = vadd.f32 %v881, %v1071
    %v1158 = vadd.f32 %v882, %v1146
    %v1159 = vadd.f32 %v883, %v998
    %v1160 = vadd.f32 %v884, %v1000
    %v1161 = vadd.f32 %v885, %v1075
    %v1162 = vadd.f32 %v886, %v1077
    %v1163 = vadd.f32 %v887, %v1151
    %s1164 = scalar_lea.vmem %s1, 64
    %v1165 = vld [vmem:[%s1164] sm:$0xff]
    %v1166 = vld [vmem:[%s1164 + $0x8] sm:$0xf]
    %1167 = vrot.lane.b32.xlu0 %v53, 105
    %v1168 = vpop.permute.xlu0 %1167
    %1169 = vrot.lane.b32.xlu0 %v54, 105
    %v1170 = vpop.permute.xlu0 %1169
    %1171 = vrot.lane.b32.xlu0 %v55, 105
    %v1172 = vpop.permute.xlu0 %1171
    %1173 = vrot.lane.b32.xlu0 %v56, 105
    %v1174 = vpop.permute.xlu0 %1173
    %1175 = vrot.lane.b32.xlu0 %v57, 105
    %v1176 = vpop.permute.xlu0 %1175
    %1177 = vrot.lane.b32.xlu0 %v58, 105
    %v1178 = vpop.permute.xlu0 %1177
    %vm1179 = vcmask 859136
    %v1180 = vsel %vm1179, %v1168, %v1170
    %v1181 = vsel %vm1179, %v1170, %v1172
    %v1182 = vsel %vm1179, %v1172, %v1174
    %v1183 = vsel %vm1179, %v1174, %v1176
    %v1184 = vsel %vm1179, %v1176, %v1178
    %v1186 = vsel %vm73, %v1165, 0
    %v1189 = vsel %vm73, %v1166, 0
    %v1191 = vsel %vm80, %v1180, 0
    %v1193 = vsel %vm80, %v1181, 0
    %v1195 = vsel %vm80, %v1182, 0
    %v1197 = vsel %vm80, %v1183, 0
    %v1199 = vsel %vm80, %v1184, 0
    %1201 = vmatprep.subr.mxu0 %v1193
    %1202 = vmatpush1.msra.mxu0 %v1191
    %1203 = vmatprep.subr.mxu0 0.0
    %1204 = vmatpush1.msra.mxu0 0.0
    %1205 = vmatprep.subr.mxu0 0.0
    %1206 = vmatpush1.msra.mxu0 0.0
    %1207 = vmatprep.subr.mxu0 0.0
    %1208 = vmatpush1.msra.mxu0 0.0
    %1209 = vmatprep.subr.mxu0 0.0
    %1210 = vmatpush1.msra.mxu0 0.0
    %1211 = vmatprep.subr.mxu0 0.0
    %1212 = vmatpush1.msra.mxu0 0.0
    %1213 = vmatprep.subr.mxu0 0.0
    %1214 = vmatpush1.msra.mxu0 0.0
    %1215 = vmatprep.subr.mxu0 0.0
    %1216 = vmatpush1.msra.mxu0 0.0
    %1217 = vmatprep.subr.mxu0 0.0
    %1218 = vmatpush1.msra.mxu0 0.0
    %1219 = vmatprep.subr.mxu0 0.0
    %1220 = vmatpush1.msra.mxu0 0.0
    %1221 = vmatprep.subr.mxu0 0.0
    %1222 = vmatpush1.msra.mxu0 0.0
    %1223 = vmatprep.subr.mxu0 0.0
    %1224 = vmatpush1.msra.mxu0 0.0
    %1225 = vmatprep.subr.mxu0 0.0
    %1226 = vmatpush1.msra.mxu0 0.0
    %1227 = vmatprep.subr.mxu0 0.0
    %1228 = vmatpush1.msra.mxu0 0.0
    %1229 = vmatprep.subr.mxu0 0.0
    %1230 = vmatpush1.msra.mxu0 0.0
    %1231 = vmatprep.subr.mxu0 0.0
    %1232 = vmatpush1.msra.mxu0 0.0
    %1233 = vmatprep.subr.mxu0 0.0
    %1234 = vmatpush1.msra.mxu0 0.0
    %1235 = vmatprep.subr.mxu0 0.0
    %1236 = vmatpush1.msra.mxu0 0.0
    %1237 = vmatprep.subr.mxu0 0.0
    %1238 = vmatpush1.msra.mxu0 0.0
    %1239 = vmatprep.subr.mxu0 0.0
    %1240 = vmatpush1.msra.mxu0 0.0
    %1241 = vmatprep.subr.mxu0 0.0
    %1242 = vmatpush1.msra.mxu0 0.0
    %1243 = vmatprep.subr.mxu0 0.0
    %1244 = vmatpush1.msra.mxu0 0.0
    %1245 = vmatprep.subr.mxu0 0.0
    %1246 = vmatpush1.msra.mxu0 0.0
    %1247 = vmatprep.subr.mxu0 0.0
    %1248 = vmatpush1.msra.mxu0 0.0
    %1249 = vmatprep.subr.mxu0 0.0
    %1250 = vmatpush1.msra.mxu0 0.0
    %1251 = vmatprep.subr.mxu0 0.0
    %1252 = vmatpush1.msra.mxu0 0.0
    %1253 = vmatprep.subr.mxu0 0.0
    %1254 = vmatpush1.msra.mxu0 0.0
    %1255 = vmatprep.subr.mxu0 0.0
    %1256 = vmatpush1.msra.mxu0 0.0
    %1257 = vmatprep.subr.mxu0 0.0
    %1258 = vmatpush1.msra.mxu0 0.0
    %1259 = vmatprep.subr.mxu0 0.0
    %1260 = vmatpush1.msra.mxu0 0.0
    %1261 = vmatprep.subr.mxu0 0.0
    %1262 = vmatpush1.msra.mxu0 0.0
    %1263 = vmatprep.subr.mxu0 0.0
    %1264 = vmatpush1.msra.mxu0 0.0
    %1265 = vmatprep.mubr.f32.mxu0 0.0
    %1266 = vmatmul.mubr.f32.gmra.mrb[0].mxu0 %v1186
    %v1267 = vpop.f32.mrb[0].mxu0
    %v1268 = vadd.f32 0.0, %v1267
    %v1269 = vpop.f32.mrb[0].mxu0
    %v1270 = vadd.f32 0.0, %v1269
    %1271 = vmatprep.mubr.f32.mxu0 0.0
    %1272 = vmatmul.mubr.f32.gmra.mrb[0].mxu0 %v1189
    %v1273 = vpop.f32.mrb[0].mxu0
    %v1274 = vadd.f32 0.0, %v1273
    %v1275 = vpop.f32.mrb[0].mxu0
    %v1276 = vadd.f32 0.0, %v1275
    %1277 = vdwg.mxu0
    %1278 = vmatprep.subr.mxu0 %v1197
    %1279 = vmatpush1.msra.mxu0 %v1195
    %1280 = vmatprep.subr.mxu0 0.0
    %1281 = vmatpush1.msra.mxu0 0.0
    %1282 = vmatprep.subr.mxu0 0.0
    %1283 = vmatpush1.msra.mxu0 0.0
    %1284 = vmatprep.subr.mxu0 0.0
    %1285 = vmatpush1.msra.mxu0 0.0
    %1286 = vmatprep.subr.mxu0 0.0
    %1287 = vmatpush1.msra.mxu0 0.0
    %1288 = vmatprep.subr.mxu0 0.0
    %1289 = vmatpush1.msra.mxu0 0.0
    %1290 = vmatprep.subr.mxu0 0.0
    %1291 = vmatpush1.msra.mxu0 0.0
    %1292 = vmatprep.subr.mxu0 0.0
    %1293 = vmatpush1.msra.mxu0 0.0
    %1294 = vmatprep.subr.mxu0 0.0
    %1295 = vmatpush1.msra.mxu0 0.0
    %1296 = vmatprep.subr.mxu0 0.0
    %1297 = vmatpush1.msra.mxu0 0.0
    %1298 = vmatprep.subr.mxu0 0.0
    %1299 = vmatpush1.msra.mxu0 0.0
    %1300 = vmatprep.subr.mxu0 0.0
    %1301 = vmatpush1.msra.mxu0 0.0
    %1302 = vmatprep.subr.mxu0 0.0
    %1303 = vmatpush1.msra.mxu0 0.0
    %1304 = vmatprep.subr.mxu0 0.0
    %1305 = vmatpush1.msra.mxu0 0.0
    %1306 = vmatprep.subr.mxu0 0.0
    %1307 = vmatpush1.msra.mxu0 0.0
    %1308 = vmatprep.subr.mxu0 0.0
    %1309 = vmatpush1.msra.mxu0 0.0
    %1310 = vmatprep.subr.mxu0 0.0
    %1311 = vmatpush1.msra.mxu0 0.0
    %1312 = vmatprep.subr.mxu0 0.0
    %1313 = vmatpush1.msra.mxu0 0.0
    %1314 = vmatprep.subr.mxu0 0.0
    %1315 = vmatpush1.msra.mxu0 0.0
    %1316 = vmatprep.subr.mxu0 0.0
    %1317 = vmatpush1.msra.mxu0 0.0
    %1318 = vmatprep.subr.mxu0 0.0
    %1319 = vmatpush1.msra.mxu0 0.0
    %1320 = vmatprep.subr.mxu0 0.0
    %1321 = vmatpush1.msra.mxu0 0.0
    %1322 = vmatprep.subr.mxu0 0.0
    %1323 = vmatpush1.msra.mxu0 0.0
    %1324 = vmatprep.subr.mxu0 0.0
    %1325 = vmatpush1.msra.mxu0 0.0
    %1326 = vmatprep.subr.mxu0 0.0
    %1327 = vmatpush1.msra.mxu0 0.0
    %1328 = vmatprep.subr.mxu0 0.0
    %1329 = vmatpush1.msra.mxu0 0.0
    %1330 = vmatprep.subr.mxu0 0.0
    %1331 = vmatpush1.msra.mxu0 0.0
    %1332 = vmatprep.subr.mxu0 0.0
    %1333 = vmatpush1.msra.mxu0 0.0
    %1334 = vmatprep.subr.mxu0 0.0
    %1335 = vmatpush1.msra.mxu0 0.0
    %1336 = vmatprep.subr.mxu0 0.0
    %1337 = vmatpush1.msra.mxu0 0.0
    %1338 = vmatprep.subr.mxu0 0.0
    %1339 = vmatpush1.msra.mxu0 0.0
    %1340 = vmatprep.subr.mxu0 0.0
    %1341 = vmatpush1.msra.mxu0 0.0
    %1342 = vmatprep.mubr.f32.mxu0 0.0
    %1343 = vmatmul.mubr.f32.gmra.mrb[0].mxu0 %v1186
    %v1344 = vpop.f32.mrb[0].mxu0
    %v1345 = vadd.f32 0.0, %v1344
    %v1346 = vpop.f32.mrb[0].mxu0
    %v1347 = vadd.f32 0.0, %v1346
    %1348 = vmatprep.mubr.f32.mxu0 0.0
    %1349 = vmatmul.mubr.f32.gmra.mrb[0].mxu0 %v1189
    %v1350 = vpop.f32.mrb[0].mxu0
    %v1351 = vadd.f32 0.0, %v1350
    %v1352 = vpop.f32.mrb[0].mxu0
    %v1353 = vadd.f32 0.0, %v1352
    %1354 = vdwg.mxu0
    %1355 = vmatprep.subr.mxu0 0.0
    %1356 = vmatpush1.msra.mxu0 %v1199
    %1357 = vmatprep.subr.mxu0 0.0
    %1358 = vmatpush1.msra.mxu0 0.0
    %1359 = vmatprep.subr.mxu0 0.0
    %1360 = vmatpush1.msra.mxu0 0.0
    %1361 = vmatprep.subr.mxu0 0.0
    %1362 = vmatpush1.msra.mxu0 0.0
    %1363 = vmatprep.subr.mxu0 0.0
    %1364 = vmatpush1.msra.mxu0 0.0
    %1365 = vmatprep.subr.mxu0 0.0
    %1366 = vmatpush1.msra.mxu0 0.0
    %1367 = vmatprep.subr.mxu0 0.0
    %1368 = vmatpush1.msra.mxu0 0.0
    %1369 = vmatprep.subr.mxu0 0.0
    %1370 = vmatpush1.msra.mxu0 0.0
    %1371 = vmatprep.subr.mxu0 0.0
    %1372 = vmatpush1.msra.mxu0 0.0
    %1373 = vmatprep.subr.mxu0 0.0
    %1374 = vmatpush1.msra.mxu0 0.0
    %1375 = vmatprep.subr.mxu0 0.0
    %1376 = vmatpush1.msra.mxu0 0.0
    %1377 = vmatprep.subr.mxu0 0.0
    %1378 = vmatpush1.msra.mxu0 0.0
    %1379 = vmatprep.subr.mxu0 0.0
    %1380 = vmatpush1.msra.mxu0 0.0
    %1381 = vmatprep.subr.mxu0 0.0
    %1382 = vmatpush1.msra.mxu0 0.0
    %1383 = vmatprep.subr.mxu0 0.0
    %1384 = vmatpush1.msra.mxu0 0.0
    %1385 = vmatprep.subr.mxu0 0.0
    %1386 = vmatpush1.msra.mxu0 0.0
    %1387 = vmatprep.subr.mxu0 0.0
    %1388 = vmatpush1.msra.mxu0 0.0
    %1389 = vmatprep.subr.mxu0 0.0
    %1390 = vmatpush1.msra.mxu0 0.0
    %1391 = vmatprep.subr.mxu0 0.0
    %1392 = vmatpush1.msra.mxu0 0.0
    %1393 = vmatprep.subr.mxu0 0.0
    %1394 = vmatpush1.msra.mxu0 0.0
    %1395 = vmatprep.subr.mxu0 0.0
    %1396 = vmatpush1.msra.mxu0 0.0
    %1397 = vmatprep.subr.mxu0 0.0
    %1398 = vmatpush1.msra.mxu0 0.0
    %1399 = vmatprep.subr.mxu0 0.0
    %1400 = vmatpush1.msra.mxu0 0.0
    %1401 = vmatprep.subr.mxu0 0.0
    %1402 = vmatpush1.msra.mxu0 0.0
    %1403 = vmatprep.subr.mxu0 0.0
    %1404 = vmatpush1.msra.mxu0 0.0
    %1405 = vmatprep.subr.mxu0 0.0
    %1406 = vmatpush1.msra.mxu0 0.0
    %1407 = vmatprep.subr.mxu0 0.0
    %1408 = vmatpush1.msra.mxu0 0.0
    %1409 = vmatprep.subr.mxu0 0.0
    %1410 = vmatpush1.msra.mxu0 0.0
    %1411 = vmatprep.subr.mxu0 0.0
    %1412 = vmatpush1.msra.mxu0 0.0
    %1413 = vmatprep.subr.mxu0 0.0
    %1414 = vmatpush1.msra.mxu0 0.0
    %1415 = vmatprep.subr.mxu0 0.0
    %1416 = vmatpush1.msra.mxu0 0.0
    %1417 = vmatprep.subr.mxu0 0.0
    %1418 = vmatpush1.msra.mxu0 0.0
    %1419 = vmatprep.mubr.f32.mxu0 0.0
    %1420 = vmatmul.mubr.f32.gmra.mrb[0].mxu0 %v1186
    %v1421 = vpop.f32.mrb[0].mxu0
    %v1422 = vadd.f32 0.0, %v1421
    %v1423 = vpop.f32.mrb[0].mxu0
    %1424 = vmatprep.mubr.f32.mxu0 0.0
    %1425 = vmatmul.mubr.f32.gmra.mrb[0].mxu0 %v1189
    %v1426 = vpop.f32.mrb[0].mxu0
    %v1427 = vadd.f32 0.0, %v1426
    %v1428 = vpop.f32.mrb[0].mxu0
    %1429 = vdwg.mxu0
    %v1430 = vadd.f32 %v1154, %v1268
    %v1431 = vadd.f32 %v1155, %v1270
    %v1432 = vadd.f32 %v1156, %v1345
    %v1433 = vadd.f32 %v1157, %v1347
    %v1434 = vadd.f32 %v1158, %v1422
    %v1435 = vadd.f32 %v1159, %v1274
    %v1436 = vadd.f32 %v1160, %v1276
    %v1437 = vadd.f32 %v1161, %v1351
    %v1438 = vadd.f32 %v1162, %v1353
    %v1439 = vadd.f32 %v1163, %v1427
    %s1440 = scalar_lea.vmem %s1, 80
    %v1441 = vld [vmem:[%s1440] sm:$0xff]
    %v1442 = vld [vmem:[%s1440 + $0x8] sm:$0xf]
    %1443 = vrot.lane.b32.xlu0 %v53, 104
    %v1444 = vpop.permute.xlu0 %1443
    %1445 = vrot.lane.b32.xlu0 %v54, 104
    %v1446 = vpop.permute.xlu0 %1445
    %1447 = vrot.lane.b32.xlu0 %v55, 104
    %v1448 = vpop.permute.xlu0 %1447
    %1449 = vrot.lane.b32.xlu0 %v56, 104
    %v1450 = vpop.permute.xlu0 %1449
    %1451 = vrot.lane.b32.xlu0 %v57, 104
    %v1452 = vpop.permute.xlu0 %1451
    %1453 = vrot.lane.b32.xlu0 %v58, 104
    %v1454 = vpop.permute.xlu0 %1453
    %vm1455 = vcmask 850944
    %v1456 = vsel %vm1455, %v1444, %v1446
    %v1457 = vsel %vm1455, %v1446, %v1448
    %v1458 = vsel %vm1455, %v1448, %v1450
    %v1459 = vsel %vm1455, %v1450, %v1452
    %v1460 = vsel %vm1455, %v1452, %v1454
    %v1462 = vsel %vm73, %v1441, 0
    %v1465 = vsel %vm73, %v1442, 0
    %v1467 = vsel %vm80, %v1456, 0
    %v1469 = vsel %vm80, %v1457, 0
    %v1471 = vsel %vm80, %v1458, 0
    %v1473 = vsel %vm80, %v1459, 0
    %v1475 = vsel %vm80, %v1460, 0
    %1477 = vmatprep.subr.mxu0 %v1469
    %1478 = vmatpush1.msra.mxu0 %v1467
    %1479 = vmatprep.subr.mxu0 0.0
    %1480 = vmatpush1.msra.mxu0 0.0
    %1481 = vmatprep.subr.mxu0 0.0
    %1482 = vmatpush1.msra.mxu0 0.0
    %1483 = vmatprep.subr.mxu0 0.0
    %1484 = vmatpush1.msra.mxu0 0.0
    %1485 = vmatprep.subr.mxu0 0.0
    %1486 = vmatpush1.msra.mxu0 0.0
    %1487 = vmatprep.subr.mxu0 0.0
    %1488 = vmatpush1.msra.mxu0 0.0
    %1489 = vmatprep.subr.mxu0 0.0
    %1490 = vmatpush1.msra.mxu0 0.0
    %1491 = vmatprep.subr.mxu0 0.0
    %1492 = vmatpush1.msra.mxu0 0.0
    %1493 = vmatprep.subr.mxu0 0.0
    %1494 = vmatpush1.msra.mxu0 0.0
    %1495 = vmatprep.subr.mxu0 0.0
    %1496 = vmatpush1.msra.mxu0 0.0
    %1497 = vmatprep.subr.mxu0 0.0
    %1498 = vmatpush1.msra.mxu0 0.0
    %1499 = vmatprep.subr.mxu0 0.0
    %1500 = vmatpush1.msra.mxu0 0.0
    %1501 = vmatprep.subr.mxu0 0.0
    %1502 = vmatpush1.msra.mxu0 0.0
    %1503 = vmatprep.subr.mxu0 0.0
    %1504 = vmatpush1.msra.mxu0 0.0
    %1505 = vmatprep.subr.mxu0 0.0
    %1506 = vmatpush1.msra.mxu0 0.0
    %1507 = vmatprep.subr.mxu0 0.0
    %1508 = vmatpush1.msra.mxu0 0.0
    %1509 = vmatprep.subr.mxu0 0.0
    %1510 = vmatpush1.msra.mxu0 0.0
    %1511 = vmatprep.subr.mxu0 0.0
    %1512 = vmatpush1.msra.mxu0 0.0
    %1513 = vmatprep.subr.mxu0 0.0
    %1514 = vmatpush1.msra.mxu0 0.0
    %1515 = vmatprep.subr.mxu0 0.0
    %1516 = vmatpush1.msra.mxu0 0.0
    %1517 = vmatprep.subr.mxu0 0.0
    %1518 = vmatpush1.msra.mxu0 0.0
    %1519 = vmatprep.subr.mxu0 0.0
    %1520 = vmatpush1.msra.mxu0 0.0
    %1521 = vmatprep.subr.mxu0 0.0
    %1522 = vmatpush1.msra.mxu0 0.0
    %1523 = vmatprep.subr.mxu0 0.0
    %1524 = vmatpush1.msra.mxu0 0.0
    %1525 = vmatprep.subr.mxu0 0.0
    %1526 = vmatpush1.msra.mxu0 0.0
    %1527 = vmatprep.subr.mxu0 0.0
    %1528 = vmatpush1.msra.mxu0 0.0
    %1529 = vmatprep.subr.mxu0 0.0
    %1530 = vmatpush1.msra.mxu0 0.0
    %1531 = vmatprep.subr.mxu0 0.0
    %1532 = vmatpush1.msra.mxu0 0.0
    %1533 = vmatprep.subr.mxu0 0.0
    %1534 = vmatpush1.msra.mxu0 0.0
    %1535 = vmatprep.subr.mxu0 0.0
    %1536 = vmatpush1.msra.mxu0 0.0
    %1537 = vmatprep.subr.mxu0 0.0
    %1538 = vmatpush1.msra.mxu0 0.0
    %1539 = vmatprep.subr.mxu0 0.0
    %1540 = vmatpush1.msra.mxu0 0.0
    %1541 = vmatprep.mubr.f32.mxu0 0.0
    %1542 = vmatmul.mubr.f32.gmra.mrb[0].mxu0 %v1462
    %v1543 = vpop.f32.mrb[0].mxu0
    %v1544 = vadd.f32 0.0, %v1543
    %v1545 = vpop.f32.mrb[0].mxu0
    %v1546 = vadd.f32 0.0, %v1545
    %1547 = vmatprep.mubr.f32.mxu0 0.0
    %1548 = vmatmul.mubr.f32.gmra.mrb[0].mxu0 %v1465
    %v1549 = vpop.f32.mrb[0].mxu0
    %v1550 = vadd.f32 0.0, %v1549
    %v1551 = vpop.f32.mrb[0].mxu0
    %v1552 = vadd.f32 0.0, %v1551
    %1553 = vdwg.mxu0
    %1554 = vmatprep.subr.mxu0 %v1473
    %1555 = vmatpush1.msra.mxu0 %v1471
    %1556 = vmatprep.subr.mxu0 0.0
    %1557 = vmatpush1.msra.mxu0 0.0
    %1558 = vmatprep.subr.mxu0 0.0
    %1559 = vmatpush1.msra.mxu0 0.0
    %1560 = vmatprep.subr.mxu0 0.0
    %1561 = vmatpush1.msra.mxu0 0.0
    %1562 = vmatprep.subr.mxu0 0.0
    %1563 = vmatpush1.msra.mxu0 0.0
    %1564 = vmatprep.subr.mxu0 0.0
    %1565 = vmatpush1.msra.mxu0 0.0
    %1566 = vmatprep.subr.mxu0 0.0
    %1567 = vmatpush1.msra.mxu0 0.0
    %1568 = vmatprep.subr.mxu0 0.0
    %1569 = vmatpush1.msra.mxu0 0.0
    %1570 = vmatprep.subr.mxu0 0.0
    %1571 = vmatpush1.msra.mxu0 0.0
    %1572 = vmatprep.subr.mxu0 0.0
    %1573 = vmatpush1.msra.mxu0 0.0
    %1574 = vmatprep.subr.mxu0 0.0
    %1575 = vmatpush1.msra.mxu0 0.0
    %1576 = vmatprep.subr.mxu0 0.0
    %1577 = vmatpush1.msra.mxu0 0.0
    %1578 = vmatprep.subr.mxu0 0.0
    %1579 = vmatpush1.msra.mxu0 0.0
    %1580 = vmatprep.subr.mxu0 0.0
    %1581 = vmatpush1.msra.mxu0 0.0
    %1582 = vmatprep.subr.mxu0 0.0
    %1583 = vmatpush1.msra.mxu0 0.0
    %1584 = vmatprep.subr.mxu0 0.0
    %1585 = vmatpush1.msra.mxu0 0.0
    %1586 = vmatprep.subr.mxu0 0.0
    %1587 = vmatpush1.msra.mxu0 0.0
    %1588 = vmatprep.subr.mxu0 0.0
    %1589 = vmatpush1.msra.mxu0 0.0
    %1590 = vmatprep.subr.mxu0 0.0
    %1591 = vmatpush1.msra.mxu0 0.0
    %1592 = vmatprep.subr.mxu0 0.0
    %1593 = vmatpush1.msra.mxu0 0.0
    %1594 = vmatprep.subr.mxu0 0.0
    %1595 = vmatpush1.msra.mxu0 0.0
    %1596 = vmatprep.subr.mxu0 0.0
    %1597 = vmatpush1.msra.mxu0 0.0
    %1598 = vmatprep.subr.mxu0 0.0
    %1599 = vmatpush1.msra.mxu0 0.0
    %1600 = vmatprep.subr.mxu0 0.0
    %1601 = vmatpush1.msra.mxu0 0.0
    %1602 = vmatprep.subr.mxu0 0.0
    %1603 = vmatpush1.msra.mxu0 0.0
    %1604 = vmatprep.subr.mxu0 0.0
    %1605 = vmatpush1.msra.mxu0 0.0
    %1606 = vmatprep.subr.mxu0 0.0
    %1607 = vmatpush1.msra.mxu0 0.0
    %1608 = vmatprep.subr.mxu0 0.0
    %1609 = vmatpush1.msra.mxu0 0.0
    %1610 = vmatprep.subr.mxu0 0.0
    %1611 = vmatpush1.msra.mxu0 0.0
    %1612 = vmatprep.subr.mxu0 0.0
    %1613 = vmatpush1.msra.mxu0 0.0
    %1614 = vmatprep.subr.mxu0 0.0
    %1615 = vmatpush1.msra.mxu0 0.0
    %1616 = vmatprep.subr.mxu0 0.0
    %1617 = vmatpush1.msra.mxu0 0.0
    %1618 = vmatprep.mubr.f32.mxu0 0.0
    %1619 = vmatmul.mubr.f32.gmra.mrb[0].mxu0 %v1462
    %v1620 = vpop.f32.mrb[0].mxu0
    %v1621 = vadd.f32 0.0, %v1620
    %v1622 = vpop.f32.mrb[0].mxu0
    %v1623 = vadd.f32 0.0, %v1622
    %1624 = vmatprep.mubr.f32.mxu0 0.0
    %1625 = vmatmul.mubr.f32.gmra.mrb[0].mxu0 %v1465
    %v1626 = vpop.f32.mrb[0].mxu0
    %v1627 = vadd.f32 0.0, %v1626
    %v1628 = vpop.f32.mrb[0].mxu0
    %v1629 = vadd.f32 0.0, %v1628
    %1630 = vdwg.mxu0
    %1631 = vmatprep.subr.mxu0 0.0
    %1632 = vmatpush1.msra.mxu0 %v1475
    %1633 = vmatprep.subr.mxu0 0.0
    %1634 = vmatpush1.msra.mxu0 0.0
    %1635 = vmatprep.subr.mxu0 0.0
    %1636 = vmatpush1.msra.mxu0 0.0
    %1637 = vmatprep.subr.mxu0 0.0
    %1638 = vmatpush1.msra.mxu0 0.0
    %1639 = vmatprep.subr.mxu0 0.0
    %1640 = vmatpush1.msra.mxu0 0.0
    %1641 = vmatprep.subr.mxu0 0.0
    %1642 = vmatpush1.msra.mxu0 0.0
    %1643 = vmatprep.subr.mxu0 0.0
    %1644 = vmatpush1.msra.mxu0 0.0
    %1645 = vmatprep.subr.mxu0 0.0
    %1646 = vmatpush1.msra.mxu0 0.0
    %1647 = vmatprep.subr.mxu0 0.0
    %1648 = vmatpush1.msra.mxu0 0.0
    %1649 = vmatprep.subr.mxu0 0.0
    %1650 = vmatpush1.msra.mxu0 0.0
    %1651 = vmatprep.subr.mxu0 0.0
    %1652 = vmatpush1.msra.mxu0 0.0
    %1653 = vmatprep.subr.mxu0 0.0
    %1654 = vmatpush1.msra.mxu0 0.0
    %1655 = vmatprep.subr.mxu0 0.0
    %1656 = vmatpush1.msra.mxu0 0.0
    %1657 = vmatprep.subr.mxu0 0.0
    %1658 = vmatpush1.msra.mxu0 0.0
    %1659 = vmatprep.subr.mxu0 0.0
    %1660 = vmatpush1.msra.mxu0 0.0
    %1661 = vmatprep.subr.mxu0 0.0
    %1662 = vmatpush1.msra.mxu0 0.0
    %1663 = vmatprep.subr.mxu0 0.0
    %1664 = vmatpush1.msra.mxu0 0.0
    %1665 = vmatprep.subr.mxu0 0.0
    %1666 = vmatpush1.msra.mxu0 0.0
    %1667 = vmatprep.subr.mxu0 0.0
    %1668 = vmatpush1.msra.mxu0 0.0
    %1669 = vmatprep.subr.mxu0 0.0
    %1670 = vmatpush1.msra.mxu0 0.0
    %1671 = vmatprep.subr.mxu0 0.0
    %1672 = vmatpush1.msra.mxu0 0.0
    %1673 = vmatprep.subr.mxu0 0.0
    %1674 = vmatpush1.msra.mxu0 0.0
    %1675 = vmatprep.subr.mxu0 0.0
    %1676 = vmatpush1.msra.mxu0 0.0
    %1677 = vmatprep.subr.mxu0 0.0
    %1678 = vmatpush1.msra.mxu0 0.0
    %1679 = vmatprep.subr.mxu0 0.0
    %1680 = vmatpush1.msra.mxu0 0.0
    %1681 = vmatprep.subr.mxu0 0.0
    %1682 = vmatpush1.msra.mxu0 0.0
    %1683 = vmatprep.subr.mxu0 0.0
    %1684 = vmatpush1.msra.mxu0 0.0
    %1685 = vmatprep.subr.mxu0 0.0
    %1686 = vmatpush1.msra.mxu0 0.0
    %1687 = vmatprep.subr.mxu0 0.0
    %1688 = vmatpush1.msra.mxu0 0.0
    %1689 = vmatprep.subr.mxu0 0.0
    %1690 = vmatpush1.msra.mxu0 0.0
    %1691 = vmatprep.subr.mxu0 0.0
    %1692 = vmatpush1.msra.mxu0 0.0
    %1693 = vmatprep.subr.mxu0 0.0
    %1694 = vmatpush1.msra.mxu0 0.0
    %1695 = vmatprep.mubr.f32.mxu0 0.0
    %1696 = vmatmul.mubr.f32.gmra.mrb[0].mxu0 %v1462
    %v1697 = vpop.f32.mrb[0].mxu0
    %v1698 = vadd.f32 0.0, %v1697
    %v1699 = vpop.f32.mrb[0].mxu0
    %1700 = vmatprep.mubr.f32.mxu0 0.0
    %1701 = vmatmul.mubr.f32.gmra.mrb[0].mxu0 %v1465
    %v1702 = vpop.f32.mrb[0].mxu0
    %v1703 = vadd.f32 0.0, %v1702
    %v1704 = vpop.f32.mrb[0].mxu0
    %1705 = vdwg.mxu0
    %v1706 = vadd.f32 %v1430, %v1544
    %v1707 = vadd.f32 %v1431, %v1546
    %v1708 = vadd.f32 %v1432, %v1621
    %v1709 = vadd.f32 %v1433, %v1623
    %v1710 = vadd.f32 %v1434, %v1698
    %v1711 = vadd.f32 %v1435, %v1550
    %v1712 = vadd.f32 %v1436, %v1552
    %v1713 = vadd.f32 %v1437, %v1627
    %v1714 = vadd.f32 %v1438, %v1629
    %v1715 = vadd.f32 %v1439, %v1703
    %s1716 = scalar_lea.vmem %s1, 96
    %v1717 = vld [vmem:[%s1716] sm:$0xff]
    %v1718 = vld [vmem:[%s1716 + $0x8] sm:$0xf]
    %1719 = vrot.lane.b32.xlu0 %v53, 84
    %v1720 = vpop.permute.xlu0 %1719
    %1721 = vrot.lane.b32.xlu0 %v54, 84
    %v1722 = vpop.permute.xlu0 %1721
    %1723 = vrot.lane.b32.xlu0 %v55, 84
    %v1724 = vpop.permute.xlu0 %1723
    %1725 = vrot.lane.b32.xlu0 %v56, 84
    %v1726 = vpop.permute.xlu0 %1725
    %1727 = vrot.lane.b32.xlu0 %v57, 84
    %v1728 = vpop.permute.xlu0 %1727
    %1729 = vrot.lane.b32.xlu0 %v58, 84
    %v1730 = vpop.permute.xlu0 %1729
    %vm1731 = vcmask 687104
    %v1732 = vsel %vm1731, %v1720, %v1722
    %v1733 = vsel %vm1731, %v1722, %v1724
    %v1734 = vsel %vm1731, %v1724, %v1726
    %v1735 = vsel %vm1731, %v1726, %v1728
    %v1736 = vsel %vm1731, %v1728, %v1730
    %v1738 = vsel %vm73, %v1717, 0
    %v1741 = vsel %vm73, %v1718, 0
    %v1743 = vsel %vm80, %v1732, 0
    %v1745 = vsel %vm80, %v1733, 0
    %v1747 = vsel %vm80, %v1734, 0
    %v1749 = vsel %vm80, %v1735, 0
    %v1751 = vsel %vm80, %v1736, 0
    %1753 = vmatprep.subr.mxu0 %v1745
    %1754 = vmatpush1.msra.mxu0 %v1743
    %1755 = vmatprep.subr.mxu0 0.0
    %1756 = vmatpush1.msra.mxu0 0.0
    %1757 = vmatprep.subr.mxu0 0.0
    %1758 = vmatpush1.msra.mxu0 0.0
    %1759 = vmatprep.subr.mxu0 0.0
    %1760 = vmatpush1.msra.mxu0 0.0
    %1761 = vmatprep.subr.mxu0 0.0
    %1762 = vmatpush1.msra.mxu0 0.0
    %1763 = vmatprep.subr.mxu0 0.0
    %1764 = vmatpush1.msra.mxu0 0.0
    %1765 = vmatprep.subr.mxu0 0.0
    %1766 = vmatpush1.msra.mxu0 0.0
    %1767 = vmatprep.subr.mxu0 0.0
    %1768 = vmatpush1.msra.mxu0 0.0
    %1769 = vmatprep.subr.mxu0 0.0
    %1770 = vmatpush1.msra.mxu0 0.0
    %1771 = vmatprep.subr.mxu0 0.0
    %1772 = vmatpush1.msra.mxu0 0.0
    %1773 = vmatprep.subr.mxu0 0.0
    %1774 = vmatpush1.msra.mxu0 0.0
    %1775 = vmatprep.subr.mxu0 0.0
    %1776 = vmatpush1.msra.mxu0 0.0
    %1777 = vmatprep.subr.mxu0 0.0
    %1778 = vmatpush1.msra.mxu0 0.0
    %1779 = vmatprep.subr.mxu0 0.0
    %1780 = vmatpush1.msra.mxu0 0.0
    %1781 = vmatprep.subr.mxu0 0.0
    %1782 = vmatpush1.msra.mxu0 0.0
    %1783 = vmatprep.subr.mxu0 0.0
    %1784 = vmatpush1.msra.mxu0 0.0
    %1785 = vmatprep.subr.mxu0 0.0
    %1786 = vmatpush1.msra.mxu0 0.0
    %1787 = vmatprep.subr.mxu0 0.0
    %1788 = vmatpush1.msra.mxu0 0.0
    %1789 = vmatprep.subr.mxu0 0.0
    %1790 = vmatpush1.msra.mxu0 0.0
    %1791 = vmatprep.subr.mxu0 0.0
    %1792 = vmatpush1.msra.mxu0 0.0
    %1793 = vmatprep.subr.mxu0 0.0
    %1794 = vmatpush1.msra.mxu0 0.0
    %1795 = vmatprep.subr.mxu0 0.0
    %1796 = vmatpush1.msra.mxu0 0.0
    %1797 = vmatprep.subr.mxu0 0.0
    %1798 = vmatpush1.msra.mxu0 0.0
    %1799 = vmatprep.subr.mxu0 0.0
    %1800 = vmatpush1.msra.mxu0 0.0
    %1801 = vmatprep.subr.mxu0 0.0
    %1802 = vmatpush1.msra.mxu0 0.0
    %1803 = vmatprep.subr.mxu0 0.0
    %1804 = vmatpush1.msra.mxu0 0.0
    %1805 = vmatprep.subr.mxu0 0.0
    %1806 = vmatpush1.msra.mxu0 0.0
    %1807 = vmatprep.subr.mxu0 0.0
    %1808 = vmatpush1.msra.mxu0 0.0
    %1809 = vmatprep.subr.mxu0 0.0
    %1810 = vmatpush1.msra.mxu0 0.0
    %1811 = vmatprep.subr.mxu0 0.0
    %1812 = vmatpush1.msra.mxu0 0.0
    %1813 = vmatprep.subr.mxu0 0.0
    %1814 = vmatpush1.msra.mxu0 0.0
    %1815 = vmatprep.subr.mxu0 0.0
    %1816 = vmatpush1.msra.mxu0 0.0
    %1817 = vmatprep.mubr.f32.mxu0 0.0
    %1818 = vmatmul.mubr.f32.gmra.mrb[0].mxu0 %v1738
    %v1819 = vpop.f32.mrb[0].mxu0
    %v1820 = vadd.f32 0.0, %v1819
    %v1821 = vpop.f32.mrb[0].mxu0
    %v1822 = vadd.f32 0.0, %v1821
    %1823 = vmatprep.mubr.f32.mxu0 0.0
    %1824 = vmatmul.mubr.f32.gmra.mrb[0].mxu0 %v1741
    %v1825 = vpop.f32.mrb[0].mxu0
    %v1826 = vadd.f32 0.0, %v1825
    %v1827 = vpop.f32.mrb[0].mxu0
    %v1828 = vadd.f32 0.0, %v1827
    %1829 = vdwg.mxu0
    %1830 = vmatprep.subr.mxu0 %v1749
    %1831 = vmatpush1.msra.mxu0 %v1747
    %1832 = vmatprep.subr.mxu0 0.0
    %1833 = vmatpush1.msra.mxu0 0.0
    %1834 = vmatprep.subr.mxu0 0.0
    %1835 = vmatpush1.msra.mxu0 0.0
    %1836 = vmatprep.subr.mxu0 0.0
    %1837 = vmatpush1.msra.mxu0 0.0
    %1838 = vmatprep.subr.mxu0 0.0
    %1839 = vmatpush1.msra.mxu0 0.0
    %1840 = vmatprep.subr.mxu0 0.0
    %1841 = vmatpush1.msra.mxu0 0.0
    %1842 = vmatprep.subr.mxu0 0.0
    %1843 = vmatpush1.msra.mxu0 0.0
    %1844 = vmatprep.subr.mxu0 0.0
    %1845 = vmatpush1.msra.mxu0 0.0
    %1846 = vmatprep.subr.mxu0 0.0
    %1847 = vmatpush1.msra.mxu0 0.0
    %1848 = vmatprep.subr.mxu0 0.0
    %1849 = vmatpush1.msra.mxu0 0.0
    %1850 = vmatprep.subr.mxu0 0.0
    %1851 = vmatpush1.msra.mxu0 0.0
    %1852 = vmatprep.subr.mxu0 0.0
    %1853 = vmatpush1.msra.mxu0 0.0
    %1854 = vmatprep.subr.mxu0 0.0
    %1855 = vmatpush1.msra.mxu0 0.0
    %1856 = vmatprep.subr.mxu0 0.0
    %1857 = vmatpush1.msra.mxu0 0.0
    %1858 = vmatprep.subr.mxu0 0.0
    %1859 = vmatpush1.msra.mxu0 0.0
    %1860 = vmatprep.subr.mxu0 0.0
    %1861 = vmatpush1.msra.mxu0 0.0
    %1862 = vmatprep.subr.mxu0 0.0
    %1863 = vmatpush1.msra.mxu0 0.0
    %1864 = vmatprep.subr.mxu0 0.0
    %1865 = vmatpush1.msra.mxu0 0.0
    %1866 = vmatprep.subr.mxu0 0.0
    %1867 = vmatpush1.msra.mxu0 0.0
    %1868 = vmatprep.subr.mxu0 0.0
    %1869 = vmatpush1.msra.mxu0 0.0
    %1870 = vmatprep.subr.mxu0 0.0
    %1871 = vmatpush1.msra.mxu0 0.0
    %1872 = vmatprep.subr.mxu0 0.0
    %1873 = vmatpush1.msra.mxu0 0.0
    %1874 = vmatprep.subr.mxu0 0.0
    %1875 = vmatpush1.msra.mxu0 0.0
    %1876 = vmatprep.subr.mxu0 0.0
    %1877 = vmatpush1.msra.mxu0 0.0
    %1878 = vmatprep.subr.mxu0 0.0
    %1879 = vmatpush1.msra.mxu0 0.0
    %1880 = vmatprep.subr.mxu0 0.0
    %1881 = vmatpush1.msra.mxu0 0.0
    %1882 = vmatprep.subr.mxu0 0.0
    %1883 = vmatpush1.msra.mxu0 0.0
    %1884 = vmatprep.subr.mxu0 0.0
    %1885 = vmatpush1.msra.mxu0 0.0
    %1886 = vmatprep.subr.mxu0 0.0
    %1887 = vmatpush1.msra.mxu0 0.0
    %1888 = vmatprep.subr.mxu0 0.0
    %1889 = vmatpush1.msra.mxu0 0.0
    %1890 = vmatprep.subr.mxu0 0.0
    %1891 = vmatpush1.msra.mxu0 0.0
    %1892 = vmatprep.subr.mxu0 0.0
    %1893 = vmatpush1.msra.mxu0 0.0
    %1894 = vmatprep.mubr.f32.mxu0 0.0
    %1895 = vmatmul.mubr.f32.gmra.mrb[0].mxu0 %v1738
    %v1896 = vpop.f32.mrb[0].mxu0
    %v1897 = vadd.f32 0.0, %v1896
    %v1898 = vpop.f32.mrb[0].mxu0
    %v1899 = vadd.f32 0.0, %v1898
    %1900 = vmatprep.mubr.f32.mxu0 0.0
    %1901 = vmatmul.mubr.f32.gmra.mrb[0].mxu0 %v1741
    %v1902 = vpop.f32.mrb[0].mxu0
    %v1903 = vadd.f32 0.0, %v1902
    %v1904 = vpop.f32.mrb[0].mxu0
    %v1905 = vadd.f32 0.0, %v1904
    %1906 = vdwg.mxu0
    %1907 = vmatprep.subr.mxu0 0.0
    %1908 = vmatpush1.msra.mxu0 %v1751
    %1909 = vmatprep.subr.mxu0 0.0
    %1910 = vmatpush1.msra.mxu0 0.0
    %1911 = vmatprep.subr.mxu0 0.0
    %1912 = vmatpush1.msra.mxu0 0.0
    %1913 = vmatprep.subr.mxu0 0.0
    %1914 = vmatpush1.msra.mxu0 0.0
    %1915 = vmatprep.subr.mxu0 0.0
    %1916 = vmatpush1.msra.mxu0 0.0
    %1917 = vmatprep.subr.mxu0 0.0
    %1918 = vmatpush1.msra.mxu0 0.0
    %1919 = vmatprep.subr.mxu0 0.0
    %1920 = vmatpush1.msra.mxu0 0.0
    %1921 = vmatprep.subr.mxu0 0.0
    %1922 = vmatpush1.msra.mxu0 0.0
    %1923 = vmatprep.subr.mxu0 0.0
    %1924 = vmatpush1.msra.mxu0 0.0
    %1925 = vmatprep.subr.mxu0 0.0
    %1926 = vmatpush1.msra.mxu0 0.0
    %1927 = vmatprep.subr.mxu0 0.0
    %1928 = vmatpush1.msra.mxu0 0.0
    %1929 = vmatprep.subr.mxu0 0.0
    %1930 = vmatpush1.msra.mxu0 0.0
    %1931 = vmatprep.subr.mxu0 0.0
    %1932 = vmatpush1.msra.mxu0 0.0
    %1933 = vmatprep.subr.mxu0 0.0
    %1934 = vmatpush1.msra.mxu0 0.0
    %1935 = vmatprep.subr.mxu0 0.0
    %1936 = vmatpush1.msra.mxu0 0.0
    %1937 = vmatprep.subr.mxu0 0.0
    %1938 = vmatpush1.msra.mxu0 0.0
    %1939 = vmatprep.subr.mxu0 0.0
    %1940 = vmatpush1.msra.mxu0 0.0
    %1941 = vmatprep.subr.mxu0 0.0
    %1942 = vmatpush1.msra.mxu0 0.0
    %1943 = vmatprep.subr.mxu0 0.0
    %1944 = vmatpush1.msra.mxu0 0.0
    %1945 = vmatprep.subr.mxu0 0.0
    %1946 = vmatpush1.msra.mxu0 0.0
    %1947 = vmatprep.subr.mxu0 0.0
    %1948 = vmatpush1.msra.mxu0 0.0
    %1949 = vmatprep.subr.mxu0 0.0
    %1950 = vmatpush1.msra.mxu0 0.0
    %1951 = vmatprep.subr.mxu0 0.0
    %1952 = vmatpush1.msra.mxu0 0.0
    %1953 = vmatprep.subr.mxu0 0.0
    %1954 = vmatpush1.msra.mxu0 0.0
    %1955 = vmatprep.subr.mxu0 0.0
    %1956 = vmatpush1.msra.mxu0 0.0
    %1957 = vmatprep.subr.mxu0 0.0
    %1958 = vmatpush1.msra.mxu0 0.0
    %1959 = vmatprep.subr.mxu0 0.0
    %1960 = vmatpush1.msra.mxu0 0.0
    %1961 = vmatprep.subr.mxu0 0.0
    %1962 = vmatpush1.msra.mxu0 0.0
    %1963 = vmatprep.subr.mxu0 0.0
    %1964 = vmatpush1.msra.mxu0 0.0
    %1965 = vmatprep.subr.mxu0 0.0
    %1966 = vmatpush1.msra.mxu0 0.0
    %1967 = vmatprep.subr.mxu0 0.0
    %1968 = vmatpush1.msra.mxu0 0.0
    %1969 = vmatprep.subr.mxu0 0.0
    %1970 = vmatpush1.msra.mxu0 0.0
    %1971 = vmatprep.mubr.f32.mxu0 0.0
    %1972 = vmatmul.mubr.f32.gmra.mrb[0].mxu0 %v1738
    %v1973 = vpop.f32.mrb[0].mxu0
    %v1974 = vadd.f32 0.0, %v1973
    %v1975 = vpop.f32.mrb[0].mxu0
    %1976 = vmatprep.mubr.f32.mxu0 0.0
    %1977 = vmatmul.mubr.f32.gmra.mrb[0].mxu0 %v1741
    %v1978 = vpop.f32.mrb[0].mxu0
    %v1979 = vadd.f32 0.0, %v1978
    %v1980 = vpop.f32.mrb[0].mxu0
    %1981 = vdwg.mxu0
    %v1982 = vadd.f32 %v1706, %v1820
    %v1983 = vadd.f32 %v1707, %v1822
    %v1984 = vadd.f32 %v1708, %v1897
    %v1985 = vadd.f32 %v1709, %v1899
    %v1986 = vadd.f32 %v1710, %v1974
    %v1987 = vadd.f32 %v1711, %v1826
    %v1988 = vadd.f32 %v1712, %v1828
    %v1989 = vadd.f32 %v1713, %v1903
    %v1990 = vadd.f32 %v1714, %v1905
    %v1991 = vadd.f32 %v1715, %v1979
    %s1992 = scalar_lea.vmem %s1, 112
    %v1993 = vld [vmem:[%s1992] sm:$0xff]
    %v1994 = vld [vmem:[%s1992 + $0x8] sm:$0xf]
    %1995 = vrot.lane.b32.xlu0 %v53, 83
    %v1996 = vpop.permute.xlu0 %1995
    %1997 = vrot.lane.b32.xlu0 %v54, 83
    %v1998 = vpop.permute.xlu0 %1997
    %1999 = vrot.lane.b32.xlu0 %v55, 83
    %v2000 = vpop.permute.xlu0 %1999
    %2001 = vrot.lane.b32.xlu0 %v56, 83
    %v2002 = vpop.permute.xlu0 %2001
    %2003 = vrot.lane.b32.xlu0 %v57, 83
    %v2004 = vpop.permute.xlu0 %2003
    %2005 = vrot.lane.b32.xlu0 %v58, 83
    %v2006 = vpop.permute.xlu0 %2005
    %vm2007 = vcmask 678912
    %v2008 = vsel %vm2007, %v1996, %v1998
    %v2009 = vsel %vm2007, %v1998, %v2000
    %v2010 = vsel %vm2007, %v2000, %v2002
    %v2011 = vsel %vm2007, %v2002, %v2004
    %v2012 = vsel %vm2007, %v2004, %v2006
    %v2014 = vsel %vm73, %v1993, 0
    %v2017 = vsel %vm73, %v1994, 0
    %v2019 = vsel %vm80, %v2008, 0
    %v2021 = vsel %vm80, %v2009, 0
    %v2023 = vsel %vm80, %v2010, 0
    %v2025 = vsel %vm80, %v2011, 0
    %v2027 = vsel %vm80, %v2012, 0
    %2029 = vmatprep.subr.mxu0 %v2021
    %2030 = vmatpush1.msra.mxu0 %v2019
    %2031 = vmatprep.subr.mxu0 0.0
    %2032 = vmatpush1.msra.mxu0 0.0
    %2033 = vmatprep.subr.mxu0 0.0
    %2034 = vmatpush1.msra.mxu0 0.0
    %2035 = vmatprep.subr.mxu0 0.0
    %2036 = vmatpush1.msra.mxu0 0.0
    %2037 = vmatprep.subr.mxu0 0.0
    %2038 = vmatpush1.msra.mxu0 0.0
    %2039 = vmatprep.subr.mxu0 0.0
    %2040 = vmatpush1.msra.mxu0 0.0
    %2041 = vmatprep.subr.mxu0 0.0
    %2042 = vmatpush1.msra.mxu0 0.0
    %2043 = vmatprep.subr.mxu0 0.0
    %2044 = vmatpush1.msra.mxu0 0.0
    %2045 = vmatprep.subr.mxu0 0.0
    %2046 = vmatpush1.msra.mxu0 0.0
    %2047 = vmatprep.subr.mxu0 0.0
    %2048 = vmatpush1.msra.mxu0 0.0
    %2049 = vmatprep.subr.mxu0 0.0
    %2050 = vmatpush1.msra.mxu0 0.0
    %2051 = vmatprep.subr.mxu0 0.0
    %2052 = vmatpush1.msra.mxu0 0.0
    %2053 = vmatprep.subr.mxu0 0.0
    %2054 = vmatpush1.msra.mxu0 0.0
    %2055 = vmatprep.subr.mxu0 0.0
    %2056 = vmatpush1.msra.mxu0 0.0
    %2057 = vmatprep.subr.mxu0 0.0
    %2058 = vmatpush1.msra.mxu0 0.0
    %2059 = vmatprep.subr.mxu0 0.0
    %2060 = vmatpush1.msra.mxu0 0.0
    %2061 = vmatprep.subr.mxu0 0.0
    %2062 = vmatpush1.msra.mxu0 0.0
    %2063 = vmatprep.subr.mxu0 0.0
    %2064 = vmatpush1.msra.mxu0 0.0
    %2065 = vmatprep.subr.mxu0 0.0
    %2066 = vmatpush1.msra.mxu0 0.0
    %2067 = vmatprep.subr.mxu0 0.0
    %2068 = vmatpush1.msra.mxu0 0.0
    %2069 = vmatprep.subr.mxu0 0.0
    %2070 = vmatpush1.msra.mxu0 0.0
    %2071 = vmatprep.subr.mxu0 0.0
    %2072 = vmatpush1.msra.mxu0 0.0
    %2073 = vmatprep.subr.mxu0 0.0
    %2074 = vmatpush1.msra.mxu0 0.0
    %2075 = vmatprep.subr.mxu0 0.0
    %2076 = vmatpush1.msra.mxu0 0.0
    %2077 = vmatprep.subr.mxu0 0.0
    %2078 = vmatpush1.msra.mxu0 0.0
    %2079 = vmatprep.subr.mxu0 0.0
    %2080 = vmatpush1.msra.mxu0 0.0
    %2081 = vmatprep.subr.mxu0 0.0
    %2082 = vmatpush1.msra.mxu0 0.0
    %2083 = vmatprep.subr.mxu0 0.0
    %2084 = vmatpush1.msra.mxu0 0.0
    %2085 = vmatprep.subr.mxu0 0.0
    %2086 = vmatpush1.msra.mxu0 0.0
    %2087 = vmatprep.subr.mxu0 0.0
    %2088 = vmatpush1.msra.mxu0 0.0
    %2089 = vmatprep.subr.mxu0 0.0
    %2090 = vmatpush1.msra.mxu0 0.0
    %2091 = vmatprep.subr.mxu0 0.0
    %2092 = vmatpush1.msra.mxu0 0.0
    %2093 = vmatprep.mubr.f32.mxu0 0.0
    %2094 = vmatmul.mubr.f32.gmra.mrb[0].mxu0 %v2014
    %v2095 = vpop.f32.mrb[0].mxu0
    %v2096 = vadd.f32 0.0, %v2095
    %v2097 = vpop.f32.mrb[0].mxu0
    %v2098 = vadd.f32 0.0, %v2097
    %2099 = vmatprep.mubr.f32.mxu0 0.0
    %2100 = vmatmul.mubr.f32.gmra.mrb[0].mxu0 %v2017
    %v2101 = vpop.f32.mrb[0].mxu0
    %v2102 = vadd.f32 0.0, %v2101
    %v2103 = vpop.f32.mrb[0].mxu0
    %v2104 = vadd.f32 0.0, %v2103
    %2105 = vdwg.mxu0
    %2106 = vmatprep.subr.mxu0 %v2025
    %2107 = vmatpush1.msra.mxu0 %v2023
    %2108 = vmatprep.subr.mxu0 0.0
    %2109 = vmatpush1.msra.mxu0 0.0
    %2110 = vmatprep.subr.mxu0 0.0
    %2111 = vmatpush1.msra.mxu0 0.0
    %2112 = vmatprep.subr.mxu0 0.0
    %2113 = vmatpush1.msra.mxu0 0.0
    %2114 = vmatprep.subr.mxu0 0.0
    %2115 = vmatpush1.msra.mxu0 0.0
    %2116 = vmatprep.subr.mxu0 0.0
    %2117 = vmatpush1.msra.mxu0 0.0
    %2118 = vmatprep.subr.mxu0 0.0
    %2119 = vmatpush1.msra.mxu0 0.0
    %2120 = vmatprep.subr.mxu0 0.0
    %2121 = vmatpush1.msra.mxu0 0.0
    %2122 = vmatprep.subr.mxu0 0.0
    %2123 = vmatpush1.msra.mxu0 0.0
    %2124 = vmatprep.subr.mxu0 0.0
    %2125 = vmatpush1.msra.mxu0 0.0
    %2126 = vmatprep.subr.mxu0 0.0
    %2127 = vmatpush1.msra.mxu0 0.0
    %2128 = vmatprep.subr.mxu0 0.0
    %2129 = vmatpush1.msra.mxu0 0.0
    %2130 = vmatprep.subr.mxu0 0.0
    %2131 = vmatpush1.msra.mxu0 0.0
    %2132 = vmatprep.subr.mxu0 0.0
    %2133 = vmatpush1.msra.mxu0 0.0
    %2134 = vmatprep.subr.mxu0 0.0
    %2135 = vmatpush1.msra.mxu0 0.0
    %2136 = vmatprep.subr.mxu0 0.0
    %2137 = vmatpush1.msra.mxu0 0.0
    %2138 = vmatprep.subr.mxu0 0.0
    %2139 = vmatpush1.msra.mxu0 0.0
    %2140 = vmatprep.subr.mxu0 0.0
    %2141 = vmatpush1.msra.mxu0 0.0
    %2142 = vmatprep.subr.mxu0 0.0
    %2143 = vmatpush1.msra.mxu0 0.0
    %2144 = vmatprep.subr.mxu0 0.0
    %2145 = vmatpush1.msra.mxu0 0.0
    %2146 = vmatprep.subr.mxu0 0.0
    %2147 = vmatpush1.msra.mxu0 0.0
    %2148 = vmatprep.subr.mxu0 0.0
    %2149 = vmatpush1.msra.mxu0 0.0
    %2150 = vmatprep.subr.mxu0 0.0
    %2151 = vmatpush1.msra.mxu0 0.0
    %2152 = vmatprep.subr.mxu0 0.0
    %2153 = vmatpush1.msra.mxu0 0.0
    %2154 = vmatprep.subr.mxu0 0.0
    %2155 = vmatpush1.msra.mxu0 0.0
    %2156 = vmatprep.subr.mxu0 0.0
    %2157 = vmatpush1.msra.mxu0 0.0
    %2158 = vmatprep.subr.mxu0 0.0
    %2159 = vmatpush1.msra.mxu0 0.0
    %2160 = vmatprep.subr.mxu0 0.0
    %2161 = vmatpush1.msra.mxu0 0.0
    %2162 = vmatprep.subr.mxu0 0.0
    %2163 = vmatpush1.msra.mxu0 0.0
    %2164 = vmatprep.subr.mxu0 0.0
    %2165 = vmatpush1.msra.mxu0 0.0
    %2166 = vmatprep.subr.mxu0 0.0
    %2167 = vmatpush1.msra.mxu0 0.0
    %2168 = vmatprep.subr.mxu0 0.0
    %2169 = vmatpush1.msra.mxu0 0.0
    %2170 = vmatprep.mubr.f32.mxu0 0.0
    %2171 = vmatmul.mubr.f32.gmra.mrb[0].mxu0 %v2014
    %v2172 = vpop.f32.mrb[0].mxu0
    %v2173 = vadd.f32 0.0, %v2172
    %v2174 = vpop.f32.mrb[0].mxu0
    %v2175 = vadd.f32 0.0, %v2174
    %2176 = vmatprep.mubr.f32.mxu0 0.0
    %2177 = vmatmul.mubr.f32.gmra.mrb[0].mxu0 %v2017
    %v2178 = vpop.f32.mrb[0].mxu0
    %v2179 = vadd.f32 0.0, %v2178
    %v2180 = vpop.f32.mrb[0].mxu0
    %v2181 = vadd.f32 0.0, %v2180
    %2182 = vdwg.mxu0
    %2183 = vmatprep.subr.mxu0 0.0
    %2184 = vmatpush1.msra.mxu0 %v2027
    %2185 = vmatprep.subr.mxu0 0.0
    %2186 = vmatpush1.msra.mxu0 0.0
    %2187 = vmatprep.subr.mxu0 0.0
    %2188 = vmatpush1.msra.mxu0 0.0
    %2189 = vmatprep.subr.mxu0 0.0
    %2190 = vmatpush1.msra.mxu0 0.0
    %2191 = vmatprep.subr.mxu0 0.0
    %2192 = vmatpush1.msra.mxu0 0.0
    %2193 = vmatprep.subr.mxu0 0.0
    %2194 = vmatpush1.msra.mxu0 0.0
    %2195 = vmatprep.subr.mxu0 0.0
    %2196 = vmatpush1.msra.mxu0 0.0
    %2197 = vmatprep.subr.mxu0 0.0
    %2198 = vmatpush1.msra.mxu0 0.0
    %2199 = vmatprep.subr.mxu0 0.0
    %2200 = vmatpush1.msra.mxu0 0.0
    %2201 = vmatprep.subr.mxu0 0.0
    %2202 = vmatpush1.msra.mxu0 0.0
    %2203 = vmatprep.subr.mxu0 0.0
    %2204 = vmatpush1.msra.mxu0 0.0
    %2205 = vmatprep.subr.mxu0 0.0
    %2206 = vmatpush1.msra.mxu0 0.0
    %2207 = vmatprep.subr.mxu0 0.0
    %2208 = vmatpush1.msra.mxu0 0.0
    %2209 = vmatprep.subr.mxu0 0.0
    %2210 = vmatpush1.msra.mxu0 0.0
    %2211 = vmatprep.subr.mxu0 0.0
    %2212 = vmatpush1.msra.mxu0 0.0
    %2213 = vmatprep.subr.mxu0 0.0
    %2214 = vmatpush1.msra.mxu0 0.0
    %2215 = vmatprep.subr.mxu0 0.0
    %2216 = vmatpush1.msra.mxu0 0.0
    %2217 = vmatprep.subr.mxu0 0.0
    %2218 = vmatpush1.msra.mxu0 0.0
    %2219 = vmatprep.subr.mxu0 0.0
    %2220 = vmatpush1.msra.mxu0 0.0
    %2221 = vmatprep.subr.mxu0 0.0
    %2222 = vmatpush1.msra.mxu0 0.0
    %2223 = vmatprep.subr.mxu0 0.0
    %2224 = vmatpush1.msra.mxu0 0.0
    %2225 = vmatprep.subr.mxu0 0.0
    %2226 = vmatpush1.msra.mxu0 0.0
    %2227 = vmatprep.subr.mxu0 0.0
    %2228 = vmatpush1.msra.mxu0 0.0
    %2229 = vmatprep.subr.mxu0 0.0
    %2230 = vmatpush1.msra.mxu0 0.0
    %2231 = vmatprep.subr.mxu0 0.0
    %2232 = vmatpush1.msra.mxu0 0.0
    %2233 = vmatprep.subr.mxu0 0.0
    %2234 = vmatpush1.msra.mxu0 0.0
    %2235 = vmatprep.subr.mxu0 0.0
    %2236 = vmatpush1.msra.mxu0 0.0
    %2237 = vmatprep.subr.mxu0 0.0
    %2238 = vmatpush1.msra.mxu0 0.0
    %2239 = vmatprep.subr.mxu0 0.0
    %2240 = vmatpush1.msra.mxu0 0.0
    %2241 = vmatprep.subr.mxu0 0.0
    %2242 = vmatpush1.msra.mxu0 0.0
    %2243 = vmatprep.subr.mxu0 0.0
    %2244 = vmatpush1.msra.mxu0 0.0
    %2245 = vmatprep.subr.mxu0 0.0
    %2246 = vmatpush1.msra.mxu0 0.0
    %2247 = vmatprep.mubr.f32.mxu0 0.0
    %2248 = vmatmul.mubr.f32.gmra.mrb[0].mxu0 %v2014
    %v2249 = vpop.f32.mrb[0].mxu0
    %v2250 = vadd.f32 0.0, %v2249
    %v2251 = vpop.f32.mrb[0].mxu0
    %2252 = vmatprep.mubr.f32.mxu0 0.0
    %2253 = vmatmul.mubr.f32.gmra.mrb[0].mxu0 %v2017
    %v2254 = vpop.f32.mrb[0].mxu0
    %v2255 = vadd.f32 0.0, %v2254
    %v2256 = vpop.f32.mrb[0].mxu0
    %2257 = vdwg.mxu0
    %v2258 = vadd.f32 %v1982, %v2096
    %v2259 = vadd.f32 %v1983, %v2098
    %v2260 = vadd.f32 %v1984, %v2173
    %v2261 = vadd.f32 %v1985, %v2175
    %v2262 = vadd.f32 %v1986, %v2250
    %v2263 = vadd.f32 %v1987, %v2102
    %v2264 = vadd.f32 %v1988, %v2104
    %v2265 = vadd.f32 %v1989, %v2179
    %v2266 = vadd.f32 %v1990, %v2181
    %v2267 = vadd.f32 %v1991, %v2255
    %s2268 = scalar_lea.vmem %s1, 128
    %v2269 = vld [vmem:[%s2268] sm:$0xff]
    %v2270 = vld [vmem:[%s2268 + $0x8] sm:$0xf]
    %2271 = vrot.lane.b32.xlu0 %v53, 82
    %v2272 = vpop.permute.xlu0 %2271
    %2273 = vrot.lane.b32.xlu0 %v54, 82
    %v2274 = vpop.permute.xlu0 %2273
    %2275 = vrot.lane.b32.xlu0 %v55, 82
    %v2276 = vpop.permute.xlu0 %2275
    %2277 = vrot.lane.b32.xlu0 %v56, 82
    %v2278 = vpop.permute.xlu0 %2277
    %2279 = vrot.lane.b32.xlu0 %v57, 82
    %v2280 = vpop.permute.xlu0 %2279
    %2281 = vrot.lane.b32.xlu0 %v58, 82
    %v2282 = vpop.permute.xlu0 %2281
    %vm2283 = vcmask 670720
    %v2284 = vsel %vm2283, %v2272, %v2274
    %v2285 = vsel %vm2283, %v2274, %v2276
    %v2286 = vsel %vm2283, %v2276, %v2278
    %v2287 = vsel %vm2283, %v2278, %v2280
    %v2288 = vsel %vm2283, %v2280, %v2282
    %v2290 = vsel %vm73, %v2269, 0
    %v2293 = vsel %vm73, %v2270, 0
    %v2295 = vsel %vm80, %v2284, 0
    %v2297 = vsel %vm80, %v2285, 0
    %v2299 = vsel %vm80, %v2286, 0
    %v2301 = vsel %vm80, %v2287, 0
    %v2303 = vsel %vm80, %v2288, 0
    %2305 = vmatprep.subr.mxu0 %v2297
    %2306 = vmatpush1.msra.mxu0 %v2295
    %2307 = vmatprep.subr.mxu0 0.0
    %2308 = vmatpush1.msra.mxu0 0.0
    %2309 = vmatprep.subr.mxu0 0.0
    %2310 = vmatpush1.msra.mxu0 0.0
    %2311 = vmatprep.subr.mxu0 0.0
    %2312 = vmatpush1.msra.mxu0 0.0
    %2313 = vmatprep.subr.mxu0 0.0
    %2314 = vmatpush1.msra.mxu0 0.0
    %2315 = vmatprep.subr.mxu0 0.0
    %2316 = vmatpush1.msra.mxu0 0.0
    %2317 = vmatprep.subr.mxu0 0.0
    %2318 = vmatpush1.msra.mxu0 0.0
    %2319 = vmatprep.subr.mxu0 0.0
    %2320 = vmatpush1.msra.mxu0 0.0
    %2321 = vmatprep.subr.mxu0 0.0
    %2322 = vmatpush1.msra.mxu0 0.0
    %2323 = vmatprep.subr.mxu0 0.0
    %2324 = vmatpush1.msra.mxu0 0.0
    %2325 = vmatprep.subr.mxu0 0.0
    %2326 = vmatpush1.msra.mxu0 0.0
    %2327 = vmatprep.subr.mxu0 0.0
    %2328 = vmatpush1.msra.mxu0 0.0
    %2329 = vmatprep.subr.mxu0 0.0
    %2330 = vmatpush1.msra.mxu0 0.0
    %2331 = vmatprep.subr.mxu0 0.0
    %2332 = vmatpush1.msra.mxu0 0.0
    %2333 = vmatprep.subr.mxu0 0.0
    %2334 = vmatpush1.msra.mxu0 0.0
    %2335 = vmatprep.subr.mxu0 0.0
    %2336 = vmatpush1.msra.mxu0 0.0
    %2337 = vmatprep.subr.mxu0 0.0
    %2338 = vmatpush1.msra.mxu0 0.0
    %2339 = vmatprep.subr.mxu0 0.0
    %2340 = vmatpush1.msra.mxu0 0.0
    %2341 = vmatprep.subr.mxu0 0.0
    %2342 = vmatpush1.msra.mxu0 0.0
    %2343 = vmatprep.subr.mxu0 0.0
    %2344 = vmatpush1.msra.mxu0 0.0
    %2345 = vmatprep.subr.mxu0 0.0
    %2346 = vmatpush1.msra.mxu0 0.0
    %2347 = vmatprep.subr.mxu0 0.0
    %2348 = vmatpush1.msra.mxu0 0.0
    %2349 = vmatprep.subr.mxu0 0.0
    %2350 = vmatpush1.msra.mxu0 0.0
    %2351 = vmatprep.subr.mxu0 0.0
    %2352 = vmatpush1.msra.mxu0 0.0
    %2353 = vmatprep.subr.mxu0 0.0
    %2354 = vmatpush1.msra.mxu0 0.0
    %2355 = vmatprep.subr.mxu0 0.0
    %2356 = vmatpush1.msra.mxu0 0.0
    %2357 = vmatprep.subr.mxu0 0.0
    %2358 = vmatpush1.msra.mxu0 0.0
    %2359 = vmatprep.subr.mxu0 0.0
    %2360 = vmatpush1.msra.mxu0 0.0
    %2361 = vmatprep.subr.mxu0 0.0
    %2362 = vmatpush1.msra.mxu0 0.0
    %2363 = vmatprep.subr.mxu0 0.0
    %2364 = vmatpush1.msra.mxu0 0.0
    %2365 = vmatprep.subr.mxu0 0.0
    %2366 = vmatpush1.msra.mxu0 0.0
    %2367 = vmatprep.subr.mxu0 0.0
    %2368 = vmatpush1.msra.mxu0 0.0
    %2369 = vmatprep.mubr.f32.mxu0 0.0
    %2370 = vmatmul.mubr.f32.gmra.mrb[0].mxu0 %v2290
    %v2371 = vpop.f32.mrb[0].mxu0
    %v2372 = vadd.f32 0.0, %v2371
    %v2373 = vpop.f32.mrb[0].mxu0
    %v2374 = vadd.f32 0.0, %v2373
    %2375 = vmatprep.mubr.f32.mxu0 0.0
    %2376 = vmatmul.mubr.f32.gmra.mrb[0].mxu0 %v2293
    %v2377 = vpop.f32.mrb[0].mxu0
    %v2378 = vadd.f32 0.0, %v2377
    %v2379 = vpop.f32.mrb[0].mxu0
    %v2380 = vadd.f32 0.0, %v2379
    %2381 = vdwg.mxu0
    %2382 = vmatprep.subr.mxu0 %v2301
    %2383 = vmatpush1.msra.mxu0 %v2299
    %2384 = vmatprep.subr.mxu0 0.0
    %2385 = vmatpush1.msra.mxu0 0.0
    %2386 = vmatprep.subr.mxu0 0.0
    %2387 = vmatpush1.msra.mxu0 0.0
    %2388 = vmatprep.subr.mxu0 0.0
    %2389 = vmatpush1.msra.mxu0 0.0
    %2390 = vmatprep.subr.mxu0 0.0
    %2391 = vmatpush1.msra.mxu0 0.0
    %2392 = vmatprep.subr.mxu0 0.0
    %2393 = vmatpush1.msra.mxu0 0.0
    %2394 = vmatprep.subr.mxu0 0.0
    %2395 = vmatpush1.msra.mxu0 0.0
    %2396 = vmatprep.subr.mxu0 0.0
    %2397 = vmatpush1.msra.mxu0 0.0
    %2398 = vmatprep.subr.mxu0 0.0
    %2399 = vmatpush1.msra.mxu0 0.0
    %2400 = vmatprep.subr.mxu0 0.0
    %2401 = vmatpush1.msra.mxu0 0.0
    %2402 = vmatprep.subr.mxu0 0.0
    %2403 = vmatpush1.msra.mxu0 0.0
    %2404 = vmatprep.subr.mxu0 0.0
    %2405 = vmatpush1.msra.mxu0 0.0
    %2406 = vmatprep.subr.mxu0 0.0
    %2407 = vmatpush1.msra.mxu0 0.0
    %2408 = vmatprep.subr.mxu0 0.0
    %2409 = vmatpush1.msra.mxu0 0.0
    %2410 = vmatprep.subr.mxu0 0.0
    %2411 = vmatpush1.msra.mxu0 0.0
    %2412 = vmatprep.subr.mxu0 0.0
    %2413 = vmatpush1.msra.mxu0 0.0
    %2414 = vmatprep.subr.mxu0 0.0
    %2415 = vmatpush1.msra.mxu0 0.0
    %2416 = vmatprep.subr.mxu0 0.0
    %2417 = vmatpush1.msra.mxu0 0.0
    %2418 = vmatprep.subr.mxu0 0.0
    %2419 = vmatpush1.msra.mxu0 0.0
    %2420 = vmatprep.subr.mxu0 0.0
    %2421 = vmatpush1.msra.mxu0 0.0
    %2422 = vmatprep.subr.mxu0 0.0
    %2423 = vmatpush1.msra.mxu0 0.0
    %2424 = vmatprep.subr.mxu0 0.0
    %2425 = vmatpush1.msra.mxu0 0.0
    %2426 = vmatprep.subr.mxu0 0.0
    %2427 = vmatpush1.msra.mxu0 0.0
    %2428 = vmatprep.subr.mxu0 0.0
    %2429 = vmatpush1.msra.mxu0 0.0
    %2430 = vmatprep.subr.mxu0 0.0
    %2431 = vmatpush1.msra.mxu0 0.0
    %2432 = vmatprep.subr.mxu0 0.0
    %2433 = vmatpush1.msra.mxu0 0.0
    %2434 = vmatprep.subr.mxu0 0.0
    %2435 = vmatpush1.msra.mxu0 0.0
    %2436 = vmatprep.subr.mxu0 0.0
    %2437 = vmatpush1.msra.mxu0 0.0
    %2438 = vmatprep.subr.mxu0 0.0
    %2439 = vmatpush1.msra.mxu0 0.0
    %2440 = vmatprep.subr.mxu0 0.0
    %2441 = vmatpush1.msra.mxu0 0.0
    %2442 = vmatprep.subr.mxu0 0.0
    %2443 = vmatpush1.msra.mxu0 0.0
    %2444 = vmatprep.subr.mxu0 0.0
    %2445 = vmatpush1.msra.mxu0 0.0
    %2446 = vmatprep.mubr.f32.mxu0 0.0
    %2447 = vmatmul.mubr.f32.gmra.mrb[0].mxu0 %v2290
    %v2448 = vpop.f32.mrb[0].mxu0
    %v2449 = vadd.f32 0.0, %v2448
    %v2450 = vpop.f32.mrb[0].mxu0
    %v2451 = vadd.f32 0.0, %v2450
    %2452 = vmatprep.mubr.f32.mxu0 0.0
    %2453 = vmatmul.mubr.f32.gmra.mrb[0].mxu0 %v2293
    %v2454 = vpop.f32.mrb[0].mxu0
    %v2455 = vadd.f32 0.0, %v2454
    %v2456 = vpop.f32.mrb[0].mxu0
    %v2457 = vadd.f32 0.0, %v2456
    %2458 = vdwg.mxu0
    %2459 = vmatprep.subr.mxu0 0.0
    %2460 = vmatpush1.msra.mxu0 %v2303
    %2461 = vmatprep.subr.mxu0 0.0
    %2462 = vmatpush1.msra.mxu0 0.0
    %2463 = vmatprep.subr.mxu0 0.0
    %2464 = vmatpush1.msra.mxu0 0.0
    %2465 = vmatprep.subr.mxu0 0.0
    %2466 = vmatpush1.msra.mxu0 0.0
    %2467 = vmatprep.subr.mxu0 0.0
    %2468 = vmatpush1.msra.mxu0 0.0
    %2469 = vmatprep.subr.mxu0 0.0
    %2470 = vmatpush1.msra.mxu0 0.0
    %2471 = vmatprep.subr.mxu0 0.0
    %2472 = vmatpush1.msra.mxu0 0.0
    %2473 = vmatprep.subr.mxu0 0.0
    %2474 = vmatpush1.msra.mxu0 0.0
    %2475 = vmatprep.subr.mxu0 0.0
    %2476 = vmatpush1.msra.mxu0 0.0
    %2477 = vmatprep.subr.mxu0 0.0
    %2478 = vmatpush1.msra.mxu0 0.0
    %2479 = vmatprep.subr.mxu0 0.0
    %2480 = vmatpush1.msra.mxu0 0.0
    %2481 = vmatprep.subr.mxu0 0.0
    %2482 = vmatpush1.msra.mxu0 0.0
    %2483 = vmatprep.subr.mxu0 0.0
    %2484 = vmatpush1.msra.mxu0 0.0
    %2485 = vmatprep.subr.mxu0 0.0
    %2486 = vmatpush1.msra.mxu0 0.0
    %2487 = vmatprep.subr.mxu0 0.0
    %2488 = vmatpush1.msra.mxu0 0.0
    %2489 = vmatprep.subr.mxu0 0.0
    %2490 = vmatpush1.msra.mxu0 0.0
    %2491 = vmatprep.subr.mxu0 0.0
    %2492 = vmatpush1.msra.mxu0 0.0
    %2493 = vmatprep.subr.mxu0 0.0
    %2494 = vmatpush1.msra.mxu0 0.0
    %2495 = vmatprep.subr.mxu0 0.0
    %2496 = vmatpush1.msra.mxu0 0.0
    %2497 = vmatprep.subr.mxu0 0.0
    %2498 = vmatpush1.msra.mxu0 0.0
    %2499 = vmatprep.subr.mxu0 0.0
    %2500 = vmatpush1.msra.mxu0 0.0
    %2501 = vmatprep.subr.mxu0 0.0
    %2502 = vmatpush1.msra.mxu0 0.0
    %2503 = vmatprep.subr.mxu0 0.0
    %2504 = vmatpush1.msra.mxu0 0.0
    %2505 = vmatprep.subr.mxu0 0.0
    %2506 = vmatpush1.msra.mxu0 0.0
    %2507 = vmatprep.subr.mxu0 0.0
    %2508 = vmatpush1.msra.mxu0 0.0
    %2509 = vmatprep.subr.mxu0 0.0
    %2510 = vmatpush1.msra.mxu0 0.0
    %2511 = vmatprep.subr.mxu0 0.0
    %2512 = vmatpush1.msra.mxu0 0.0
    %2513 = vmatprep.subr.mxu0 0.0
    %2514 = vmatpush1.msra.mxu0 0.0
    %2515 = vmatprep.subr.mxu0 0.0
    %2516 = vmatpush1.msra.mxu0 0.0
    %2517 = vmatprep.subr.mxu0 0.0
    %2518 = vmatpush1.msra.mxu0 0.0
    %2519 = vmatprep.subr.mxu0 0.0
    %2520 = vmatpush1.msra.mxu0 0.0
    %2521 = vmatprep.subr.mxu0 0.0
    %2522 = vmatpush1.msra.mxu0 0.0
    %2523 = vmatprep.mubr.f32.mxu0 0.0
    %2524 = vmatmul.mubr.f32.gmra.mrb[0].mxu0 %v2290
    %v2525 = vpop.f32.mrb[0].mxu0
    %v2526 = vadd.f32 0.0, %v2525
    %v2527 = vpop.f32.mrb[0].mxu0
    %2528 = vmatprep.mubr.f32.mxu0 0.0
    %2529 = vmatmul.mubr.f32.gmra.mrb[0].mxu0 %v2293
    %v2530 = vpop.f32.mrb[0].mxu0
    %v2531 = vadd.f32 0.0, %v2530
    %v2532 = vpop.f32.mrb[0].mxu0
    %2533 = vdwg.mxu0
    %v2534 = vadd.f32 %v2258, %v2372
    %v2535 = vadd.f32 %v2259, %v2374
    %v2536 = vadd.f32 %v2260, %v2449
    %v2537 = vadd.f32 %v2261, %v2451
    %v2538 = vadd.f32 %v2262, %v2526
    %v2539 = vadd.f32 %v2263, %v2378
    %v2540 = vadd.f32 %v2264, %v2380
    %v2541 = vadd.f32 %v2265, %v2455
    %v2542 = vadd.f32 %v2266, %v2457
    %v2543 = vadd.f32 %v2267, %v2531
    %v2544 = vmax.f32 %v2534, 0.0
    %v2545 = vmax.f32 %v2535, 0.0
    %v2546 = vmax.f32 %v2536, 0.0
    %v2547 = vmax.f32 %v2537, 0.0
    %v2548 = vmax.f32 %v2538, 0.0
    %v2549 = vmax.f32 %v2539, 0.0
    %v2550 = vmax.f32 %v2540, 0.0
    %v2551 = vmax.f32 %v2541, 0.0
    %v2552 = vmax.f32 %v2542, 0.0
    %v2553 = vmax.f32 %v2543, 0.0
    %2564 = vrot.lane.b32.xlu0 %v2544, 127
    %v2565 = vpop.permute.xlu0 %2564
    %2566 = vrot.lane.b32.xlu0 %v2545, 127
    %v2567 = vpop.permute.xlu0 %2566
    %2568 = vrot.lane.b32.xlu0 %v2546, 127
    %v2569 = vpop.permute.xlu0 %2568
    %2570 = vrot.lane.b32.xlu0 %v2547, 127
    %v2571 = vpop.permute.xlu0 %2570
    %2572 = vrot.lane.b32.xlu0 %v2548, 127
    %v2573 = vpop.permute.xlu0 %2572
    %2574 = vrot.lane.b32.xlu0 %v2549, 127
    %v2575 = vpop.permute.xlu0 %2574
    %2576 = vrot.lane.b32.xlu0 %v2550, 127
    %v2577 = vpop.permute.xlu0 %2576
    %2578 = vrot.lane.b32.xlu0 %v2551, 127
    %v2579 = vpop.permute.xlu0 %2578
    %2580 = vrot.lane.b32.xlu0 %v2552, 127
    %v2581 = vpop.permute.xlu0 %2580
    %2582 = vrot.lane.b32.xlu0 %v2553, 127
    %v2583 = vpop.permute.xlu0 %2582
    %v2584 = vsel %vm351, %v2565, %v2567
    %v2585 = vsel %vm351, %v2567, %v2569
    %v2586 = vsel %vm351, %v2569, %v2571
    %v2587 = vsel %vm351, %v2571, %v2573
    %v2588 = vsel %vm351, %v2575, %v2577
    %v2589 = vsel %vm351, %v2577, %v2579
    %v2590 = vsel %vm351, %v2579, %v2581
    %v2591 = vsel %vm351, %v2581, %v2583
    %v2600 = vmax.f32 %v2544, %v2584
    %v2601 = vmax.f32 %v2545, %v2585
    %v2602 = vmax.f32 %v2546, %v2586
    %v2603 = vmax.f32 %v2547, %v2587
    %v2604 = vmax.f32 %v2549, %v2588
    %v2605 = vmax.f32 %v2550, %v2589
    %v2606 = vmax.f32 %v2551, %v2590
    %v2607 = vmax.f32 %v2552, %v2591
    %v2610 = vmax.f32 %v2548, %v2573
    %v2611 = vmax.f32 %v2553, %v2583
    %2622 = vrot.lane.b32.xlu0 %v2600, 106
    %v2623 = vpop.permute.xlu0 %2622
    %2624 = vrot.lane.b32.xlu0 %v2601, 106
    %v2625 = vpop.permute.xlu0 %2624
    %2626 = vrot.lane.b32.xlu0 %v2602, 106
    %v2627 = vpop.permute.xlu0 %2626
    %2628 = vrot.lane.b32.xlu0 %v2603, 106
    %v2629 = vpop.permute.xlu0 %2628
    %2630 = vrot.lane.b32.xlu0 %v2610, 106
    %v2631 = vpop.permute.xlu0 %2630
    %2632 = vrot.lane.b32.xlu0 %v2604, 106
    %v2633 = vpop.permute.xlu0 %2632
    %2634 = vrot.lane.b32.xlu0 %v2605, 106
    %v2635 = vpop.permute.xlu0 %2634
    %2636 = vrot.lane.b32.xlu0 %v2606, 106
    %v2637 = vpop.permute.xlu0 %2636
    %2638 = vrot.lane.b32.xlu0 %v2607, 106
    %v2639 = vpop.permute.xlu0 %2638
    %2640 = vrot.lane.b32.xlu0 %v2611, 106
    %v2641 = vpop.permute.xlu0 %2640
    %v2642 = vsel %vm903, %v2623, %v2625
    %v2643 = vsel %vm903, %v2625, %v2627
    %v2644 = vsel %vm903, %v2627, %v2629
    %v2645 = vsel %vm903, %v2629, %v2631
    %v2646 = vsel %vm903, %v2633, %v2635
    %v2647 = vsel %vm903, %v2635, %v2637
    %v2648 = vsel %vm903, %v2637, %v2639
    %v2649 = vsel %vm903, %v2639, %v2641
    %v2658 = vmax.f32 %v2600, %v2642
    %v2659 = vmax.f32 %v2601, %v2643
    %v2660 = vmax.f32 %v2602, %v2644
    %v2661 = vmax.f32 %v2603, %v2645
    %v2662 = vmax.f32 %v2604, %v2646
    %v2663 = vmax.f32 %v2605, %v2647
    %v2664 = vmax.f32 %v2606, %v2648
    %v2665 = vmax.f32 %v2607, %v2649
    %v2666 = vld [vmem:[%s3] sm:$0xff]
    %v2667 = vld [vmem:[%s3 + $0x8] sm:$0xff]
    %v2668 = vld [vmem:[%s3 + $0x10] sm:$0xff]
    %v2669 = vld [vmem:[%s3 + $0x18] sm:$0xff]
    %v2670 = vld [vmem:[%s3 + $0x20] sm:$0xff]
    %v2671 = vld [vmem:[%s3 + $0x28] sm:$0xff]
    %v2672 = vld [vmem:[%s3 + $0x30] sm:$0xff]
    %v2673 = vld [vmem:[%s3 + $0x38] sm:$0xff]
    %v2674 = vld [vmem:[%s3 + $0x40] sm:$0xff]
    %v2675 = vld [vmem:[%s3 + $0x48] sm:$0xff]
    %v2676 = vld [vmem:[%s3 + $0x50] sm:$0xff]
    %v2677 = vld [vmem:[%s3 + $0x58] sm:$0xff]
    %v2678 = vld [vmem:[%s3 + $0x60] sm:$0xff]
    %v2679 = vld [vmem:[%s3 + $0x68] sm:$0xff]
    %v2680 = vld [vmem:[%s3 + $0x70] sm:$0xff]
    %v2681 = vld [vmem:[%s3 + $0x78] sm:$0xff]
    %v2682 = vld [vmem:[%s3 + $0x80] sm:$0xff]
    %v2683 = vld [vmem:[%s3 + $0x88] sm:$0xff]
    %v2684 = vld [vmem:[%s3 + $0x90] sm:$0xff]
    %v2685 = vld [vmem:[%s3 + $0x98] sm:$0xff]
    %v2686 = vld [vmem:[%s3 + $0xa0] sm:$0xff]
    %v2687 = vld [vmem:[%s3 + $0xa8] sm:$0xff]
    %v2688 = vld [vmem:[%s3 + $0xb0] sm:$0xff]
    %v2689 = vld [vmem:[%s3 + $0xb8] sm:$0xff]
    %v2690 = vld [vmem:[%s3 + $0xc0] sm:$0xff]
    %v2691 = vld [vmem:[%s3 + $0xc8] sm:$0xff]
    %v2692 = vld [vmem:[%s3 + $0xd0] sm:$0xff]
    %v2693 = vld [vmem:[%s3 + $0xd8] sm:$0xff]
    %v2694 = vld [vmem:[%s3 + $0xe0] sm:$0xff]
    %v2695 = vld [vmem:[%s3 + $0xe8] sm:$0xff]
    %v2696 = vld [vmem:[%s3 + $0xf0] sm:$0xff]
    %v2697 = vld [vmem:[%s3 + $0xf8] sm:$0xff]
    %v2698 = vld [vmem:[%s3 + $0x100] sm:$0xff]
    %v2699 = vld [vmem:[%s3 + $0x108] sm:$0xff]
    %v2700 = vld [vmem:[%s3 + $0x110] sm:$0xff]
    %v2701 = vld [vmem:[%s3 + $0x118] sm:$0xff]
    %v2702 = vld [vmem:[%s3 + $0x120] sm:$0xff]
    %v2703 = vld [vmem:[%s3 + $0x128] sm:$0xff]
    %v2704 = vld [vmem:[%s3 + $0x130] sm:$0xff]
    %v2705 = vld [vmem:[%s3 + $0x138] sm:$0xff]
    %v2706 = vld [vmem:[%s3 + $0x140] sm:$0xff]
    %v2707 = vld [vmem:[%s3 + $0x148] sm:$0xff]
    %v2708 = vld [vmem:[%s3 + $0x150] sm:$0xff]
    %v2709 = vld [vmem:[%s3 + $0x158] sm:$0xff]
    %v2710 = vld [vmem:[%s3 + $0x160] sm:$0xff]
    %v2711 = vld [vmem:[%s3 + $0x168] sm:$0xff]
    %v2712 = vld [vmem:[%s3 + $0x170] sm:$0xff]
    %v2713 = vld [vmem:[%s3 + $0x178] sm:$0xff]
    %v2714 = vld [vmem:[%s3 + $0x180] sm:$0xff]
    %v2715 = vld [vmem:[%s3 + $0x188] sm:$0xff]
    %v2716 = vld [vmem:[%s3 + $0x190] sm:$0xff]
    %v2717 = vld [vmem:[%s3 + $0x198] sm:$0xff]
    %v2718 = vld [vmem:[%s3 + $0x1a0] sm:$0xff]
    %v2719 = vld [vmem:[%s3 + $0x1a8] sm:$0xff]
    %v2720 = vld [vmem:[%s3 + $0x1b0] sm:$0xff]
    %v2721 = vld [vmem:[%s3 + $0x1b8] sm:$0xff]
    %v2722 = vld [vmem:[%s3 + $0x1c0] sm:$0xff]
    %v2723 = vld [vmem:[%s3 + $0x1c8] sm:$0xff]
    %v2724 = vld [vmem:[%s3 + $0x1d0] sm:$0xff]
    %v2725 = vld [vmem:[%s3 + $0x1d8] sm:$0xff]
    %v2726 = vld [vmem:[%s3 + $0x1e0] sm:$0xff]
    %v2727 = vld [vmem:[%s3 + $0x1e8] sm:$0xff]
    %v2728 = vld [vmem:[%s3 + $0x1f0] sm:$0xff]
    %v2729 = vld [vmem:[%s3 + $0x1f8] sm:$0xff]
    %2730 = vmatprep.subr.mxu0 0.0
    %2731 = vmatpush1.msra.mxu0 %v2666
    %2732 = vmatprep.subr.mxu0 0.0
    %2733 = vmatpush1.msra.mxu0 %v2667
    %2734 = vmatprep.subr.mxu0 0.0
    %2735 = vmatpush1.msra.mxu0 %v2668
    %2736 = vmatprep.subr.mxu0 0.0
    %2737 = vmatpush1.msra.mxu0 %v2669
    %2738 = vmatprep.subr.mxu0 0.0
    %2739 = vmatpush1.msra.mxu0 %v2670
    %2740 = vmatprep.subr.mxu0 0.0
    %2741 = vmatpush1.msra.mxu0 %v2671
    %2742 = vmatprep.subr.mxu0 0.0
    %2743 = vmatpush1.msra.mxu0 %v2672
    %2744 = vmatprep.subr.mxu0 0.0
    %2745 = vmatpush1.msra.mxu0 %v2673
    %2746 = vmatprep.subr.mxu0 0.0
    %2747 = vmatpush1.msra.mxu0 %v2674
    %2748 = vmatprep.subr.mxu0 0.0
    %2749 = vmatpush1.msra.mxu0 %v2675
    %2750 = vmatprep.subr.mxu0 0.0
    %2751 = vmatpush1.msra.mxu0 %v2676
    %2752 = vmatprep.subr.mxu0 0.0
    %2753 = vmatpush1.msra.mxu0 %v2677
    %2754 = vmatprep.subr.mxu0 0.0
    %2755 = vmatpush1.msra.mxu0 %v2678
    %2756 = vmatprep.subr.mxu0 0.0
    %2757 = vmatpush1.msra.mxu0 %v2679
    %2758 = vmatprep.subr.mxu0 0.0
    %2759 = vmatpush1.msra.mxu0 %v2680
    %2760 = vmatprep.subr.mxu0 0.0
    %2761 = vmatpush1.msra.mxu0 %v2681
    %2762 = vmatprep.subr.mxu0 0.0
    %2763 = vmatpush1.msra.mxu0 %v2682
    %2764 = vmatprep.subr.mxu0 0.0
    %2765 = vmatpush1.msra.mxu0 %v2683
    %2766 = vmatprep.subr.mxu0 0.0
    %2767 = vmatpush1.msra.mxu0 %v2684
    %2768 = vmatprep.subr.mxu0 0.0
    %2769 = vmatpush1.msra.mxu0 %v2685
    %2770 = vmatprep.subr.mxu0 0.0
    %2771 = vmatpush1.msra.mxu0 %v2686
    %2772 = vmatprep.subr.mxu0 0.0
    %2773 = vmatpush1.msra.mxu0 %v2687
    %2774 = vmatprep.subr.mxu0 0.0
    %2775 = vmatpush1.msra.mxu0 %v2688
    %2776 = vmatprep.subr.mxu0 0.0
    %2777 = vmatpush1.msra.mxu0 %v2689
    %2778 = vmatprep.subr.mxu0 0.0
    %2779 = vmatpush1.msra.mxu0 %v2690
    %2780 = vmatprep.subr.mxu0 0.0
    %2781 = vmatpush1.msra.mxu0 %v2691
    %2782 = vmatprep.subr.mxu0 0.0
    %2783 = vmatpush1.msra.mxu0 %v2692
    %2784 = vmatprep.subr.mxu0 0.0
    %2785 = vmatpush1.msra.mxu0 %v2693
    %2786 = vmatprep.subr.mxu0 0.0
    %2787 = vmatpush1.msra.mxu0 %v2694
    %2788 = vmatprep.subr.mxu0 0.0
    %2789 = vmatpush1.msra.mxu0 %v2695
    %2790 = vmatprep.subr.mxu0 0.0
    %2791 = vmatpush1.msra.mxu0 %v2696
    %2792 = vmatprep.subr.mxu0 0.0
    %2793 = vmatpush1.msra.mxu0 %v2697
    %2794 = vmatprep.mubr.f32.mxu0 %v2659
    %2795 = vmatmul.mubr.f32.gmra.mrb[0].mxu0 %v2658
    %v2796 = vpop.f32.mrb[0].mxu0
    %v2797 = vadd.f32 0.0, %v2796
    %v2798 = vpop.f32.mrb[0].mxu0
    %2799 = vmatprep.mubr.f32.mxu0 %v2663
    %2800 = vmatmul.mubr.f32.gmra.mrb[0].mxu0 %v2662
    %v2801 = vpop.f32.mrb[0].mxu0
    %v2802 = vadd.f32 0.0, %v2801
    %v2803 = vpop.f32.mrb[0].mxu0
    %2804 = vdwg.mxu0
    %2805 = vmatprep.subr.mxu0 0.0
    %2806 = vmatpush1.msra.mxu0 %v2698
    %2807 = vmatprep.subr.mxu0 0.0
    %2808 = vmatpush1.msra.mxu0 %v2699
    %2809 = vmatprep.subr.mxu0 0.0
    %2810 = vmatpush1.msra.mxu0 %v2700
    %2811 = vmatprep.subr.mxu0 0.0
    %2812 = vmatpush1.msra.mxu0 %v2701
    %2813 = vmatprep.subr.mxu0 0.0
    %2814 = vmatpush1.msra.mxu0 %v2702
    %2815 = vmatprep.subr.mxu0 0.0
    %2816 = vmatpush1.msra.mxu0 %v2703
    %2817 = vmatprep.subr.mxu0 0.0
    %2818 = vmatpush1.msra.mxu0 %v2704
    %2819 = vmatprep.subr.mxu0 0.0
    %2820 = vmatpush1.msra.mxu0 %v2705
    %2821 = vmatprep.subr.mxu0 0.0
    %2822 = vmatpush1.msra.mxu0 %v2706
    %2823 = vmatprep.subr.mxu0 0.0
    %2824 = vmatpush1.msra.mxu0 %v2707
    %2825 = vmatprep.subr.mxu0 0.0
    %2826 = vmatpush1.msra.mxu0 %v2708
    %2827 = vmatprep.subr.mxu0 0.0
    %2828 = vmatpush1.msra.mxu0 %v2709
    %2829 = vmatprep.subr.mxu0 0.0
    %2830 = vmatpush1.msra.mxu0 %v2710
    %2831 = vmatprep.subr.mxu0 0.0
    %2832 = vmatpush1.msra.mxu0 %v2711
    %2833 = vmatprep.subr.mxu0 0.0
    %2834 = vmatpush1.msra.mxu0 %v2712
    %2835 = vmatprep.subr.mxu0 0.0
    %2836 = vmatpush1.msra.mxu0 %v2713
    %2837 = vmatprep.subr.mxu0 0.0
    %2838 = vmatpush1.msra.mxu0 %v2714
    %2839 = vmatprep.subr.mxu0 0.0
    %2840 = vmatpush1.msra.mxu0 %v2715
    %2841 = vmatprep.subr.mxu0 0.0
    %2842 = vmatpush1.msra.mxu0 %v2716
    %2843 = vmatprep.subr.mxu0 0.0
    %2844 = vmatpush1.msra.mxu0 %v2717
    %2845 = vmatprep.subr.mxu0 0.0
    %2846 = vmatpush1.msra.mxu0 %v2718
    %2847 = vmatprep.subr.mxu0 0.0
    %2848 = vmatpush1.msra.mxu0 %v2719
    %2849 = vmatprep.subr.mxu0 0.0
    %2850 = vmatpush1.msra.mxu0 %v2720
    %2851 = vmatprep.subr.mxu0 0.0
    %2852 = vmatpush1.msra.mxu0 %v2721
    %2853 = vmatprep.subr.mxu0 0.0
    %2854 = vmatpush1.msra.mxu0 %v2722
    %2855 = vmatprep.subr.mxu0 0.0
    %2856 = vmatpush1.msra.mxu0 %v2723
    %2857 = vmatprep.subr.mxu0 0.0
    %2858 = vmatpush1.msra.mxu0 %v2724
    %2859 = vmatprep.subr.mxu0 0.0
    %2860 = vmatpush1.msra.mxu0 %v2725
    %2861 = vmatprep.subr.mxu0 0.0
    %2862 = vmatpush1.msra.mxu0 %v2726
    %2863 = vmatprep.subr.mxu0 0.0
    %2864 = vmatpush1.msra.mxu0 %v2727
    %2865 = vmatprep.subr.mxu0 0.0
    %2866 = vmatpush1.msra.mxu0 %v2728
    %2867 = vmatprep.subr.mxu0 0.0
    %2868 = vmatpush1.msra.mxu0 %v2729
    %2869 = vmatprep.mubr.f32.mxu0 %v2661
    %2870 = vmatmul.mubr.f32.gmra.mrb[0].mxu0 %v2660
    %v2871 = vpop.f32.mrb[0].mxu0
    %v2872 = vadd.f32 %v2797, %v2871
    %v2873 = vpop.f32.mrb[0].mxu0
    %2874 = vmatprep.mubr.f32.mxu0 %v2665
    %2875 = vmatmul.mubr.f32.gmra.mrb[0].mxu0 %v2664
    %v2876 = vpop.f32.mrb[0].mxu0
    %v2877 = vadd.f32 %v2802, %v2876
    %v2878 = vpop.f32.mrb[0].mxu0
    %2879 = vdwg.mxu0
    %v2880 = vld [vmem:[%s6] sm:$0x1]
    %v2882 = vlaneseq
    %v2883 = vshrl.u32 %v2882, 7
    %v2884 = vsub.s32 0, %v2883
    %v2885 = vrot.slane %v2880, %v2884
    %v2887 = vld [vmem:[%s4] sm:$0x7]
    %vm2888 = vcmask 97280
    %v2890 = vsel %vm2888, %v2887, 0
    %vm2892 = vcmask 1043456
    %v2894 = vsel %vm2892, %v2877, 0
    %2896 = vmatprep.subr.mxu0 0.0
    %2897 = vmatpush1.msra.mxu0 %v2872
    %2898 = vmatprep.subr.mxu0 0.0
    %2899 = vmatpush1.msra.mxu0 %v2894
    %2900 = vmatprep.subr.mxu0 0.0
    %2901 = vmatpush1.msra.mxu0 0.0
    %2902 = vmatprep.subr.mxu0 0.0
    %2903 = vmatpush1.msra.mxu0 0.0
    %2904 = vmatprep.subr.mxu0 0.0
    %2905 = vmatpush1.msra.mxu0 0.0
    %2906 = vmatprep.subr.mxu0 0.0
    %2907 = vmatpush1.msra.mxu0 0.0
    %2908 = vmatprep.subr.mxu0 0.0
    %2909 = vmatpush1.msra.mxu0 0.0
    %2910 = vmatprep.subr.mxu0 0.0
    %2911 = vmatpush1.msra.mxu0 0.0
    %2912 = vmatprep.subr.mxu0 0.0
    %2913 = vmatpush1.msra.mxu0 0.0
    %2914 = vmatprep.subr.mxu0 0.0
    %2915 = vmatpush1.msra.mxu0 0.0
    %2916 = vmatprep.subr.mxu0 0.0
    %2917 = vmatpush1.msra.mxu0 0.0
    %2918 = vmatprep.subr.mxu0 0.0
    %2919 = vmatpush1.msra.mxu0 0.0
    %2920 = vmatprep.subr.mxu0 0.0
    %2921 = vmatpush1.msra.mxu0 0.0
    %2922 = vmatprep.subr.mxu0 0.0
    %2923 = vmatpush1.msra.mxu0 0.0
    %2924 = vmatprep.subr.mxu0 0.0
    %2925 = vmatpush1.msra.mxu0 0.0
    %2926 = vmatprep.subr.mxu0 0.0
    %2927 = vmatpush1.msra.mxu0 0.0
    %2928 = vmatprep.subr.mxu0 0.0
    %2929 = vmatpush1.msra.mxu0 0.0
    %2930 = vmatprep.subr.mxu0 0.0
    %2931 = vmatpush1.msra.mxu0 0.0
    %2932 = vmatprep.subr.mxu0 0.0
    %2933 = vmatpush1.msra.mxu0 0.0
    %2934 = vmatprep.subr.mxu0 0.0
    %2935 = vmatpush1.msra.mxu0 0.0
    %2936 = vmatprep.subr.mxu0 0.0
    %2937 = vmatpush1.msra.mxu0 0.0
    %2938 = vmatprep.subr.mxu0 0.0
    %2939 = vmatpush1.msra.mxu0 0.0
    %2940 = vmatprep.subr.mxu0 0.0
    %2941 = vmatpush1.msra.mxu0 0.0
    %2942 = vmatprep.subr.mxu0 0.0
    %2943 = vmatpush1.msra.mxu0 0.0
    %2944 = vmatprep.subr.mxu0 0.0
    %2945 = vmatpush1.msra.mxu0 0.0
    %2946 = vmatprep.subr.mxu0 0.0
    %2947 = vmatpush1.msra.mxu0 0.0
    %2948 = vmatprep.subr.mxu0 0.0
    %2949 = vmatpush1.msra.mxu0 0.0
    %2950 = vmatprep.subr.mxu0 0.0
    %2951 = vmatpush1.msra.mxu0 0.0
    %2952 = vmatprep.subr.mxu0 0.0
    %2953 = vmatpush1.msra.mxu0 0.0
    %2954 = vmatprep.subr.mxu0 0.0
    %2955 = vmatpush1.msra.mxu0 0.0
    %2956 = vmatprep.subr.mxu0 0.0
    %2957 = vmatpush1.msra.mxu0 0.0
    %2958 = vmatprep.subr.mxu0 0.0
    %2959 = vmatpush1.msra.mxu0 0.0
    %2960 = vmatprep.mubr.f32.mxu0 0.0
    %2961 = vmatmul.mubr.f32.gmra.mrb[0].mxu0 %v2890
    %v2962 = vpop.f32.mrb[0].mxu0
    %v2963 = vadd.f32 0.0, %v2962
    %v2964 = vpop.f32.mrb[0].mxu0
    %2965 = vdwg.mxu0
    %v2966 = vld [vmem:[#allocation2] sm:$0xff]
    %v2967 = vld [vmem:[#allocation2 + $0x8] sm:$0xff]
    %v2968 = vld [vmem:[#allocation2 + $0x10] sm:$0xff]
    %v2969 = vld [vmem:[#allocation2 + $0x18] sm:$0xff]
    %v2970 = vld [vmem:[#allocation2 + $0x20] sm:$0xff]
    %v2971 = vld [vmem:[#allocation2 + $0x28] sm:$0xff]
    %v2972 = vld [vmem:[#allocation2 + $0x30] sm:$0xff]
    %v2973 = vld [vmem:[#allocation2 + $0x38] sm:$0xff]
    %v2974 = vld [vmem:[#allocation2 + $0x40] sm:$0xff]
    %v2975 = vld [vmem:[#allocation2 + $0x48] sm:$0xff]
    %v2976 = vld [vmem:[#allocation2 + $0x50] sm:$0xff]
    %v2977 = vld [vmem:[#allocation2 + $0x58] sm:$0xff]
    %v2978 = vld [vmem:[#allocation2 + $0x60] sm:$0xff]
    %v2979 = vld [vmem:[#allocation2 + $0x68] sm:$0xff]
    %v2980 = vld [vmem:[#allocation2 + $0x70] sm:$0xff]
    %v2981 = vld [vmem:[#allocation2 + $0x78] sm:$0xff]
    %2982 = vmatprep.subr.mxu0 0.0
    %2983 = vmatpush1.msra.mxu0 %v2966
    %2984 = vmatprep.subr.mxu0 0.0
    %2985 = vmatpush1.msra.mxu0 %v2967
    %2986 = vmatprep.subr.mxu0 0.0
    %2987 = vmatpush1.msra.mxu0 %v2968
    %2988 = vmatprep.subr.mxu0 0.0
    %2989 = vmatpush1.msra.mxu0 %v2969
    %2990 = vmatprep.subr.mxu0 0.0
    %2991 = vmatpush1.msra.mxu0 %v2970
    %2992 = vmatprep.subr.mxu0 0.0
    %2993 = vmatpush1.msra.mxu0 %v2971
    %2994 = vmatprep.subr.mxu0 0.0
    %2995 = vmatpush1.msra.mxu0 %v2972
    %2996 = vmatprep.subr.mxu0 0.0
    %2997 = vmatpush1.msra.mxu0 %v2973
    %2998 = vmatprep.subr.mxu0 0.0
    %2999 = vmatpush1.msra.mxu0 %v2974
    %3000 = vmatprep.subr.mxu0 0.0
    %3001 = vmatpush1.msra.mxu0 %v2975
    %3002 = vmatprep.subr.mxu0 0.0
    %3003 = vmatpush1.msra.mxu0 %v2976
    %3004 = vmatprep.subr.mxu0 0.0
    %3005 = vmatpush1.msra.mxu0 %v2977
    %3006 = vmatprep.subr.mxu0 0.0
    %3007 = vmatpush1.msra.mxu0 %v2978
    %3008 = vmatprep.subr.mxu0 0.0
    %3009 = vmatpush1.msra.mxu0 %v2979
    %3010 = vmatprep.subr.mxu0 0.0
    %3011 = vmatpush1.msra.mxu0 %v2980
    %3012 = vmatprep.subr.mxu0 0.0
    %3013 = vmatpush1.msra.mxu0 %v2981
    %3014 = vmatprep.subr.mxu0 0.0
    %3015 = vmatpush1.msra.mxu0 0.0
    %3016 = vmatprep.subr.mxu0 0.0
    %3017 = vmatpush1.msra.mxu0 0.0
    %3018 = vmatprep.subr.mxu0 0.0
    %3019 = vmatpush1.msra.mxu0 0.0
    %3020 = vmatprep.subr.mxu0 0.0
    %3021 = vmatpush1.msra.mxu0 0.0
    %3022 = vmatprep.subr.mxu0 0.0
    %3023 = vmatpush1.msra.mxu0 0.0
    %3024 = vmatprep.subr.mxu0 0.0
    %3025 = vmatpush1.msra.mxu0 0.0
    %3026 = vmatprep.subr.mxu0 0.0
    %3027 = vmatpush1.msra.mxu0 0.0
    %3028 = vmatprep.subr.mxu0 0.0
    %3029 = vmatpush1.msra.mxu0 0.0
    %3030 = vmatprep.subr.mxu0 0.0
    %3031 = vmatpush1.msra.mxu0 0.0
    %3032 = vmatprep.subr.mxu0 0.0
    %3033 = vmatpush1.msra.mxu0 0.0
    %3034 = vmatprep.subr.mxu0 0.0
    %3035 = vmatpush1.msra.mxu0 0.0
    %3036 = vmatprep.subr.mxu0 0.0
    %3037 = vmatpush1.msra.mxu0 0.0
    %3038 = vmatprep.subr.mxu0 0.0
    %3039 = vmatpush1.msra.mxu0 0.0
    %3040 = vmatprep.subr.mxu0 0.0
    %3041 = vmatpush1.msra.mxu0 0.0
    %3042 = vmatprep.subr.mxu0 0.0
    %3043 = vmatpush1.msra.mxu0 0.0
    %3044 = vmatprep.subr.mxu0 0.0
    %3045 = vmatpush1.msra.mxu0 0.0
    %3046 = vmatprep.mubr.f32.mxu0 0.0
    %3047 = vmatmul.mubr.f32.gmra.mrb[0].mxu0 %v2963
    %v3048 = vpop.f32.mrb[0].mxu0
    %v3049 = vadd.f32 0.0, %v3048
    %v3050 = vpop.f32.mrb[0].mxu0
    %3051 = vdwg.mxu0
    %v3052 = vadd.f32 %v2885, %v3049
    %s3053 = scalar_lea.vmem %s4, 4
    %v3054 = vld [vmem:[%s3053] sm:$0x7]
    %v3056 = vsel %vm2888, %v3054, 0
    %3058 = vmatprep.subr.mxu0 0.0
    %3059 = vmatpush1.msra.mxu0 %v2872
    %3060 = vmatprep.subr.mxu0 0.0
    %3061 = vmatpush1.msra.mxu0 %v2894
    %3062 = vmatprep.subr.mxu0 0.0
    %3063 = vmatpush1.msra.mxu0 0.0
    %3064 = vmatprep.subr.mxu0 0.0
    %3065 = vmatpush1.msra.mxu0 0.0
    %3066 = vmatprep.subr.mxu0 0.0
    %3067 = vmatpush1.msra.mxu0 0.0
    %3068 = vmatprep.subr.mxu0 0.0
    %3069 = vmatpush1.msra.mxu0 0.0
    %3070 = vmatprep.subr.mxu0 0.0
    %3071 = vmatpush1.msra.mxu0 0.0
    %3072 = vmatprep.subr.mxu0 0.0
    %3073 = vmatpush1.msra.mxu0 0.0
    %3074 = vmatprep.subr.mxu0 0.0
    %3075 = vmatpush1.msra.mxu0 0.0
    %3076 = vmatprep.subr.mxu0 0.0
    %3077 = vmatpush1.msra.mxu0 0.0
    %3078 = vmatprep.subr.mxu0 0.0
    %3079 = vmatpush1.msra.mxu0 0.0
    %3080 = vmatprep.subr.mxu0 0.0
    %3081 = vmatpush1.msra.mxu0 0.0
    %3082 = vmatprep.subr.mxu0 0.0
    %3083 = vmatpush1.msra.mxu0 0.0
    %3084 = vmatprep.subr.mxu0 0.0
    %3085 = vmatpush1.msra.mxu0 0.0
    %3086 = vmatprep.subr.mxu0 0.0
    %3087 = vmatpush1.msra.mxu0 0.0
    %3088 = vmatprep.subr.mxu0 0.0
    %3089 = vmatpush1.msra.mxu0 0.0
    %3090 = vmatprep.subr.mxu0 0.0
    %3091 = vmatpush1.msra.mxu0 0.0
    %3092 = vmatprep.subr.mxu0 0.0
    %3093 = vmatpush1.msra.mxu0 0.0
    %3094 = vmatprep.subr.mxu0 0.0
    %3095 = vmatpush1.msra.mxu0 0.0
    %3096 = vmatprep.subr.mxu0 0.0
    %3097 = vmatpush1.msra.mxu0 0.0
    %3098 = vmatprep.subr.mxu0 0.0
    %3099 = vmatpush1.msra.mxu0 0.0
    %3100 = vmatprep.subr.mxu0 0.0
    %3101 = vmatpush1.msra.mxu0 0.0
    %3102 = vmatprep.subr.mxu0 0.0
    %3103 = vmatpush1.msra.mxu0 0.0
    %3104 = vmatprep.subr.mxu0 0.0
    %3105 = vmatpush1.msra.mxu0 0.0
    %3106 = vmatprep.subr.mxu0 0.0
    %3107 = vmatpush1.msra.mxu0 0.0
    %3108 = vmatprep.subr.mxu0 0.0
    %3109 = vmatpush1.msra.mxu0 0.0
    %3110 = vmatprep.subr.mxu0 0.0
    %3111 = vmatpush1.msra.mxu0 0.0
    %3112 = vmatprep.subr.mxu0 0.0
    %3113 = vmatpush1.msra.mxu0 0.0
    %3114 = vmatprep.subr.mxu0 0.0
    %3115 = vmatpush1.msra.mxu0 0.0
    %3116 = vmatprep.subr.mxu0 0.0
    %3117 = vmatpush1.msra.mxu0 0.0
    %3118 = vmatprep.subr.mxu0 0.0
    %3119 = vmatpush1.msra.mxu0 0.0
    %3120 = vmatprep.subr.mxu0 0.0
    %3121 = vmatpush1.msra.mxu0 0.0
    %3122 = vmatprep.mubr.f32.mxu0 0.0
    %3123 = vmatmul.mubr.f32.gmra.mrb[0].mxu0 %v3056
    %v3124 = vpop.f32.mrb[0].mxu0
    %v3125 = vadd.f32 0.0, %v3124
    %v3126 = vpop.f32.mrb[0].mxu0
    %3127 = vdwg.mxu0
    %s3128 = scalar_lea.vmem [#allocation2], 128
    %v3129 = vld [vmem:[%s3128] sm:$0xff]
    %v3130 = vld [vmem:[%s3128 + $0x8] sm:$0xff]
    %v3131 = vld [vmem:[%s3128 + $0x10] sm:$0xff]
    %v3132 = vld [vmem:[%s3128 + $0x18] sm:$0xff]
    %v3133 = vld [vmem:[%s3128 + $0x20] sm:$0xff]
    %v3134 = vld [vmem:[%s3128 + $0x28] sm:$0xff]
    %v3135 = vld [vmem:[%s3128 + $0x30] sm:$0xff]
    %v3136 = vld [vmem:[%s3128 + $0x38] sm:$0xff]
    %v3137 = vld [vmem:[%s3128 + $0x40] sm:$0xff]
    %v3138 = vld [vmem:[%s3128 + $0x48] sm:$0xff]
    %v3139 = vld [vmem:[%s3128 + $0x50] sm:$0xff]
    %v3140 = vld [vmem:[%s3128 + $0x58] sm:$0xff]
    %v3141 = vld [vmem:[%s3128 + $0x60] sm:$0xff]
    %v3142 = vld [vmem:[%s3128 + $0x68] sm:$0xff]
    %v3143 = vld [vmem:[%s3128 + $0x70] sm:$0xff]
    %v3144 = vld [vmem:[%s3128 + $0x78] sm:$0xff]
    %3145 = vmatprep.subr.mxu0 0.0
    %3146 = vmatpush1.msra.mxu0 %v3129
    %3147 = vmatprep.subr.mxu0 0.0
    %3148 = vmatpush1.msra.mxu0 %v3130
    %3149 = vmatprep.subr.mxu0 0.0
    %3150 = vmatpush1.msra.mxu0 %v3131
    %3151 = vmatprep.subr.mxu0 0.0
    %3152 = vmatpush1.msra.mxu0 %v3132
    %3153 = vmatprep.subr.mxu0 0.0
    %3154 = vmatpush1.msra.mxu0 %v3133
    %3155 = vmatprep.subr.mxu0 0.0
    %3156 = vmatpush1.msra.mxu0 %v3134
    %3157 = vmatprep.subr.mxu0 0.0
    %3158 = vmatpush1.msra.mxu0 %v3135
    %3159 = vmatprep.subr.mxu0 0.0
    %3160 = vmatpush1.msra.mxu0 %v3136
    %3161 = vmatprep.subr.mxu0 0.0
    %3162 = vmatpush1.msra.mxu0 %v3137
    %3163 = vmatprep.subr.mxu0 0.0
    %3164 = vmatpush1.msra.mxu0 %v3138
    %3165 = vmatprep.subr.mxu0 0.0
    %3166 = vmatpush1.msra.mxu0 %v3139
    %3167 = vmatprep.subr.mxu0 0.0
    %3168 = vmatpush1.msra.mxu0 %v3140
    %3169 = vmatprep.subr.mxu0 0.0
    %3170 = vmatpush1.msra.mxu0 %v3141
    %3171 = vmatprep.subr.mxu0 0.0
    %3172 = vmatpush1.msra.mxu0 %v3142
    %3173 = vmatprep.subr.mxu0 0.0
    %3174 = vmatpush1.msra.mxu0 %v3143
    %3175 = vmatprep.subr.mxu0 0.0
    %3176 = vmatpush1.msra.mxu0 %v3144
    %3177 = vmatprep.subr.mxu0 0.0
    %3178 = vmatpush1.msra.mxu0 0.0
    %3179 = vmatprep.subr.mxu0 0.0
    %3180 = vmatpush1.msra.mxu0 0.0
    %3181 = vmatprep.subr.mxu0 0.0
    %3182 = vmatpush1.msra.mxu0 0.0
    %3183 = vmatprep.subr.mxu0 0.0
    %3184 = vmatpush1.msra.mxu0 0.0
    %3185 = vmatprep.subr.mxu0 0.0
    %3186 = vmatpush1.msra.mxu0 0.0
    %3187 = vmatprep.subr.mxu0 0.0
    %3188 = vmatpush1.msra.mxu0 0.0
    %3189 = vmatprep.subr.mxu0 0.0
    %3190 = vmatpush1.msra.mxu0 0.0
    %3191 = vmatprep.subr.mxu0 0.0
    %3192 = vmatpush1.msra.mxu0 0.0
    %3193 = vmatprep.subr.mxu0 0.0
    %3194 = vmatpush1.msra.mxu0 0.0
    %3195 = vmatprep.subr.mxu0 0.0
    %3196 = vmatpush1.msra.mxu0 0.0
    %3197 = vmatprep.subr.mxu0 0.0
    %3198 = vmatpush1.msra.mxu0 0.0
    %3199 = vmatprep.subr.mxu0 0.0
    %3200 = vmatpush1.msra.mxu0 0.0
    %3201 = vmatprep.subr.mxu0 0.0
    %3202 = vmatpush1.msra.mxu0 0.0
    %3203 = vmatprep.subr.mxu0 0.0
    %3204 = vmatpush1.msra.mxu0 0.0
    %3205 = vmatprep.subr.mxu0 0.0
    %3206 = vmatpush1.msra.mxu0 0.0
    %3207 = vmatprep.subr.mxu0 0.0
    %3208 = vmatpush1.msra.mxu0 0.0
    %3209 = vmatprep.mubr.f32.mxu0 0.0
    %3210 = vmatmul.mubr.f32.gmra.mrb[0].mxu0 %v3125
    %v3211 = vpop.f32.mrb[0].mxu0
    %v3212 = vadd.f32 0.0, %v3211
    %v3213 = vpop.f32.mrb[0].mxu0
    %3214 = vdwg.mxu0
    %v3215 = vadd.f32 %v3052, %v3212
    %s3216 = scalar_lea.vmem %s4, 8
    %v3217 = vld [vmem:[%s3216] sm:$0x7]
    %v3219 = vsel %vm2888, %v3217, 0
    %3221 = vmatprep.subr.mxu0 0.0
    %3222 = vmatpush1.msra.mxu0 %v2872
    %3223 = vmatprep.subr.mxu0 0.0
    %3224 = vmatpush1.msra.mxu0 %v2894
    %3225 = vmatprep.subr.mxu0 0.0
    %3226 = vmatpush1.msra.mxu0 0.0
    %3227 = vmatprep.subr.mxu0 0.0
    %3228 = vmatpush1.msra.mxu0 0.0
    %3229 = vmatprep.subr.mxu0 0.0
    %3230 = vmatpush1.msra.mxu0 0.0
    %3231 = vmatprep.subr.mxu0 0.0
    %3232 = vmatpush1.msra.mxu0 0.0
    %3233 = vmatprep.subr.mxu0 0.0
    %3234 = vmatpush1.msra.mxu0 0.0
    %3235 = vmatprep.subr.mxu0 0.0
    %3236 = vmatpush1.msra.mxu0 0.0
    %3237 = vmatprep.subr.mxu0 0.0
    %3238 = vmatpush1.msra.mxu0 0.0
    %3239 = vmatprep.subr.mxu0 0.0
    %3240 = vmatpush1.msra.mxu0 0.0
    %3241 = vmatprep.subr.mxu0 0.0
    %3242 = vmatpush1.msra.mxu0 0.0
    %3243 = vmatprep.subr.mxu0 0.0
    %3244 = vmatpush1.msra.mxu0 0.0
    %3245 = vmatprep.subr.mxu0 0.0
    %3246 = vmatpush1.msra.mxu0 0.0
    %3247 = vmatprep.subr.mxu0 0.0
    %3248 = vmatpush1.msra.mxu0 0.0
    %3249 = vmatprep.subr.mxu0 0.0
    %3250 = vmatpush1.msra.mxu0 0.0
    %3251 = vmatprep.subr.mxu0 0.0
    %3252 = vmatpush1.msra.mxu0 0.0
    %3253 = vmatprep.subr.mxu0 0.0
    %3254 = vmatpush1.msra.mxu0 0.0
    %3255 = vmatprep.subr.mxu0 0.0
    %3256 = vmatpush1.msra.mxu0 0.0
    %3257 = vmatprep.subr.mxu0 0.0
    %3258 = vmatpush1.msra.mxu0 0.0
    %3259 = vmatprep.subr.mxu0 0.0
    %3260 = vmatpush1.msra.mxu0 0.0
    %3261 = vmatprep.subr.mxu0 0.0
    %3262 = vmatpush1.msra.mxu0 0.0
    %3263 = vmatprep.subr.mxu0 0.0
    %3264 = vmatpush1.msra.mxu0 0.0
    %3265 = vmatprep.subr.mxu0 0.0
    %3266 = vmatpush1.msra.mxu0 0.0
    %3267 = vmatprep.subr.mxu0 0.0
    %3268 = vmatpush1.msra.mxu0 0.0
    %3269 = vmatprep.subr.mxu0 0.0
    %3270 = vmatpush1.msra.mxu0 0.0
    %3271 = vmatprep.subr.mxu0 0.0
    %3272 = vmatpush1.msra.mxu0 0.0
    %3273 = vmatprep.subr.mxu0 0.0
    %3274 = vmatpush1.msra.mxu0 0.0
    %3275 = vmatprep.subr.mxu0 0.0
    %3276 = vmatpush1.msra.mxu0 0.0
    %3277 = vmatprep.subr.mxu0 0.0
    %3278 = vmatpush1.msra.mxu0 0.0
    %3279 = vmatprep.subr.mxu0 0.0
    %3280 = vmatpush1.msra.mxu0 0.0
    %3281 = vmatprep.subr.mxu0 0.0
    %3282 = vmatpush1.msra.mxu0 0.0
    %3283 = vmatprep.subr.mxu0 0.0
    %3284 = vmatpush1.msra.mxu0 0.0
    %3285 = vmatprep.mubr.f32.mxu0 0.0
    %3286 = vmatmul.mubr.f32.gmra.mrb[0].mxu0 %v3219
    %v3287 = vpop.f32.mrb[0].mxu0
    %v3288 = vadd.f32 0.0, %v3287
    %v3289 = vpop.f32.mrb[0].mxu0
    %3290 = vdwg.mxu0
    %s3291 = scalar_lea.vmem [#allocation2], 256
    %v3292 = vld [vmem:[%s3291] sm:$0xff]
    %v3293 = vld [vmem:[%s3291 + $0x8] sm:$0xff]
    %v3294 = vld [vmem:[%s3291 + $0x10] sm:$0xff]
    %v3295 = vld [vmem:[%s3291 + $0x18] sm:$0xff]
    %v3296 = vld [vmem:[%s3291 + $0x20] sm:$0xff]
    %v3297 = vld [vmem:[%s3291 + $0x28] sm:$0xff]
    %v3298 = vld [vmem:[%s3291 + $0x30] sm:$0xff]
    %v3299 = vld [vmem:[%s3291 + $0x38] sm:$0xff]
    %v3300 = vld [vmem:[%s3291 + $0x40] sm:$0xff]
    %v3301 = vld [vmem:[%s3291 + $0x48] sm:$0xff]
    %v3302 = vld [vmem:[%s3291 + $0x50] sm:$0xff]
    %v3303 = vld [vmem:[%s3291 + $0x58] sm:$0xff]
    %v3304 = vld [vmem:[%s3291 + $0x60] sm:$0xff]
    %v3305 = vld [vmem:[%s3291 + $0x68] sm:$0xff]
    %v3306 = vld [vmem:[%s3291 + $0x70] sm:$0xff]
    %v3307 = vld [vmem:[%s3291 + $0x78] sm:$0xff]
    %3308 = vmatprep.subr.mxu0 0.0
    %3309 = vmatpush1.msra.mxu0 %v3292
    %3310 = vmatprep.subr.mxu0 0.0
    %3311 = vmatpush1.msra.mxu0 %v3293
    %3312 = vmatprep.subr.mxu0 0.0
    %3313 = vmatpush1.msra.mxu0 %v3294
    %3314 = vmatprep.subr.mxu0 0.0
    %3315 = vmatpush1.msra.mxu0 %v3295
    %3316 = vmatprep.subr.mxu0 0.0
    %3317 = vmatpush1.msra.mxu0 %v3296
    %3318 = vmatprep.subr.mxu0 0.0
    %3319 = vmatpush1.msra.mxu0 %v3297
    %3320 = vmatprep.subr.mxu0 0.0
    %3321 = vmatpush1.msra.mxu0 %v3298
    %3322 = vmatprep.subr.mxu0 0.0
    %3323 = vmatpush1.msra.mxu0 %v3299
    %3324 = vmatprep.subr.mxu0 0.0
    %3325 = vmatpush1.msra.mxu0 %v3300
    %3326 = vmatprep.subr.mxu0 0.0
    %3327 = vmatpush1.msra.mxu0 %v3301
    %3328 = vmatprep.subr.mxu0 0.0
    %3329 = vmatpush1.msra.mxu0 %v3302
    %3330 = vmatprep.subr.mxu0 0.0
    %3331 = vmatpush1.msra.mxu0 %v3303
    %3332 = vmatprep.subr.mxu0 0.0
    %3333 = vmatpush1.msra.mxu0 %v3304
    %3334 = vmatprep.subr.mxu0 0.0
    %3335 = vmatpush1.msra.mxu0 %v3305
    %3336 = vmatprep.subr.mxu0 0.0
    %3337 = vmatpush1.msra.mxu0 %v3306
    %3338 = vmatprep.subr.mxu0 0.0
    %3339 = vmatpush1.msra.mxu0 %v3307
    %3340 = vmatprep.subr.mxu0 0.0
    %3341 = vmatpush1.msra.mxu0 0.0
    %3342 = vmatprep.subr.mxu0 0.0
    %3343 = vmatpush1.msra.mxu0 0.0
    %3344 = vmatprep.subr.mxu0 0.0
    %3345 = vmatpush1.msra.mxu0 0.0
    %3346 = vmatprep.subr.mxu0 0.0
    %3347 = vmatpush1.msra.mxu0 0.0
    %3348 = vmatprep.subr.mxu0 0.0
    %3349 = vmatpush1.msra.mxu0 0.0
    %3350 = vmatprep.subr.mxu0 0.0
    %3351 = vmatpush1.msra.mxu0 0.0
    %3352 = vmatprep.subr.mxu0 0.0
    %3353 = vmatpush1.msra.mxu0 0.0
    %3354 = vmatprep.subr.mxu0 0.0
    %3355 = vmatpush1.msra.mxu0 0.0
    %3356 = vmatprep.subr.mxu0 0.0
    %3357 = vmatpush1.msra.mxu0 0.0
    %3358 = vmatprep.subr.mxu0 0.0
    %3359 = vmatpush1.msra.mxu0 0.0
    %3360 = vmatprep.subr.mxu0 0.0
    %3361 = vmatpush1.msra.mxu0 0.0
    %3362 = vmatprep.subr.mxu0 0.0
    %3363 = vmatpush1.msra.mxu0 0.0
    %3364 = vmatprep.subr.mxu0 0.0
    %3365 = vmatpush1.msra.mxu0 0.0
    %3366 = vmatprep.subr.mxu0 0.0
    %3367 = vmatpush1.msra.mxu0 0.0
    %3368 = vmatprep.subr.mxu0 0.0
    %3369 = vmatpush1.msra.mxu0 0.0
    %3370 = vmatprep.subr.mxu0 0.0
    %3371 = vmatpush1.msra.mxu0 0.0
    %3372 = vmatprep.mubr.f32.mxu0 0.0
    %3373 = vmatmul.mubr.f32.gmra.mrb[0].mxu0 %v3288
    %v3374 = vpop.f32.mrb[0].mxu0
    %v3375 = vadd.f32 0.0, %v3374
    %v3376 = vpop.f32.mrb[0].mxu0
    %3377 = vdwg.mxu0
    %v3378 = vadd.f32 %v3215, %v3375
    %s3379 = scalar_lea.vmem %s4, 12
    %v3380 = vld [vmem:[%s3379] sm:$0x7]
    %v3382 = vsel %vm2888, %v3380, 0
    %3384 = vmatprep.subr.mxu0 0.0
    %3385 = vmatpush1.msra.mxu0 %v2872
    %3386 = vmatprep.subr.mxu0 0.0
    %3387 = vmatpush1.msra.mxu0 %v2894
    %3388 = vmatprep.subr.mxu0 0.0
    %3389 = vmatpush1.msra.mxu0 0.0
    %3390 = vmatprep.subr.mxu0 0.0
    %3391 = vmatpush1.msra.mxu0 0.0
    %3392 = vmatprep.subr.mxu0 0.0
    %3393 = vmatpush1.msra.mxu0 0.0
    %3394 = vmatprep.subr.mxu0 0.0
    %3395 = vmatpush1.msra.mxu0 0.0
    %3396 = vmatprep.subr.mxu0 0.0
    %3397 = vmatpush1.msra.mxu0 0.0
    %3398 = vmatprep.subr.mxu0 0.0
    %3399 = vmatpush1.msra.mxu0 0.0
    %3400 = vmatprep.subr.mxu0 0.0
    %3401 = vmatpush1.msra.mxu0 0.0
    %3402 = vmatprep.subr.mxu0 0.0
    %3403 = vmatpush1.msra.mxu0 0.0
    %3404 = vmatprep.subr.mxu0 0.0
    %3405 = vmatpush1.msra.mxu0 0.0
    %3406 = vmatprep.subr.mxu0 0.0
    %3407 = vmatpush1.msra.mxu0 0.0
    %3408 = vmatprep.subr.mxu0 0.0
    %3409 = vmatpush1.msra.mxu0 0.0
    %3410 = vmatprep.subr.mxu0 0.0
    %3411 = vmatpush1.msra.mxu0 0.0
    %3412 = vmatprep.subr.mxu0 0.0
    %3413 = vmatpush1.msra.mxu0 0.0
    %3414 = vmatprep.subr.mxu0 0.0
    %3415 = vmatpush1.msra.mxu0 0.0
    %3416 = vmatprep.subr.mxu0 0.0
    %3417 = vmatpush1.msra.mxu0 0.0
    %3418 = vmatprep.subr.mxu0 0.0
    %3419 = vmatpush1.msra.mxu0 0.0
    %3420 = vmatprep.subr.mxu0 0.0
    %3421 = vmatpush1.msra.mxu0 0.0
    %3422 = vmatprep.subr.mxu0 0.0
    %3423 = vmatpush1.msra.mxu0 0.0
    %3424 = vmatprep.subr.mxu0 0.0
    %3425 = vmatpush1.msra.mxu0 0.0
    %3426 = vmatprep.subr.mxu0 0.0
    %3427 = vmatpush1.msra.mxu0 0.0
    %3428 = vmatprep.subr.mxu0 0.0
    %3429 = vmatpush1.msra.mxu0 0.0
    %3430 = vmatprep.subr.mxu0 0.0
    %3431 = vmatpush1.msra.mxu0 0.0
    %3432 = vmatprep.subr.mxu0 0.0
    %3433 = vmatpush1.msra.mxu0 0.0
    %3434 = vmatprep.subr.mxu0 0.0
    %3435 = vmatpush1.msra.mxu0 0.0
    %3436 = vmatprep.subr.mxu0 0.0
    %3437 = vmatpush1.msra.mxu0 0.0
    %3438 = vmatprep.subr.mxu0 0.0
    %3439 = vmatpush1.msra.mxu0 0.0
    %3440 = vmatprep.subr.mxu0 0.0
    %3441 = vmatpush1.msra.mxu0 0.0
    %3442 = vmatprep.subr.mxu0 0.0
    %3443 = vmatpush1.msra.mxu0 0.0
    %3444 = vmatprep.subr.mxu0 0.0
    %3445 = vmatpush1.msra.mxu0 0.0
    %3446 = vmatprep.subr.mxu0 0.0
    %3447 = vmatpush1.msra.mxu0 0.0
    %3448 = vmatprep.mubr.f32.mxu0 0.0
    %3449 = vmatmul.mubr.f32.gmra.mrb[0].mxu0 %v3382
    %v3450 = vpop.f32.mrb[0].mxu0
    %v3451 = vadd.f32 0.0, %v3450
    %v3452 = vpop.f32.mrb[0].mxu0
    %3453 = vdwg.mxu0
    %s3454 = scalar_lea.vmem [#allocation2], 384
    %v3455 = vld [vmem:[%s3454] sm:$0xff]
    %v3456 = vld [vmem:[%s3454 + $0x8] sm:$0xff]
    %v3457 = vld [vmem:[%s3454 + $0x10] sm:$0xff]
    %v3458 = vld [vmem:[%s3454 + $0x18] sm:$0xff]
    %v3459 = vld [vmem:[%s3454 + $0x20] sm:$0xff]
    %v3460 = vld [vmem:[%s3454 + $0x28] sm:$0xff]
    %v3461 = vld [vmem:[%s3454 + $0x30] sm:$0xff]
    %v3462 = vld [vmem:[%s3454 + $0x38] sm:$0xff]
    %v3463 = vld [vmem:[%s3454 + $0x40] sm:$0xff]
    %v3464 = vld [vmem:[%s3454 + $0x48] sm:$0xff]
    %v3465 = vld [vmem:[%s3454 + $0x50] sm:$0xff]
    %v3466 = vld [vmem:[%s3454 + $0x58] sm:$0xff]
    %v3467 = vld [vmem:[%s3454 + $0x60] sm:$0xff]
    %v3468 = vld [vmem:[%s3454 + $0x68] sm:$0xff]
    %v3469 = vld [vmem:[%s3454 + $0x70] sm:$0xff]
    %v3470 = vld [vmem:[%s3454 + $0x78] sm:$0xff]
    %3471 = vmatprep.subr.mxu0 0.0
    %3472 = vmatpush1.msra.mxu0 %v3455
    %3473 = vmatprep.subr.mxu0 0.0
    %3474 = vmatpush1.msra.mxu0 %v3456
    %3475 = vmatprep.subr.mxu0 0.0
    %3476 = vmatpush1.msra.mxu0 %v3457
    %3477 = vmatprep.subr.mxu0 0.0
    %3478 = vmatpush1.msra.mxu0 %v3458
    %3479 = vmatprep.subr.mxu0 0.0
    %3480 = vmatpush1.msra.mxu0 %v3459
    %3481 = vmatprep.subr.mxu0 0.0
    %3482 = vmatpush1.msra.mxu0 %v3460
    %3483 = vmatprep.subr.mxu0 0.0
    %3484 = vmatpush1.msra.mxu0 %v3461
    %3485 = vmatprep.subr.mxu0 0.0
    %3486 = vmatpush1.msra.mxu0 %v3462
    %3487 = vmatprep.subr.mxu0 0.0
    %3488 = vmatpush1.msra.mxu0 %v3463
    %3489 = vmatprep.subr.mxu0 0.0
    %3490 = vmatpush1.msra.mxu0 %v3464
    %3491 = vmatprep.subr.mxu0 0.0
    %3492 = vmatpush1.msra.mxu0 %v3465
    %3493 = vmatprep.subr.mxu0 0.0
    %3494 = vmatpush1.msra.mxu0 %v3466
    %3495 = vmatprep.subr.mxu0 0.0
    %3496 = vmatpush1.msra.mxu0 %v3467
    %3497 = vmatprep.subr.mxu0 0.0
    %3498 = vmatpush1.msra.mxu0 %v3468
    %3499 = vmatprep.subr.mxu0 0.0
    %3500 = vmatpush1.msra.mxu0 %v3469
    %3501 = vmatprep.subr.mxu0 0.0
    %3502 = vmatpush1.msra.mxu0 %v3470
    %3503 = vmatprep.subr.mxu0 0.0
    %3504 = vmatpush1.msra.mxu0 0.0
    %3505 = vmatprep.subr.mxu0 0.0
    %3506 = vmatpush1.msra.mxu0 0.0
    %3507 = vmatprep.subr.mxu0 0.0
    %3508 = vmatpush1.msra.mxu0 0.0
    %3509 = vmatprep.subr.mxu0 0.0
    %3510 = vmatpush1.msra.mxu0 0.0
    %3511 = vmatprep.subr.mxu0 0.0
    %3512 = vmatpush1.msra.mxu0 0.0
    %3513 = vmatprep.subr.mxu0 0.0
    %3514 = vmatpush1.msra.mxu0 0.0
    %3515 = vmatprep.subr.mxu0 0.0
    %3516 = vmatpush1.msra.mxu0 0.0
    %3517 = vmatprep.subr.mxu0 0.0
    %3518 = vmatpush1.msra.mxu0 0.0
    %3519 = vmatprep.subr.mxu0 0.0
    %3520 = vmatpush1.msra.mxu0 0.0
    %3521 = vmatprep.subr.mxu0 0.0
    %3522 = vmatpush1.msra.mxu0 0.0
    %3523 = vmatprep.subr.mxu0 0.0
    %3524 = vmatpush1.msra.mxu0 0.0
    %3525 = vmatprep.subr.mxu0 0.0
    %3526 = vmatpush1.msra.mxu0 0.0
    %3527 = vmatprep.subr.mxu0 0.0
    %3528 = vmatpush1.msra.mxu0 0.0
    %3529 = vmatprep.subr.mxu0 0.0
    %3530 = vmatpush1.msra.mxu0 0.0
    %3531 = vmatprep.subr.mxu0 0.0
    %3532 = vmatpush1.msra.mxu0 0.0
    %3533 = vmatprep.subr.mxu0 0.0
    %3534 = vmatpush1.msra.mxu0 0.0
    %3535 = vmatprep.mubr.f32.mxu0 0.0
    %3536 = vmatmul.mubr.f32.gmra.mrb[0].mxu0 %v3451
    %v3537 = vpop.f32.mrb[0].mxu0
    %v3538 = vadd.f32 0.0, %v3537
    %v3539 = vpop.f32.mrb[0].mxu0
    %3540 = vdwg.mxu0
    %v3541 = vadd.f32 %v3378, %v3538
    %v3542 = vmax.f32 %v3541, 0.0
    %v3543 = vld [vmem:[%s7] sm:$0xff]
    %v3544 = vld [vmem:[%s7 + $0x8] sm:$0xff]
    %v3545 = vld [vmem:[%s7 + $0x10] sm:$0xff]
    %v3546 = vld [vmem:[%s7 + $0x18] sm:$0xff]
    %v3547 = vld [vmem:[%s7 + $0x20] sm:$0xff]
    %v3548 = vld [vmem:[%s7 + $0x28] sm:$0xff]
    %v3549 = vld [vmem:[%s7 + $0x30] sm:$0xff]
    %v3550 = vld [vmem:[%s7 + $0x38] sm:$0xff]
    %v3551 = vld [vmem:[%s7 + $0x40] sm:$0xff]
    %v3552 = vld [vmem:[%s7 + $0x48] sm:$0xff]
    %v3553 = vld [vmem:[%s7 + $0x50] sm:$0xff]
    %v3554 = vld [vmem:[%s7 + $0x58] sm:$0xff]
    %v3555 = vld [vmem:[%s7 + $0x60] sm:$0xff]
    %v3556 = vld [vmem:[%s7 + $0x68] sm:$0xff]
    %v3557 = vld [vmem:[%s7 + $0x70] sm:$0xff]
    %v3558 = vld [vmem:[%s7 + $0x78] sm:$0xff]
    %v3559 = vld [vmem:[%s8] sm:$0x1]
    %v3561 = vlaneseq
    %v3562 = vshrl.u32 %v3561, 7
    %v3563 = vsub.s32 0, %v3562
    %v3564 = vrot.slane %v3559, %v3563
    %3566 = vmatprep.subr.mxu0 0.0
    %3567 = vmatpush1.msra.mxu0 %v3543
    %3568 = vmatprep.subr.mxu0 0.0
    %3569 = vmatpush1.msra.mxu0 %v3544
    %3570 = vmatprep.subr.mxu0 0.0
    %3571 = vmatpush1.msra.mxu0 %v3545
    %3572 = vmatprep.subr.mxu0 0.0
    %3573 = vmatpush1.msra.mxu0 %v3546
    %3574 = vmatprep.subr.mxu0 0.0
    %3575 = vmatpush1.msra.mxu0 %v3547
    %3576 = vmatprep.subr.mxu0 0.0
    %3577 = vmatpush1.msra.mxu0 %v3548
    %3578 = vmatprep.subr.mxu0 0.0
    %3579 = vmatpush1.msra.mxu0 %v3549
    %3580 = vmatprep.subr.mxu0 0.0
    %3581 = vmatpush1.msra.mxu0 %v3550
    %3582 = vmatprep.subr.mxu0 0.0
    %3583 = vmatpush1.msra.mxu0 %v3551
    %3584 = vmatprep.subr.mxu0 0.0
    %3585 = vmatpush1.msra.mxu0 %v3552
    %3586 = vmatprep.subr.mxu0 0.0
    %3587 = vmatpush1.msra.mxu0 %v3553
    %3588 = vmatprep.subr.mxu0 0.0
    %3589 = vmatpush1.msra.mxu0 %v3554
    %3590 = vmatprep.subr.mxu0 0.0
    %3591 = vmatpush1.msra.mxu0 %v3555
    %3592 = vmatprep.subr.mxu0 0.0
    %3593 = vmatpush1.msra.mxu0 %v3556
    %3594 = vmatprep.subr.mxu0 0.0
    %3595 = vmatpush1.msra.mxu0 %v3557
    %3596 = vmatprep.subr.mxu0 0.0
    %3597 = vmatpush1.msra.mxu0 %v3558
    %3598 = vmatprep.subr.mxu0 0.0
    %3599 = vmatpush1.msra.mxu0 0.0
    %3600 = vmatprep.subr.mxu0 0.0
    %3601 = vmatpush1.msra.mxu0 0.0
    %3602 = vmatprep.subr.mxu0 0.0
    %3603 = vmatpush1.msra.mxu0 0.0
    %3604 = vmatprep.subr.mxu0 0.0
    %3605 = vmatpush1.msra.mxu0 0.0
    %3606 = vmatprep.subr.mxu0 0.0
    %3607 = vmatpush1.msra.mxu0 0.0
    %3608 = vmatprep.subr.mxu0 0.0
    %3609 = vmatpush1.msra.mxu0 0.0
    %3610 = vmatprep.subr.mxu0 0.0
    %3611 = vmatpush1.msra.mxu0 0.0
    %3612 = vmatprep.subr.mxu0 0.0
    %3613 = vmatpush1.msra.mxu0 0.0
    %3614 = vmatprep.subr.mxu0 0.0
    %3615 = vmatpush1.msra.mxu0 0.0
    %3616 = vmatprep.subr.mxu0 0.0
    %3617 = vmatpush1.msra.mxu0 0.0
    %3618 = vmatprep.subr.mxu0 0.0
    %3619 = vmatpush1.msra.mxu0 0.0
    %3620 = vmatprep.subr.mxu0 0.0
    %3621 = vmatpush1.msra.mxu0 0.0
    %3622 = vmatprep.subr.mxu0 0.0
    %3623 = vmatpush1.msra.mxu0 0.0
    %3624 = vmatprep.subr.mxu0 0.0
    %3625 = vmatpush1.msra.mxu0 0.0
    %3626 = vmatprep.subr.mxu0 0.0
    %3627 = vmatpush1.msra.mxu0 0.0
    %3628 = vmatprep.subr.mxu0 0.0
    %3629 = vmatpush1.msra.mxu0 0.0
    %3630 = vmatprep.mubr.f32.mxu0 0.0
    %3631 = vmatmul.mubr.f32.gmra.mrb[0].mxu0 %v3542
    %v3632 = vpop.f32.mrb[0].mxu0
    %v3633 = vadd.f32 %v3564, %v3632
    %v3634 = vpop.f32.mrb[0].mxu0
    %3635 = vdwg.mxu0
    %v3636 = vmax.f32 %v3633, 0.0
    %v3637 = vld [vmem:[%s9] sm:$0xff]
    %v3638 = vld [vmem:[%s9 + $0x8] sm:$0xff]
    %v3639 = vld [vmem:[%s9 + $0x10] sm:$0xff]
    %v3640 = vld [vmem:[%s9 + $0x18] sm:$0xff]
    %v3641 = vld [vmem:[%s9 + $0x20] sm:$0xff]
    %v3642 = vld [vmem:[%s9 + $0x28] sm:$0xff]
    %v3643 = vld [vmem:[%s9 + $0x30] sm:$0xff]
    %v3644 = vld [vmem:[%s9 + $0x38] sm:$0xff]
    %v3645 = vld [vmem:[%s9 + $0x40] sm:$0xff]
    %v3646 = vld [vmem:[%s9 + $0x48] sm:$0xff]
    %v3647 = vld [vmem:[%s9 + $0x50] sm:$0xff]
    %v3648 = vld [vmem:[%s9 + $0x58] sm:$0xff]
    %v3649 = vld [vmem:[%s9 + $0x60] sm:$0xff]
    %v3650 = vld [vmem:[%s9 + $0x68] sm:$0xff]
    %v3651 = vld [vmem:[%s9 + $0x70] sm:$0xff]
    %v3652 = vld [vmem:[%s9 + $0x78] sm:$0xff]
    %v3653 = vld [vmem:[%s10] sm:$0x1]
    %v3655 = vlaneseq
    %v3656 = vshrl.u32 %v3655, 7
    %v3657 = vsub.s32 0, %v3656
    %v3658 = vrot.slane %v3653, %v3657
    %3660 = vmatprep.subr.mxu0 0.0
    %3661 = vmatpush1.msra.mxu0 %v3637
    %3662 = vmatprep.subr.mxu0 0.0
    %3663 = vmatpush1.msra.mxu0 %v3638
    %3664 = vmatprep.subr.mxu0 0.0
    %3665 = vmatpush1.msra.mxu0 %v3639
    %3666 = vmatprep.subr.mxu0 0.0
    %3667 = vmatpush1.msra.mxu0 %v3640
    %3668 = vmatprep.subr.mxu0 0.0
    %3669 = vmatpush1.msra.mxu0 %v3641
    %3670 = vmatprep.subr.mxu0 0.0
    %3671 = vmatpush1.msra.mxu0 %v3642
    %3672 = vmatprep.subr.mxu0 0.0
    %3673 = vmatpush1.msra.mxu0 %v3643
    %3674 = vmatprep.subr.mxu0 0.0
    %3675 = vmatpush1.msra.mxu0 %v3644
    %3676 = vmatprep.subr.mxu0 0.0
    %3677 = vmatpush1.msra.mxu0 %v3645
    %3678 = vmatprep.subr.mxu0 0.0
    %3679 = vmatpush1.msra.mxu0 %v3646
    %3680 = vmatprep.subr.mxu0 0.0
    %3681 = vmatpush1.msra.mxu0 %v3647
    %3682 = vmatprep.subr.mxu0 0.0
    %3683 = vmatpush1.msra.mxu0 %v3648
    %3684 = vmatprep.subr.mxu0 0.0
    %3685 = vmatpush1.msra.mxu0 %v3649
    %3686 = vmatprep.subr.mxu0 0.0
    %3687 = vmatpush1.msra.mxu0 %v3650
    %3688 = vmatprep.subr.mxu0 0.0
    %3689 = vmatpush1.msra.mxu0 %v3651
    %3690 = vmatprep.subr.mxu0 0.0
    %3691 = vmatpush1.msra.mxu0 %v3652
    %3692 = vmatprep.subr.mxu0 0.0
    %3693 = vmatpush1.msra.mxu0 0.0
    %3694 = vmatprep.subr.mxu0 0.0
    %3695 = vmatpush1.msra.mxu0 0.0
    %3696 = vmatprep.subr.mxu0 0.0
    %3697 = vmatpush1.msra.mxu0 0.0
    %3698 = vmatprep.subr.mxu0 0.0
    %3699 = vmatpush1.msra.mxu0 0.0
    %3700 = vmatprep.subr.mxu0 0.0
    %3701 = vmatpush1.msra.mxu0 0.0
    %3702 = vmatprep.subr.mxu0 0.0
    %3703 = vmatpush1.msra.mxu0 0.0
    %3704 = vmatprep.subr.mxu0 0.0
    %3705 = vmatpush1.msra.mxu0 0.0
    %3706 = vmatprep.subr.mxu0 0.0
    %3707 = vmatpush1.msra.mxu0 0.0
    %3708 = vmatprep.subr.mxu0 0.0
    %3709 = vmatpush1.msra.mxu0 0.0
    %3710 = vmatprep.subr.mxu0 0.0
    %3711 = vmatpush1.msra.mxu0 0.0
    %3712 = vmatprep.subr.mxu0 0.0
    %3713 = vmatpush1.msra.mxu0 0.0
    %3714 = vmatprep.subr.mxu0 0.0
    %3715 = vmatpush1.msra.mxu0 0.0
    %3716 = vmatprep.subr.mxu0 0.0
    %3717 = vmatpush1.msra.mxu0 0.0
    %3718 = vmatprep.subr.mxu0 0.0
    %3719 = vmatpush1.msra.mxu0 0.0
    %3720 = vmatprep.subr.mxu0 0.0
    %3721 = vmatpush1.msra.mxu0 0.0
    %3722 = vmatprep.subr.mxu0 0.0
    %3723 = vmatpush1.msra.mxu0 0.0
    %3724 = vmatprep.mubr.f32.mxu0 0.0
    %3725 = vmatmul.mubr.f32.gmra.mrb[0].mxu0 %v3636
    %v3726 = vpop.f32.mrb[0].mxu0
    %v3727 = vadd.f32 %v3658, %v3726
    %v3728 = vpop.f32.mrb[0].mxu0
    %3729 = vdwg.mxu0
    %3730 = vst [vmem:[#allocation5] sm:$0x7] %v3727
    // Predicated region
    $region50: #{net_forward.1} parent=1 // pred_check
      _
    $region51: #{net_forward.1} parent=1 // pred_check_branch
      %3732 = sbr.rel (0) target = $region53
    $region52: #{net_forward.1} parent=1 // pred_region
      %s3734 = ssub.s32 64, 64
      %3735 = vsyncadd [#allocation4], %s3734
      %s3737 = sshll.u32 [#allocation5], 4
      %s3738 = int_to_ptr.vmem [resolvable:$true] %s3737
      %3740 = dma.vmem_to_hbm [thread:$0]  %s3738, 64, %s11, [#allocation4]
    $region53: #{net_forward.1} parent=1 // pred_fallthru
      _
    // Predicated region
    $region54: #{net_forward.1} parent=1 // pred_check
      _
    $region55: #{net_forward.1} parent=1 // pred_check_branch
      %3742 = sbr.rel (0) target = $region57
    $region56: #{net_forward.1} parent=1 // pred_region
      %3743 = dma.done [#allocation4], 64
    $region57: #{net_forward.1} parent=1 // pred_fallthru
      _
    %3744 = vsyncpa [#allocation3], 1
    %3745 = vsyncpa [#allocation4], 1

</llo_original>
